<compile_context>
chip_gen: v7x
topology: tpu7x:2x2x1
jax: 0.10.0
libtpu: 0.0.40
codegen_flags: <defaults>
</compile_context>

<pallas_src>
import functools

import jax
import jax.numpy as jnp
from jax import lax
from jax.experimental import pallas as pl
from jax.experimental.pallas import tpu as pltpu
import numpy as np


def _round_up(x, m):
    return (x + m - 1) // m * m


def _ffm_kernel(x_ref, w_ref, bias_ref, fc1w_ref, fc1b_ref, fc2w_ref, fc2b_ref,
                out_ref, p_ref, *, H, W, Wp, row_tiles):
    HP, _, cin = p_ref.shape
    coutp = out_ref.shape[-1]
    inv_hw = 1.0 / (H * W)

    # ---- padded slab: zero only the halo/pad border, copy the interior -----
    # Image lives at slab rows [2, H+2), cols [0, W).  Column W is the right
    # halo; the "col -1" read of a row wraps (in flat indexing) into the zero
    # right-pad of the previous row, so no separate left-halo column is needed
    # and the interior copy starts at an aligned sublane offset.
    p_ref[0:2, :, :] = jnp.zeros((2, Wp, cin), jnp.bfloat16)
    p_ref[H + 2:HP, :, :] = jnp.zeros((HP - H - 2, Wp, cin), jnp.bfloat16)
    p_ref[2:H + 2, W:Wp, :] = jnp.zeros((H, Wp - W, cin), jnp.bfloat16)
    p_ref[2:H + 2, 0:W, :] = x_ref[0]

    bias = bias_ref[...]                                      # (1, Coutp) f32

    # ---- 3x3 conv (+ folded-BN bias + ReLU), row-tiled ----------------------
    # For output flat row r = oy*Wp + ox, tap (dy, dx) reads slab flat index
    # r + (dy+1)*Wp + (dx-1).  The 9 taps are summed as a value -> one store
    # per tile, no accumulator read-modify-write.
    pooled = jnp.zeros((1, coutp), jnp.float32)
    for (y0, trows) in row_tiles:
        tr = trows * Wp
        win = p_ref[y0:y0 + trows + 4, :, :]                  # (trows+4, Wp, Cin)
        winf = win.reshape((trows + 4) * Wp, cin)             # free flatten (Wp % 16 == 0)
        acc = jnp.zeros((tr, coutp), jnp.float32)
        for dy in range(3):
            for dx in range(3):
                s = (dy + 1) * Wp + dx - 1
                acc = acc + jnp.dot(winf[s:s + tr], w_ref[dy * 3 + dx],
                                    preferred_element_type=jnp.float32)
        feat = jnp.maximum(acc + bias, 0.0)                   # BN bias + ReLU
        feat = feat.reshape(trows, Wp, coutp)[:, :W, :]       # drop pad columns
        pooled = pooled + jnp.sum(jnp.sum(feat, axis=0), axis=0, keepdims=True)
        # Un-gated feat parks in the output block (it has to be materialized
        # once anyway for the global pool); gated in place below.
        out_ref[0, y0:y0 + trows, :, :] = feat

    # ---- squeeze-excite gate (fp32) ------------------------------------------
    attn = pooled * inv_hw                                    # (1, Coutp)
    h1 = jnp.maximum(
        jnp.dot(attn, fc1w_ref[...], preferred_element_type=jnp.float32)
        + fc1b_ref[...], 0.0)                                 # (1, Chidp)
    gate = jax.nn.sigmoid(
        jnp.dot(h1, fc2w_ref[...], preferred_element_type=jnp.float32)
        + fc2b_ref[...]) + 1.0                                # out = feat*(g+1)
    gate3 = gate.reshape(1, 1, coutp)

    # Single gated pass over the output block (tiled to bound live vregs).
    for (y0, trows) in row_tiles:
        out_ref[0, y0:y0 + trows, :, :] = out_ref[0, y0:y0 + trows, :, :] * gate3


def ffm_pallas(fea1, fea2, params):
    """fea1: (N,H,W,C1), fea2: (N,H,W,C2) float32 NHWC -> (N,H,W,Cout) f32."""
    w3, scale, bias, fc1w, fc1b, fc2w, fc2b = params
    N, H, W, C1 = fea1.shape
    C2 = fea2.shape[-1]
    Cin = C1 + C2
    Cout = w3.shape[-1]
    Chid = fc1w.shape[-1]

    LANE = 128
    Coutp = _round_up(Cout, LANE)        # lane-dense output channels
    Chidp = _round_up(Chid, LANE)
    Wp = _round_up(W + 1, 16)            # padded width: free bf16 flatten
    HP = H + 4                           # 2 top halo/slack + 2 bottom

    dcout = Coutp - Cout
    dchid = Chidp - Chid

    # Fold the BN scale into the conv weights (fp32 fold, then bf16 cast),
    # pad Cout to a lane multiple, merge the (ky, kx) taps.
    w3f = w3 * scale.reshape(1, 1, 1, Cout)
    w3p = jnp.pad(w3f, ((0, 0), (0, 0), (0, 0), (0, dcout)))
    w = w3p.reshape(9, Cin, Coutp).astype(jnp.bfloat16)

    bias_p = jnp.pad(bias, ((0, 0), (0, dcout)))
    fc1w_p = jnp.pad(fc1w, ((0, dcout), (0, dchid)))
    fc1b_p = jnp.pad(fc1b, ((0, 0), (0, dchid)))
    fc2w_p = jnp.pad(fc2w, ((0, dchid), (0, dcout)))
    fc2b_p = jnp.pad(fc2b, ((0, 0), (0, dcout)))

    # One fused XLA pass: channel concat + bf16 cast (halves activation DMA).
    x = jnp.concatenate([fea1, fea2], axis=-1).astype(jnp.bfloat16)

    # Row tiles sized so the fp32 tap accumulator value stays <= ~128 KiB.
    rows_per_tile = max(1, (128 * 1024) // (Wp * Coutp * 4))
    row_tiles = []
    y = 0
    while y < H:
        t = min(rows_per_tile, H - y)
        row_tiles.append((y, t))
        y += t
    row_tiles = tuple(row_tiles)

    kernel = functools.partial(_ffm_kernel, H=H, W=W, Wp=Wp,
                               row_tiles=row_tiles)

    flops = int(2 * N * H * Wp * 9 * Cin * Coutp
                + 4 * N * Coutp * Chidp)
    bytes_accessed = int(
        2 * x.size + 2 * w.size
        + 4 * (bias_p.size + fc1w_p.size + fc1b_p.size
               + fc2w_p.size + fc2b_p.size)
        + 4 * N * H * W * Coutp)
    cost = pl.CostEstimate(flops=flops, transcendentals=int(N * Coutp),
                           bytes_accessed=bytes_accessed)

    # ~75% of per-core VMEM: headroom on v7x (64 MiB), ~96 MiB on v5e/v6e.
    try:
        vmem_limit = int(pltpu.get_tpu_info().vmem_capacity_bytes) * 3 // 4
    except Exception:
        vmem_limit = 48 * 1024 * 1024

    out = pl.pallas_call(
        kernel,
        out_shape=jax.ShapeDtypeStruct((N, H, W, Coutp), jnp.float32),
        grid_spec=pltpu.PrefetchScalarGridSpec(
            num_scalar_prefetch=0,
            grid=(N,),
            in_specs=[
                pl.BlockSpec((1, H, W, Cin), lambda n: (n, 0, 0, 0)),
                pl.BlockSpec((9, Cin, Coutp), lambda n: (0, 0, 0)),
                pl.BlockSpec((1, Coutp), lambda n: (0, 0)),
                pl.BlockSpec((Coutp, Chidp), lambda n: (0, 0)),
                pl.BlockSpec((1, Chidp), lambda n: (0, 0)),
                pl.BlockSpec((Chidp, Coutp), lambda n: (0, 0)),
                pl.BlockSpec((1, Coutp), lambda n: (0, 0)),
            ],
            out_specs=pl.BlockSpec((1, H, W, Coutp), lambda n: (n, 0, 0, 0)),
            scratch_shapes=[
                pltpu.VMEM((HP, Wp, Cin), jnp.bfloat16),   # zero-halo'd slab
            ],
        ),
        compiler_params=pltpu.CompilerParams(
            dimension_semantics=("parallel",),
            vmem_limit_bytes=vmem_limit),
        cost_estimate=cost,
    )(x, w, bias_p, fc1w_p, fc1b_p, fc2w_p, fc2b_p)

    # Test-harness glue: slice the padded channels back off.
    return out[..., :Cout]


def ffm_reference(fea1, fea2, params):
    """Pure-JAX reference matching the PyTorch forward (NHWC layout).

    Mirrors the kernel's numerics: BN scale folded into the conv weights in
    fp32, conv inputs/weights rounded to bf16 (fp32 accumulation), everything
    else fp32.
    """
    w3, scale, bias, fc1w, fc1b, fc2w, fc2b = params
    x = jnp.concatenate([fea1, fea2], axis=-1)
    xq = x.astype(jnp.bfloat16).astype(jnp.float32)
    wq = (w3 * scale.reshape(1, 1, 1, -1)).astype(jnp.bfloat16).astype(jnp.float32)
    feat = lax.conv_general_dilated(
        xq, wq, window_strides=(1, 1), padding=((1, 1), (1, 1)),
        dimension_numbers=("NHWC", "HWIO", "NHWC"),
        precision=lax.Precision.HIGHEST)
    feat = jnp.maximum(feat + bias[None, None], 0.0)
    attn = jnp.mean(feat, axis=(1, 2), keepdims=True)          # (N,1,1,Cout)
    h = jnp.maximum(
        jnp.einsum("nijc,cd->nijd", attn, fc1w,
                   precision=lax.Precision.HIGHEST) + fc1b[None, None], 0.0)
    a = jax.nn.sigmoid(
        jnp.einsum("nijd,dc->nijc", h, fc2w,
                   precision=lax.Precision.HIGHEST) + fc2b[None, None])
    return feat * a + feat


def make_params(key, in_ch1, in_ch2, out_ch):
    cin = in_ch1 + in_ch2
    chid = out_ch // 4
    ks = jax.random.split(key, 8)
    w3 = jax.random.normal(ks[0], (3, 3, cin, out_ch), jnp.float32) * 0.1
    # Folded BatchNorm (eval): scale = gamma/sqrt(var+eps), bias = beta - mean*scale
    gamma = 1.0 + 0.1 * jax.random.normal(ks[1], (out_ch,), jnp.float32)
    beta = 0.1 * jax.random.normal(ks[2], (out_ch,), jnp.float32)
    mean = 0.05 * jax.random.normal(ks[3], (out_ch,), jnp.float32)
    var = 1.0 + 0.1 * jax.random.uniform(ks[4], (out_ch,), jnp.float32)
    scale = (gamma / jnp.sqrt(var + 1e-5)).reshape(1, out_ch)
    bias = (beta - mean * scale[0]).reshape(1, out_ch)
    fc1w = jax.random.normal(ks[5], (out_ch, chid), jnp.float32) * 0.1
    fc1b = 0.1 * jax.random.normal(ks[6], (1, chid), jnp.float32)
    fc2w = jax.random.normal(ks[7], (chid, out_ch), jnp.float32) * 0.1
    fc2b = jnp.zeros((1, out_ch), jnp.float32)
    return (w3, scale, bias, fc1w, fc1b, fc2w, fc2b)


if __name__ == "__main__":
    key = jax.random.PRNGKey(0)
    k1, k2, kp = jax.random.split(key, 3)

    N, H, W = 2, 16, 16
    in_ch1, in_ch2, out_ch = 4, 4, 16

    fea1 = jax.random.normal(k1, (N, H, W, in_ch1), jnp.float32)
    fea2 = jax.random.normal(k2, (N, H, W, in_ch2), jnp.float32)
    params = make_params(kp, in_ch1, in_ch2, out_ch)

    out = jax.block_until_ready(ffm_pallas(fea1, fea2, params))
    ref = jax.block_until_ready(ffm_reference(fea1, fea2, params))

    np.testing.assert_allclose(np.asarray(out), np.asarray(ref),
                               rtol=1e-3, atol=1e-3)
    print("KERNEL_OK")
</pallas_src>

<mosaic_0001>
module attributes {stable_mosaic.version = 11 : i64} {
  func.func @_ffm_kernel(%arg0: i32, %arg1: memref<1x16x16x8xbf16, #tpu.memory_space<vmem>>, %arg2: memref<9x8x128xbf16, #tpu.memory_space<vmem>>, %arg3: memref<1x128xf32, #tpu.memory_space<vmem>>, %arg4: memref<128x128xf32, #tpu.memory_space<vmem>>, %arg5: memref<1x128xf32, #tpu.memory_space<vmem>>, %arg6: memref<128x128xf32, #tpu.memory_space<vmem>>, %arg7: memref<1x128xf32, #tpu.memory_space<vmem>>, %arg8: memref<1x16x16x128xf32, #tpu.memory_space<vmem>>, %arg9: memref<20x32x8xbf16, #tpu.memory_space<vmem>>) attributes {dimension_semantics = [#tpu.dimension_semantics<parallel>], iteration_bounds = array<i64: 2>, scalar_prefetch = 0 : i64, scratch_operands = 1 : i64, tpu.core_type = #tpu.core_type<tc>, window_params = [{transform_indices = @transform_0, window_bounds = array<i64: 1, 16, 16, 8>}, {pipeline_mode = #tpu.pipeline_mode<synchronous>, transform_indices = @transform_1, window_bounds = array<i64: 9, 8, 128>}, {pipeline_mode = #tpu.pipeline_mode<synchronous>, transform_indices = @transform_2, window_bounds = array<i64: 1, 128>}, {pipeline_mode = #tpu.pipeline_mode<synchronous>, transform_indices = @transform_3, window_bounds = array<i64: 128, 128>}, {pipeline_mode = #tpu.pipeline_mode<synchronous>, transform_indices = @transform_4, window_bounds = array<i64: 1, 128>}, {pipeline_mode = #tpu.pipeline_mode<synchronous>, transform_indices = @transform_5, window_bounds = array<i64: 128, 128>}, {pipeline_mode = #tpu.pipeline_mode<synchronous>, transform_indices = @transform_6, window_bounds = array<i64: 1, 128>}, {transform_indices = @transform_7, window_bounds = array<i64: 1, 16, 16, 128>}]} {
    %cst = arith.constant 0.000000e+00 : bf16
    %0 = vector.broadcast %cst : bf16 to vector<2x32x8xbf16>
    %c0 = arith.constant 0 : index
    %c0_0 = arith.constant 0 : index
    %c0_1 = arith.constant 0 : index
    %1 = vector.load %arg9[%c0, %c0_0, %c0_1] : memref<20x32x8xbf16, #tpu.memory_space<vmem>>, vector<2x32x8xbf16>
    tpu.vector_store %arg9[%c0, %c0_0, %c0_1], %0 {strides = array<i32>} : memref<20x32x8xbf16, #tpu.memory_space<vmem>>, vector<2x32x8xbf16>,
    %cst_2 = arith.constant 0.000000e+00 : bf16
    %2 = vector.broadcast %cst_2 : bf16 to vector<2x32x8xbf16>
    %c18 = arith.constant 18 : index
    %c0_3 = arith.constant 0 : index
    %c0_4 = arith.constant 0 : index
    %3 = vector.load %arg9[%c18, %c0_3, %c0_4] : memref<20x32x8xbf16, #tpu.memory_space<vmem>>, vector<2x32x8xbf16>
    tpu.vector_store %arg9[%c18, %c0_3, %c0_4], %2 {strides = array<i32>} : memref<20x32x8xbf16, #tpu.memory_space<vmem>>, vector<2x32x8xbf16>,
    %cst_5 = arith.constant 0.000000e+00 : bf16
    %4 = vector.broadcast %cst_5 : bf16 to vector<16x16x8xbf16>
    %c2 = arith.constant 2 : index
    %c16 = arith.constant 16 : index
    %c0_6 = arith.constant 0 : index
    %5 = vector.load %arg9[%c2, %c16, %c0_6] : memref<20x32x8xbf16, #tpu.memory_space<vmem>>, vector<16x16x8xbf16>
    tpu.vector_store %arg9[%c2, %c16, %c0_6], %4 {strides = array<i32>} : memref<20x32x8xbf16, #tpu.memory_space<vmem>>, vector<16x16x8xbf16>,
    %c0_7 = arith.constant 0 : index
    %c0_8 = arith.constant 0 : index
    %c0_9 = arith.constant 0 : index
    %c0_10 = arith.constant 0 : index
    %6 = vector.load %arg1[%c0_7, %c0_8, %c0_9, %c0_10] : memref<1x16x16x8xbf16, #tpu.memory_space<vmem>>, vector<1x16x16x8xbf16>
    %7 = vector.shape_cast %6 : vector<1x16x16x8xbf16> to vector<16x16x8xbf16>
    %c2_11 = arith.constant 2 : index
    %c0_12 = arith.constant 0 : index
    %c0_13 = arith.constant 0 : index
    %8 = vector.load %arg9[%c2_11, %c0_12, %c0_13] : memref<20x32x8xbf16, #tpu.memory_space<vmem>>, vector<16x16x8xbf16>
    tpu.vector_store %arg9[%c2_11, %c0_12, %c0_13], %7 {strides = array<i32>} : memref<20x32x8xbf16, #tpu.memory_space<vmem>>, vector<16x16x8xbf16>,
    %c0_14 = arith.constant 0 : index
    %c0_15 = arith.constant 0 : index
    %9 = vector.load %arg3[%c0_14, %c0_15] : memref<1x128xf32, #tpu.memory_space<vmem>>, vector<1x128xf32>
    %cst_16 = arith.constant 0.000000e+00 : f32
    %10 = vector.broadcast %cst_16 : f32 to vector<1x128xf32>
    %c0_17 = arith.constant 0 : index
    %c0_18 = arith.constant 0 : index
    %c0_19 = arith.constant 0 : index
    %11 = vector.load %arg9[%c0_17, %c0_18, %c0_19] : memref<20x32x8xbf16, #tpu.memory_space<vmem>>, vector<12x32x8xbf16>
    %12 = vector.shape_cast %11 : vector<12x32x8xbf16> to vector<384x8xbf16>
    %cst_20 = arith.constant 0.000000e+00 : f32
    %13 = vector.broadcast %cst_20 : f32 to vector<256x128xf32>
    %14 = vector.extract_strided_slice %12 {offsets = [31, 0], sizes = [256, 8], strides = [1, 1]} : vector<384x8xbf16> to vector<256x8xbf16>
    %c0_21 = arith.constant 0 : index
    %c0_22 = arith.constant 0 : index
    %c0_23 = arith.constant 0 : index
    %15 = vector.load %arg2[%c0_21, %c0_22, %c0_23] : memref<9x8x128xbf16, #tpu.memory_space<vmem>>, vector<1x8x128xbf16>
    %16 = vector.shape_cast %15 : vector<1x8x128xbf16> to vector<8x128xbf16>
    %cst_24 = arith.constant dense<0.000000e+00> : vector<256x128xf32>
    %17 = tpu.matmul %14, %16, %cst_24 {dimension_numbers = #tpu.dot_dimension_numbers<[1], [0], [0], [1], [0, 0, 1, 1], [], []>} : vector<256x8xbf16>, vector<8x128xbf16>, vector<256x128xf32> -> vector<256x128xf32>
    %18 = arith.addf %13, %17 : vector<256x128xf32>
    %19 = vector.extract_strided_slice %12 {offsets = [32, 0], sizes = [256, 8], strides = [1, 1]} : vector<384x8xbf16> to vector<256x8xbf16>
    %c1 = arith.constant 1 : index
    %c0_25 = arith.constant 0 : index
    %c0_26 = arith.constant 0 : index
    %20 = vector.load %arg2[%c1, %c0_25, %c0_26] : memref<9x8x128xbf16, #tpu.memory_space<vmem>>, vector<1x8x128xbf16>
    %21 = vector.shape_cast %20 : vector<1x8x128xbf16> to vector<8x128xbf16>
    %cst_27 = arith.constant dense<0.000000e+00> : vector<256x128xf32>
    %22 = tpu.matmul %19, %21, %cst_27 {dimension_numbers = #tpu.dot_dimension_numbers<[1], [0], [0], [1], [0, 0, 1, 1], [], []>} : vector<256x8xbf16>, vector<8x128xbf16>, vector<256x128xf32> -> vector<256x128xf32>
    %23 = arith.addf %18, %22 : vector<256x128xf32>
    %24 = vector.extract_strided_slice %12 {offsets = [33, 0], sizes = [256, 8], strides = [1, 1]} : vector<384x8xbf16> to vector<256x8xbf16>
    %c2_28 = arith.constant 2 : index
    %c0_29 = arith.constant 0 : index
    %c0_30 = arith.constant 0 : index
    %25 = vector.load %arg2[%c2_28, %c0_29, %c0_30] : memref<9x8x128xbf16, #tpu.memory_space<vmem>>, vector<1x8x128xbf16>
    %26 = vector.shape_cast %25 : vector<1x8x128xbf16> to vector<8x128xbf16>
    %cst_31 = arith.constant dense<0.000000e+00> : vector<256x128xf32>
    %27 = tpu.matmul %24, %26, %cst_31 {dimension_numbers = #tpu.dot_dimension_numbers<[1], [0], [0], [1], [0, 0, 1, 1], [], []>} : vector<256x8xbf16>, vector<8x128xbf16>, vector<256x128xf32> -> vector<256x128xf32>
    %28 = arith.addf %23, %27 : vector<256x128xf32>
    %29 = vector.extract_strided_slice %12 {offsets = [63, 0], sizes = [256, 8], strides = [1, 1]} : vector<384x8xbf16> to vector<256x8xbf16>
    %c3 = arith.constant 3 : index
    %c0_32 = arith.constant 0 : index
    %c0_33 = arith.constant 0 : index
    %30 = vector.load %arg2[%c3, %c0_32, %c0_33] : memref<9x8x128xbf16, #tpu.memory_space<vmem>>, vector<1x8x128xbf16>
    %31 = vector.shape_cast %30 : vector<1x8x128xbf16> to vector<8x128xbf16>
    %cst_34 = arith.constant dense<0.000000e+00> : vector<256x128xf32>
    %32 = tpu.matmul %29, %31, %cst_34 {dimension_numbers = #tpu.dot_dimension_numbers<[1], [0], [0], [1], [0, 0, 1, 1], [], []>} : vector<256x8xbf16>, vector<8x128xbf16>, vector<256x128xf32> -> vector<256x128xf32>
    %33 = arith.addf %28, %32 : vector<256x128xf32>
    %34 = vector.extract_strided_slice %12 {offsets = [64, 0], sizes = [256, 8], strides = [1, 1]} : vector<384x8xbf16> to vector<256x8xbf16>
    %c4 = arith.constant 4 : index
    %c0_35 = arith.constant 0 : index
    %c0_36 = arith.constant 0 : index
    %35 = vector.load %arg2[%c4, %c0_35, %c0_36] : memref<9x8x128xbf16, #tpu.memory_space<vmem>>, vector<1x8x128xbf16>
    %36 = vector.shape_cast %35 : vector<1x8x128xbf16> to vector<8x128xbf16>
    %cst_37 = arith.constant dense<0.000000e+00> : vector<256x128xf32>
    %37 = tpu.matmul %34, %36, %cst_37 {dimension_numbers = #tpu.dot_dimension_numbers<[1], [0], [0], [1], [0, 0, 1, 1], [], []>} : vector<256x8xbf16>, vector<8x128xbf16>, vector<256x128xf32> -> vector<256x128xf32>
    %38 = arith.addf %33, %37 : vector<256x128xf32>
    %39 = vector.extract_strided_slice %12 {offsets = [65, 0], sizes = [256, 8], strides = [1, 1]} : vector<384x8xbf16> to vector<256x8xbf16>
    %c5 = arith.constant 5 : index
    %c0_38 = arith.constant 0 : index
    %c0_39 = arith.constant 0 : index
    %40 = vector.load %arg2[%c5, %c0_38, %c0_39] : memref<9x8x128xbf16, #tpu.memory_space<vmem>>, vector<1x8x128xbf16>
    %41 = vector.shape_cast %40 : vector<1x8x128xbf16> to vector<8x128xbf16>
    %cst_40 = arith.constant dense<0.000000e+00> : vector<256x128xf32>
    %42 = tpu.matmul %39, %41, %cst_40 {dimension_numbers = #tpu.dot_dimension_numbers<[1], [0], [0], [1], [0, 0, 1, 1], [], []>} : vector<256x8xbf16>, vector<8x128xbf16>, vector<256x128xf32> -> vector<256x128xf32>
    %43 = arith.addf %38, %42 : vector<256x128xf32>
    %44 = vector.extract_strided_slice %12 {offsets = [95, 0], sizes = [256, 8], strides = [1, 1]} : vector<384x8xbf16> to vector<256x8xbf16>
    %c6 = arith.constant 6 : index
    %c0_41 = arith.constant 0 : index
    %c0_42 = arith.constant 0 : index
    %45 = vector.load %arg2[%c6, %c0_41, %c0_42] : memref<9x8x128xbf16, #tpu.memory_space<vmem>>, vector<1x8x128xbf16>
    %46 = vector.shape_cast %45 : vector<1x8x128xbf16> to vector<8x128xbf16>
    %cst_43 = arith.constant dense<0.000000e+00> : vector<256x128xf32>
    %47 = tpu.matmul %44, %46, %cst_43 {dimension_numbers = #tpu.dot_dimension_numbers<[1], [0], [0], [1], [0, 0, 1, 1], [], []>} : vector<256x8xbf16>, vector<8x128xbf16>, vector<256x128xf32> -> vector<256x128xf32>
    %48 = arith.addf %43, %47 : vector<256x128xf32>
    %49 = vector.extract_strided_slice %12 {offsets = [96, 0], sizes = [256, 8], strides = [1, 1]} : vector<384x8xbf16> to vector<256x8xbf16>
    %c7 = arith.constant 7 : index
    %c0_44 = arith.constant 0 : index
    %c0_45 = arith.constant 0 : index
    %50 = vector.load %arg2[%c7, %c0_44, %c0_45] : memref<9x8x128xbf16, #tpu.memory_space<vmem>>, vector<1x8x128xbf16>
    %51 = vector.shape_cast %50 : vector<1x8x128xbf16> to vector<8x128xbf16>
    %cst_46 = arith.constant dense<0.000000e+00> : vector<256x128xf32>
    %52 = tpu.matmul %49, %51, %cst_46 {dimension_numbers = #tpu.dot_dimension_numbers<[1], [0], [0], [1], [0, 0, 1, 1], [], []>} : vector<256x8xbf16>, vector<8x128xbf16>, vector<256x128xf32> -> vector<256x128xf32>
    %53 = arith.addf %48, %52 : vector<256x128xf32>
    %54 = vector.extract_strided_slice %12 {offsets = [97, 0], sizes = [256, 8], strides = [1, 1]} : vector<384x8xbf16> to vector<256x8xbf16>
    %c8 = arith.constant 8 : index
    %c0_47 = arith.constant 0 : index
    %c0_48 = arith.constant 0 : index
    %55 = vector.load %arg2[%c8, %c0_47, %c0_48] : memref<9x8x128xbf16, #tpu.memory_space<vmem>>, vector<1x8x128xbf16>
    %56 = vector.shape_cast %55 : vector<1x8x128xbf16> to vector<8x128xbf16>
    %cst_49 = arith.constant dense<0.000000e+00> : vector<256x128xf32>
    %57 = tpu.matmul %54, %56, %cst_49 {dimension_numbers = #tpu.dot_dimension_numbers<[1], [0], [0], [1], [0, 0, 1, 1], [], []>} : vector<256x8xbf16>, vector<8x128xbf16>, vector<256x128xf32> -> vector<256x128xf32>
    %58 = arith.addf %53, %57 : vector<256x128xf32>
    %59 = vector.broadcast %9 : vector<1x128xf32> to vector<256x128xf32>
    %60 = arith.addf %58, %59 : vector<256x128xf32>
    %cst_50 = arith.constant 0.000000e+00 : f32
    %61 = vector.broadcast %cst_50 : f32 to vector<256x128xf32>
    %62 = arith.maximumf %60, %61 : vector<256x128xf32>
    %63 = vector.shape_cast %62 : vector<256x128xf32> to vector<8x32x128xf32>
    %64 = vector.extract_strided_slice %63 {offsets = [0, 0, 0], sizes = [8, 16, 128], strides = [1, 1, 1]} : vector<8x32x128xf32> to vector<8x16x128xf32>
    %cst_51 = arith.constant dense<0.000000e+00> : vector<16x128xf32>
    %65 = vector.multi_reduction <add>, %64, %cst_51 [0] : vector<8x16x128xf32> to vector<16x128xf32>
    %cst_52 = arith.constant dense<0.000000e+00> : vector<128xf32>
    %66 = vector.multi_reduction <add>, %65, %cst_52 [0] : vector<16x128xf32> to vector<128xf32>
    %67 = vector.shape_cast %66 : vector<128xf32> to vector<1x128xf32>
    %68 = arith.addf %10, %67 : vector<1x128xf32>
    %c0_53 = arith.constant 0 : index
    %c0_54 = arith.constant 0 : index
    %c0_55 = arith.constant 0 : index
    %c0_56 = arith.constant 0 : index
    %69 = vector.load %arg8[%c0_53, %c0_54, %c0_55, %c0_56] : memref<1x16x16x128xf32, #tpu.memory_space<vmem>>, vector<1x8x16x128xf32>
    %70 = vector.shape_cast %69 : vector<1x8x16x128xf32> to vector<8x16x128xf32>
    %71 = vector.shape_cast %64 : vector<8x16x128xf32> to vector<1x8x16x128xf32>
    tpu.vector_store %arg8[%c0_53, %c0_54, %c0_55, %c0_56], %71 {strides = array<i32>} : memref<1x16x16x128xf32, #tpu.memory_space<vmem>>, vector<1x8x16x128xf32>,
    %c8_57 = arith.constant 8 : index
    %c0_58 = arith.constant 0 : index
    %c0_59 = arith.constant 0 : index
    %72 = vector.load %arg9[%c8_57, %c0_58, %c0_59] : memref<20x32x8xbf16, #tpu.memory_space<vmem>>, vector<12x32x8xbf16>
    %73 = vector.shape_cast %72 : vector<12x32x8xbf16> to vector<384x8xbf16>
    %cst_60 = arith.constant 0.000000e+00 : f32
    %74 = vector.broadcast %cst_60 : f32 to vector<256x128xf32>
    %75 = vector.extract_strided_slice %73 {offsets = [31, 0], sizes = [256, 8], strides = [1, 1]} : vector<384x8xbf16> to vector<256x8xbf16>
    %c0_61 = arith.constant 0 : index
    %c0_62 = arith.constant 0 : index
    %c0_63 = arith.constant 0 : index
    %76 = vector.load %arg2[%c0_61, %c0_62, %c0_63] : memref<9x8x128xbf16, #tpu.memory_space<vmem>>, vector<1x8x128xbf16>
    %77 = vector.shape_cast %76 : vector<1x8x128xbf16> to vector<8x128xbf16>
    %cst_64 = arith.constant dense<0.000000e+00> : vector<256x128xf32>
    %78 = tpu.matmul %75, %77, %cst_64 {dimension_numbers = #tpu.dot_dimension_numbers<[1], [0], [0], [1], [0, 0, 1, 1], [], []>} : vector<256x8xbf16>, vector<8x128xbf16>, vector<256x128xf32> -> vector<256x128xf32>
    %79 = arith.addf %74, %78 : vector<256x128xf32>
    %80 = vector.extract_strided_slice %73 {offsets = [32, 0], sizes = [256, 8], strides = [1, 1]} : vector<384x8xbf16> to vector<256x8xbf16>
    %c1_65 = arith.constant 1 : index
    %c0_66 = arith.constant 0 : index
    %c0_67 = arith.constant 0 : index
    %81 = vector.load %arg2[%c1_65, %c0_66, %c0_67] : memref<9x8x128xbf16, #tpu.memory_space<vmem>>, vector<1x8x128xbf16>
    %82 = vector.shape_cast %81 : vector<1x8x128xbf16> to vector<8x128xbf16>
    %cst_68 = arith.constant dense<0.000000e+00> : vector<256x128xf32>
    %83 = tpu.matmul %80, %82, %cst_68 {dimension_numbers = #tpu.dot_dimension_numbers<[1], [0], [0], [1], [0, 0, 1, 1], [], []>} : vector<256x8xbf16>, vector<8x128xbf16>, vector<256x128xf32> -> vector<256x128xf32>
    %84 = arith.addf %79, %83 : vector<256x128xf32>
    %85 = vector.extract_strided_slice %73 {offsets = [33, 0], sizes = [256, 8], strides = [1, 1]} : vector<384x8xbf16> to vector<256x8xbf16>
    %c2_69 = arith.constant 2 : index
    %c0_70 = arith.constant 0 : index
    %c0_71 = arith.constant 0 : index
    %86 = vector.load %arg2[%c2_69, %c0_70, %c0_71] : memref<9x8x128xbf16, #tpu.memory_space<vmem>>, vector<1x8x128xbf16>
    %87 = vector.shape_cast %86 : vector<1x8x128xbf16> to vector<8x128xbf16>
    %cst_72 = arith.constant dense<0.000000e+00> : vector<256x128xf32>
    %88 = tpu.matmul %85, %87, %cst_72 {dimension_numbers = #tpu.dot_dimension_numbers<[1], [0], [0], [1], [0, 0, 1, 1], [], []>} : vector<256x8xbf16>, vector<8x128xbf16>, vector<256x128xf32> -> vector<256x128xf32>
    %89 = arith.addf %84, %88 : vector<256x128xf32>
    %90 = vector.extract_strided_slice %73 {offsets = [63, 0], sizes = [256, 8], strides = [1, 1]} : vector<384x8xbf16> to vector<256x8xbf16>
    %c3_73 = arith.constant 3 : index
    %c0_74 = arith.constant 0 : index
    %c0_75 = arith.constant 0 : index
    %91 = vector.load %arg2[%c3_73, %c0_74, %c0_75] : memref<9x8x128xbf16, #tpu.memory_space<vmem>>, vector<1x8x128xbf16>
    %92 = vector.shape_cast %91 : vector<1x8x128xbf16> to vector<8x128xbf16>
    %cst_76 = arith.constant dense<0.000000e+00> : vector<256x128xf32>
    %93 = tpu.matmul %90, %92, %cst_76 {dimension_numbers = #tpu.dot_dimension_numbers<[1], [0], [0], [1], [0, 0, 1, 1], [], []>} : vector<256x8xbf16>, vector<8x128xbf16>, vector<256x128xf32> -> vector<256x128xf32>
    %94 = arith.addf %89, %93 : vector<256x128xf32>
    %95 = vector.extract_strided_slice %73 {offsets = [64, 0], sizes = [256, 8], strides = [1, 1]} : vector<384x8xbf16> to vector<256x8xbf16>
    %c4_77 = arith.constant 4 : index
    %c0_78 = arith.constant 0 : index
    %c0_79 = arith.constant 0 : index
    %96 = vector.load %arg2[%c4_77, %c0_78, %c0_79] : memref<9x8x128xbf16, #tpu.memory_space<vmem>>, vector<1x8x128xbf16>
    %97 = vector.shape_cast %96 : vector<1x8x128xbf16> to vector<8x128xbf16>
    %cst_80 = arith.constant dense<0.000000e+00> : vector<256x128xf32>
    %98 = tpu.matmul %95, %97, %cst_80 {dimension_numbers = #tpu.dot_dimension_numbers<[1], [0], [0], [1], [0, 0, 1, 1], [], []>} : vector<256x8xbf16>, vector<8x128xbf16>, vector<256x128xf32> -> vector<256x128xf32>
    %99 = arith.addf %94, %98 : vector<256x128xf32>
    %100 = vector.extract_strided_slice %73 {offsets = [65, 0], sizes = [256, 8], strides = [1, 1]} : vector<384x8xbf16> to vector<256x8xbf16>
    %c5_81 = arith.constant 5 : index
    %c0_82 = arith.constant 0 : index
    %c0_83 = arith.constant 0 : index
    %101 = vector.load %arg2[%c5_81, %c0_82, %c0_83] : memref<9x8x128xbf16, #tpu.memory_space<vmem>>, vector<1x8x128xbf16>
    %102 = vector.shape_cast %101 : vector<1x8x128xbf16> to vector<8x128xbf16>
    %cst_84 = arith.constant dense<0.000000e+00> : vector<256x128xf32>
    %103 = tpu.matmul %100, %102, %cst_84 {dimension_numbers = #tpu.dot_dimension_numbers<[1], [0], [0], [1], [0, 0, 1, 1], [], []>} : vector<256x8xbf16>, vector<8x128xbf16>, vector<256x128xf32> -> vector<256x128xf32>
    %104 = arith.addf %99, %103 : vector<256x128xf32>
    %105 = vector.extract_strided_slice %73 {offsets = [95, 0], sizes = [256, 8], strides = [1, 1]} : vector<384x8xbf16> to vector<256x8xbf16>
    %c6_85 = arith.constant 6 : index
    %c0_86 = arith.constant 0 : index
    %c0_87 = arith.constant 0 : index
    %106 = vector.load %arg2[%c6_85, %c0_86, %c0_87] : memref<9x8x128xbf16, #tpu.memory_space<vmem>>, vector<1x8x128xbf16>
    %107 = vector.shape_cast %106 : vector<1x8x128xbf16> to vector<8x128xbf16>
    %cst_88 = arith.constant dense<0.000000e+00> : vector<256x128xf32>
    %108 = tpu.matmul %105, %107, %cst_88 {dimension_numbers = #tpu.dot_dimension_numbers<[1], [0], [0], [1], [0, 0, 1, 1], [], []>} : vector<256x8xbf16>, vector<8x128xbf16>, vector<256x128xf32> -> vector<256x128xf32>
    %109 = arith.addf %104, %108 : vector<256x128xf32>
    %110 = vector.extract_strided_slice %73 {offsets = [96, 0], sizes = [256, 8], strides = [1, 1]} : vector<384x8xbf16> to vector<256x8xbf16>
    %c7_89 = arith.constant 7 : index
    %c0_90 = arith.constant 0 : index
    %c0_91 = arith.constant 0 : index
    %111 = vector.load %arg2[%c7_89, %c0_90, %c0_91] : memref<9x8x128xbf16, #tpu.memory_space<vmem>>, vector<1x8x128xbf16>
    %112 = vector.shape_cast %111 : vector<1x8x128xbf16> to vector<8x128xbf16>
    %cst_92 = arith.constant dense<0.000000e+00> : vector<256x128xf32>
    %113 = tpu.matmul %110, %112, %cst_92 {dimension_numbers = #tpu.dot_dimension_numbers<[1], [0], [0], [1], [0, 0, 1, 1], [], []>} : vector<256x8xbf16>, vector<8x128xbf16>, vector<256x128xf32> -> vector<256x128xf32>
    %114 = arith.addf %109, %113 : vector<256x128xf32>
    %115 = vector.extract_strided_slice %73 {offsets = [97, 0], sizes = [256, 8], strides = [1, 1]} : vector<384x8xbf16> to vector<256x8xbf16>
    %c8_93 = arith.constant 8 : index
    %c0_94 = arith.constant 0 : index
    %c0_95 = arith.constant 0 : index
    %116 = vector.load %arg2[%c8_93, %c0_94, %c0_95] : memref<9x8x128xbf16, #tpu.memory_space<vmem>>, vector<1x8x128xbf16>
    %117 = vector.shape_cast %116 : vector<1x8x128xbf16> to vector<8x128xbf16>
    %cst_96 = arith.constant dense<0.000000e+00> : vector<256x128xf32>
    %118 = tpu.matmul %115, %117, %cst_96 {dimension_numbers = #tpu.dot_dimension_numbers<[1], [0], [0], [1], [0, 0, 1, 1], [], []>} : vector<256x8xbf16>, vector<8x128xbf16>, vector<256x128xf32> -> vector<256x128xf32>
    %119 = arith.addf %114, %118 : vector<256x128xf32>
    %120 = vector.broadcast %9 : vector<1x128xf32> to vector<256x128xf32>
    %121 = arith.addf %119, %120 : vector<256x128xf32>
    %cst_97 = arith.constant 0.000000e+00 : f32
    %122 = vector.broadcast %cst_97 : f32 to vector<256x128xf32>
    %123 = arith.maximumf %121, %122 : vector<256x128xf32>
    %124 = vector.shape_cast %123 : vector<256x128xf32> to vector<8x32x128xf32>
    %125 = vector.extract_strided_slice %124 {offsets = [0, 0, 0], sizes = [8, 16, 128], strides = [1, 1, 1]} : vector<8x32x128xf32> to vector<8x16x128xf32>
    %cst_98 = arith.constant dense<0.000000e+00> : vector<16x128xf32>
    %126 = vector.multi_reduction <add>, %125, %cst_98 [0] : vector<8x16x128xf32> to vector<16x128xf32>
    %cst_99 = arith.constant dense<0.000000e+00> : vector<128xf32>
    %127 = vector.multi_reduction <add>, %126, %cst_99 [0] : vector<16x128xf32> to vector<128xf32>
    %128 = vector.shape_cast %127 : vector<128xf32> to vector<1x128xf32>
    %129 = arith.addf %68, %128 : vector<1x128xf32>
    %c0_100 = arith.constant 0 : index
    %c8_101 = arith.constant 8 : index
    %c0_102 = arith.constant 0 : index
    %c0_103 = arith.constant 0 : index
    %130 = vector.load %arg8[%c0_100, %c8_101, %c0_102, %c0_103] : memref<1x16x16x128xf32, #tpu.memory_space<vmem>>, vector<1x8x16x128xf32>
    %131 = vector.shape_cast %130 : vector<1x8x16x128xf32> to vector<8x16x128xf32>
    %132 = vector.shape_cast %125 : vector<8x16x128xf32> to vector<1x8x16x128xf32>
    tpu.vector_store %arg8[%c0_100, %c8_101, %c0_102, %c0_103], %132 {strides = array<i32>} : memref<1x16x16x128xf32, #tpu.memory_space<vmem>>, vector<1x8x16x128xf32>,
    %cst_104 = arith.constant 3.906250e-03 : f32
    %133 = vector.broadcast %cst_104 : f32 to vector<1x128xf32>
    %134 = arith.mulf %129, %133 : vector<1x128xf32>
    %c0_105 = arith.constant 0 : index
    %c0_106 = arith.constant 0 : index
    %135 = vector.load %arg4[%c0_105, %c0_106] : memref<128x128xf32, #tpu.memory_space<vmem>>, vector<128x128xf32>
    %cst_107 = arith.constant dense<0.000000e+00> : vector<1x128xf32>
    %136 = tpu.matmul %134, %135, %cst_107 {dimension_numbers = #tpu.dot_dimension_numbers<[1], [0], [0], [1], [0, 0, 1, 1], [], []>} : vector<1x128xf32>, vector<128x128xf32>, vector<1x128xf32> -> vector<1x128xf32>
    %c0_108 = arith.constant 0 : index
    %c0_109 = arith.constant 0 : index
    %137 = vector.load %arg5[%c0_108, %c0_109] : memref<1x128xf32, #tpu.memory_space<vmem>>, vector<1x128xf32>
    %138 = arith.addf %136, %137 : vector<1x128xf32>
    %cst_110 = arith.constant 0.000000e+00 : f32
    %139 = vector.broadcast %cst_110 : f32 to vector<1x128xf32>
    %140 = arith.maximumf %138, %139 : vector<1x128xf32>
    %c0_111 = arith.constant 0 : index
    %c0_112 = arith.constant 0 : index
    %141 = vector.load %arg6[%c0_111, %c0_112] : memref<128x128xf32, #tpu.memory_space<vmem>>, vector<128x128xf32>
    %cst_113 = arith.constant dense<0.000000e+00> : vector<1x128xf32>
    %142 = tpu.matmul %140, %141, %cst_113 {dimension_numbers = #tpu.dot_dimension_numbers<[1], [0], [0], [1], [0, 0, 1, 1], [], []>} : vector<1x128xf32>, vector<128x128xf32>, vector<1x128xf32> -> vector<1x128xf32>
    %c0_114 = arith.constant 0 : index
    %c0_115 = arith.constant 0 : index
    %143 = vector.load %arg7[%c0_114, %c0_115] : memref<1x128xf32, #tpu.memory_space<vmem>>, vector<1x128xf32>
    %144 = arith.addf %142, %143 : vector<1x128xf32>
    %145 = arith.negf %144 : vector<1x128xf32>
    %146 = math.exp %145 : vector<1x128xf32>
    %cst_116 = arith.constant 1.000000e+00 : f32
    %147 = vector.broadcast %cst_116 : f32 to vector<1x128xf32>
    %148 = arith.addf %147, %146 : vector<1x128xf32>
    %149 = arith.divf %147, %148 : vector<1x128xf32>
    %cst_117 = arith.constant 1.000000e+00 : f32
    %150 = vector.broadcast %cst_117 : f32 to vector<1x128xf32>
    %151 = arith.addf %149, %150 : vector<1x128xf32>
    %152 = vector.shape_cast %151 : vector<1x128xf32> to vector<1x1x128xf32>
    %c0_118 = arith.constant 0 : index
    %c0_119 = arith.constant 0 : index
    %c0_120 = arith.constant 0 : index
    %c0_121 = arith.constant 0 : index
    %153 = vector.load %arg8[%c0_118, %c0_119, %c0_120, %c0_121] : memref<1x16x16x128xf32, #tpu.memory_space<vmem>>, vector<1x8x16x128xf32>
    %154 = vector.shape_cast %153 : vector<1x8x16x128xf32> to vector<8x16x128xf32>
    %155 = vector.broadcast %152 : vector<1x1x128xf32> to vector<8x16x128xf32>
    %156 = arith.mulf %154, %155 : vector<8x16x128xf32>
    %c0_122 = arith.constant 0 : index
    %c0_123 = arith.constant 0 : index
    %c0_124 = arith.constant 0 : index
    %c0_125 = arith.constant 0 : index
    %157 = vector.load %arg8[%c0_122, %c0_123, %c0_124, %c0_125] : memref<1x16x16x128xf32, #tpu.memory_space<vmem>>, vector<1x8x16x128xf32>
    %158 = vector.shape_cast %157 : vector<1x8x16x128xf32> to vector<8x16x128xf32>
    %159 = vector.shape_cast %156 : vector<8x16x128xf32> to vector<1x8x16x128xf32>
    tpu.vector_store %arg8[%c0_122, %c0_123, %c0_124, %c0_125], %159 {strides = array<i32>} : memref<1x16x16x128xf32, #tpu.memory_space<vmem>>, vector<1x8x16x128xf32>,
    %c0_126 = arith.constant 0 : index
    %c8_127 = arith.constant 8 : index
    %c0_128 = arith.constant 0 : index
    %c0_129 = arith.constant 0 : index
    %160 = vector.load %arg8[%c0_126, %c8_127, %c0_128, %c0_129] : memref<1x16x16x128xf32, #tpu.memory_space<vmem>>, vector<1x8x16x128xf32>
    %161 = vector.shape_cast %160 : vector<1x8x16x128xf32> to vector<8x16x128xf32>
    %162 = vector.broadcast %152 : vector<1x1x128xf32> to vector<8x16x128xf32>
    %163 = arith.mulf %161, %162 : vector<8x16x128xf32>
    %c0_130 = arith.constant 0 : index
    %c8_131 = arith.constant 8 : index
    %c0_132 = arith.constant 0 : index
    %c0_133 = arith.constant 0 : index
    %164 = vector.load %arg8[%c0_130, %c8_131, %c0_132, %c0_133] : memref<1x16x16x128xf32, #tpu.memory_space<vmem>>, vector<1x8x16x128xf32>
    %165 = vector.shape_cast %164 : vector<1x8x16x128xf32> to vector<8x16x128xf32>
    %166 = vector.shape_cast %163 : vector<8x16x128xf32> to vector<1x8x16x128xf32>
    tpu.vector_store %arg8[%c0_130, %c8_131, %c0_132, %c0_133], %166 {strides = array<i32>} : memref<1x16x16x128xf32, #tpu.memory_space<vmem>>, vector<1x8x16x128xf32>,
    return
  }
  func.func @transform_0(%arg0: i32) -> (i32, i32, i32, i32) {
    %c0_i32 = arith.constant 0 : i32
    %c0_i32_0 = arith.constant 0 : i32
    %c0_i32_1 = arith.constant 0 : i32
    %c0_i32_2 = arith.constant 0 : i32
    return %arg0, %c0_i32, %c0_i32_0, %c0_i32_1 : i32, i32, i32, i32
  }
  func.func @transform_1(%arg0: i32) -> (i32, i32, i32) {
    %c0_i32 = arith.constant 0 : i32
    %c0_i32_0 = arith.constant 0 : i32
    %c0_i32_1 = arith.constant 0 : i32
    %c0_i32_2 = arith.constant 0 : i32
    return %c0_i32, %c0_i32_0, %c0_i32_1 : i32, i32, i32
  }
  func.func @transform_2(%arg0: i32) -> (i32, i32) {
    %c0_i32 = arith.constant 0 : i32
    %c0_i32_0 = arith.constant 0 : i32
    %c0_i32_1 = arith.constant 0 : i32
    return %c0_i32, %c0_i32_0 : i32, i32
  }
  func.func @transform_3(%arg0: i32) -> (i32, i32) {
    %c0_i32 = arith.constant 0 : i32
    %c0_i32_0 = arith.constant 0 : i32
    %c0_i32_1 = arith.constant 0 : i32
    return %c0_i32, %c0_i32_0 : i32, i32
  }
  func.func @transform_4(%arg0: i32) -> (i32, i32) {
    %c0_i32 = arith.constant 0 : i32
    %c0_i32_0 = arith.constant 0 : i32
    %c0_i32_1 = arith.constant 0 : i32
    return %c0_i32, %c0_i32_0 : i32, i32
  }
  func.func @transform_5(%arg0: i32) -> (i32, i32) {
    %c0_i32 = arith.constant 0 : i32
    %c0_i32_0 = arith.constant 0 : i32
    %c0_i32_1 = arith.constant 0 : i32
    return %c0_i32, %c0_i32_0 : i32, i32
  }
  func.func @transform_6(%arg0: i32) -> (i32, i32) {
    %c0_i32 = arith.constant 0 : i32
    %c0_i32_0 = arith.constant 0 : i32
    %c0_i32_1 = arith.constant 0 : i32
    return %c0_i32, %c0_i32_0 : i32, i32
  }
  func.func @transform_7(%arg0: i32) -> (i32, i32, i32, i32) {
    %c0_i32 = arith.constant 0 : i32
    %c0_i32_0 = arith.constant 0 : i32
    %c0_i32_1 = arith.constant 0 : i32
    %c0_i32_2 = arith.constant 0 : i32
    return %arg0, %c0_i32, %c0_i32_0, %c0_i32_1 : i32, i32, i32, i32
  }
}

</mosaic_0001>

<llo_original>
// kernel: tpu_custom_call.1
$region0: #{tpu_custom_call.1}
  #allocation0 [shape = 'u32[]', space=smem, size = 0x4, offset = 0x4, fixed_abs, tag = 'smem constant byte address 0x4 - core index']
  #allocation1 [shape = 'u32[144,128]{1,0:T(1,128)}', space=vmem, size = 0x12000, scoped, tag = 'internal scratch']
  #allocation2 [shape = 'bf16[20,32,8]{2,1,0:T(16,128)(2,1)}', space=vmem, size = 0x28000, scoped, tag = 'scratch operand']
  %s0 = inlined_call_operand.vmem [shape: bf16[2,16,16,8], index: 0, kind: input, shape index: {}]
  %s1 = inlined_call_operand.vmem [shape: bf16[9,8,128], index: 1, kind: input, shape index: {}]
  %s2 = inlined_call_operand.vmem [shape: f32[1,128], index: 2, kind: input, shape index: {}]
  %s3 = inlined_call_operand.vmem [shape: f32[128,128], index: 3, kind: input, shape index: {}]
  %s4 = inlined_call_operand.vmem [shape: f32[1,128], index: 4, kind: input, shape index: {}]
  %s5 = inlined_call_operand.vmem [shape: f32[128,128], index: 5, kind: input, shape index: {}]
  %s6 = inlined_call_operand.vmem [shape: f32[1,128], index: 6, kind: input, shape index: {}]
  %s7 = inlined_call_operand.hbm [shape: f32[2,16,16,128], index: 7, kind: output, shape index: {}]
  %s8 = sld [smem:[#allocation0]]
  $region61: #{tpu_custom_call.1} parent=0
    _
  %s10 = ssub.s32 1, %s8
  %s11 = scalar_select 0, %s10, %s8
  $region1: #{tpu_custom_call.1} parent=0
    #allocation3 [shape = 'u8[262144]{0}', space=vmem, size = 0x40000, scoped, tag = 'output window, operand 0']
    #allocation4 [shape = 's32[2]{0}', space=sflag, size = 0x8, scoped, tag = 'scoped memory for tpu_custom_call.1']
    %12 = vsyncpa [#allocation4], 0
    %s13 = scalar_lea.sflag [#allocation4], 1
    %14 = vsyncpa %s13, 0
    loop: start=0, step=1, limit=4
    $region2: #{tpu_custom_call.1} parent=1 // loop_pre_header
      _
    $region3: #{tpu_custom_call.1} parent=1 // loop_header
      %s16 = sphi 0, %s20
      %p17 = scmp.ge.s32.totalorder %s16, 4
      %s26 = sphi 0, %s28
      %s29 = sphi 0, %s26
      %s30 = sphi 0, %s29
      %s46 = sphi 0, %s30
      %s50 = sphi 0, %s50
      %s52 = sphi 0, %s50
      %s53 = sphi 0, %s52
      %s67 = sphi 0, %s53
      %s71 = sphi 0, %s71
      %s73 = sphi 0, %s71
      %s74 = sphi 0, %s73
      %s88 = sphi 0, %s74
      %s92 = sphi 0, %s92
      %s94 = sphi 0, %s92
      %s95 = sphi 0, %s94
      %s109 = sphi 0, %s95
      %s113 = sphi 0, %s113
      %s115 = sphi 0, %s113
      %s116 = sphi 0, %s115
      %s130 = sphi 0, %s116
      %s134 = sphi 0, %s134
      %s136 = sphi 0, %s134
      %s137 = sphi 0, %s136
      %s151 = sphi 0, %s137
      %s155 = sphi 0, %s155
      %s157 = sphi 0, %s155
      %s158 = sphi 0, %s157
      %s172 = sphi 0, %s158
      %s178 = sphi 0, %s180
      %s181 = sphi 0, %s178
      %s182 = sphi 0, %s181
      %s198 = sphi 0, %s182
    $region4: #{tpu_custom_call.1} parent=1 // loop_header_branch
      %19 = sbr.rel (%p17) target = $region8
    $region5: #{tpu_custom_call.1} parent=1 // loop_body
      %s21 = ssub.s32 %s16, 1
      %s22 = ssub.s32 %s16, 2
      %s23 = sadd.s32 %s16, 1
      %s24 = ssub.s32 %s16, %s23
      %p25 = scmp.eq.s32.totalorder %s24, 0
      %s27 = sadd.s32 %s26, 1
      %s28 = scalar_select %p25, %s26, %s27
      %p31 = pneg %p25
      %p32 = scmp.eq.s32.totalorder %s16, 1
      %p33 = por %p31, %p32
      %p34 = scmp.ne.s32.totalorder %s26, %s29
      %p35 = scmp.eq.s32.totalorder %s16, 0
      %p36 = por %p34, %p35
      %p37 = scmp.ne.s32.totalorder %s26, %s29
      %p38 = scmp.eq.s32.totalorder %s21, 1
      %p39 = por %p37, %p38
      %p40 = scmp.ne.s32.totalorder %s29, %s30
      %p41 = scmp.eq.s32.totalorder %s21, 0
      %p42 = por %p40, %p41
      %p43 = scmp.ne.s32.totalorder %s29, %s30
      %p44 = scmp.eq.s32.totalorder %s22, 1
      %p45 = por %p43, %p44
      %p47 = scmp.ne.s32.totalorder %s30, %s46
      %p48 = scmp.eq.s32.totalorder %s22, 0
      %p49 = por %p47, %p48
      %s51 = sadd.s32 %s50, 1
      %p54 = scmp.eq.s32.totalorder %s16, 1
      %p55 = scmp.ne.s32.totalorder %s50, %s52
      %p56 = scmp.eq.s32.totalorder %s16, 0
      %p57 = por %p55, %p56
      %p58 = scmp.ne.s32.totalorder %s50, %s52
      %p59 = scmp.eq.s32.totalorder %s21, 1
      %p60 = por %p58, %p59
      %p61 = scmp.ne.s32.totalorder %s52, %s53
      %p62 = scmp.eq.s32.totalorder %s21, 0
      %p63 = por %p61, %p62
      %p64 = scmp.ne.s32.totalorder %s52, %s53
      %p65 = scmp.eq.s32.totalorder %s22, 1
      %p66 = por %p64, %p65
      %p68 = scmp.ne.s32.totalorder %s53, %s67
      %p69 = scmp.eq.s32.totalorder %s22, 0
      %p70 = por %p68, %p69
      %s72 = sadd.s32 %s71, 1
      %p75 = scmp.eq.s32.totalorder %s16, 1
      %p76 = scmp.ne.s32.totalorder %s71, %s73
      %p77 = scmp.eq.s32.totalorder %s16, 0
      %p78 = por %p76, %p77
      %p79 = scmp.ne.s32.totalorder %s71, %s73
      %p80 = scmp.eq.s32.totalorder %s21, 1
      %p81 = por %p79, %p80
      %p82 = scmp.ne.s32.totalorder %s73, %s74
      %p83 = scmp.eq.s32.totalorder %s21, 0
      %p84 = por %p82, %p83
      %p85 = scmp.ne.s32.totalorder %s73, %s74
      %p86 = scmp.eq.s32.totalorder %s22, 1
      %p87 = por %p85, %p86
      %p89 = scmp.ne.s32.totalorder %s74, %s88
      %p90 = scmp.eq.s32.totalorder %s22, 0
      %p91 = por %p89, %p90
      %s93 = sadd.s32 %s92, 1
      %p96 = scmp.eq.s32.totalorder %s16, 1
      %p97 = scmp.ne.s32.totalorder %s92, %s94
      %p98 = scmp.eq.s32.totalorder %s16, 0
      %p99 = por %p97, %p98
      %p100 = scmp.ne.s32.totalorder %s92, %s94
      %p101 = scmp.eq.s32.totalorder %s21, 1
      %p102 = por %p100, %p101
      %p103 = scmp.ne.s32.totalorder %s94, %s95
      %p104 = scmp.eq.s32.totalorder %s21, 0
      %p105 = por %p103, %p104
      %p106 = scmp.ne.s32.totalorder %s94, %s95
      %p107 = scmp.eq.s32.totalorder %s22, 1
      %p108 = por %p106, %p107
      %p110 = scmp.ne.s32.totalorder %s95, %s109
      %p111 = scmp.eq.s32.totalorder %s22, 0
      %p112 = por %p110, %p111
      %s114 = sadd.s32 %s113, 1
      %p117 = scmp.eq.s32.totalorder %s16, 1
      %p118 = scmp.ne.s32.totalorder %s113, %s115
      %p119 = scmp.eq.s32.totalorder %s16, 0
      %p120 = por %p118, %p119
      %p121 = scmp.ne.s32.totalorder %s113, %s115
      %p122 = scmp.eq.s32.totalorder %s21, 1
      %p123 = por %p121, %p122
      %p124 = scmp.ne.s32.totalorder %s115, %s116
      %p125 = scmp.eq.s32.totalorder %s21, 0
      %p126 = por %p124, %p125
      %p127 = scmp.ne.s32.totalorder %s115, %s116
      %p128 = scmp.eq.s32.totalorder %s22, 1
      %p129 = por %p127, %p128
      %p131 = scmp.ne.s32.totalorder %s116, %s130
      %p132 = scmp.eq.s32.totalorder %s22, 0
      %p133 = por %p131, %p132
      %s135 = sadd.s32 %s134, 1
      %p138 = scmp.eq.s32.totalorder %s16, 1
      %p139 = scmp.ne.s32.totalorder %s134, %s136
      %p140 = scmp.eq.s32.totalorder %s16, 0
      %p141 = por %p139, %p140
      %p142 = scmp.ne.s32.totalorder %s134, %s136
      %p143 = scmp.eq.s32.totalorder %s21, 1
      %p144 = por %p142, %p143
      %p145 = scmp.ne.s32.totalorder %s136, %s137
      %p146 = scmp.eq.s32.totalorder %s21, 0
      %p147 = por %p145, %p146
      %p148 = scmp.ne.s32.totalorder %s136, %s137
      %p149 = scmp.eq.s32.totalorder %s22, 1
      %p150 = por %p148, %p149
      %p152 = scmp.ne.s32.totalorder %s137, %s151
      %p153 = scmp.eq.s32.totalorder %s22, 0
      %p154 = por %p152, %p153
      %s156 = sadd.s32 %s155, 1
      %p159 = scmp.eq.s32.totalorder %s16, 1
      %p160 = scmp.ne.s32.totalorder %s155, %s157
      %p161 = scmp.eq.s32.totalorder %s16, 0
      %p162 = por %p160, %p161
      %p163 = scmp.ne.s32.totalorder %s155, %s157
      %p164 = scmp.eq.s32.totalorder %s21, 1
      %p165 = por %p163, %p164
      %p166 = scmp.ne.s32.totalorder %s157, %s158
      %p167 = scmp.eq.s32.totalorder %s21, 0
      %p168 = por %p166, %p167
      %p169 = scmp.ne.s32.totalorder %s157, %s158
      %p170 = scmp.eq.s32.totalorder %s22, 1
      %p171 = por %p169, %p170
      %p173 = scmp.ne.s32.totalorder %s158, %s172
      %p174 = scmp.eq.s32.totalorder %s22, 0
      %p175 = por %p173, %p174
      %s176 = ssub.s32 %s16, %s23
      %p177 = scmp.eq.s32.totalorder %s176, 0
      %s179 = sadd.s32 %s178, 1
      %s180 = scalar_select %p177, %s178, %s179
      %p183 = pneg %p177
      %p184 = scmp.eq.s32.totalorder %s16, 1
      %p185 = por %p183, %p184
      %p186 = scmp.ne.s32.totalorder %s178, %s181
      %p187 = scmp.eq.s32.totalorder %s16, 0
      %p188 = por %p186, %p187
      %p189 = scmp.ne.s32.totalorder %s178, %s181
      %p190 = scmp.eq.s32.totalorder %s21, 1
      %p191 = por %p189, %p190
      %p192 = scmp.ne.s32.totalorder %s181, %s182
      %p193 = scmp.eq.s32.totalorder %s21, 0
      %p194 = por %p192, %p193
      %p195 = scmp.ne.s32.totalorder %s181, %s182
      %p196 = scmp.eq.s32.totalorder %s22, 1
      %p197 = por %p195, %p196
      %p199 = scmp.ne.s32.totalorder %s182, %s198
      %p200 = scmp.eq.s32.totalorder %s22, 0
      %p201 = por %p199, %p200
      %p202 = scmp.le.s32.totalorder 1, %s16
      %p203 = scmp.lt.s32.totalorder %s16, 3
      %p204 = pnand %p202, %p203
      %p205 = pneg %p204
      // Predicated region
      $region9: #{tpu_custom_call.1} parent=5 // pred_check
        _
      $region10: #{tpu_custom_call.1} parent=5 // pred_check_branch
        %207 = sbr.rel (%p204) target = $region12
      $region11: #{tpu_custom_call.1} parent=5 // pred_region
        %s208 = ssub.s32 %s16, 1
        // Predicated region
        $region13: #{tpu_custom_call.1} parent=11 // pred_check
          %p209 = pneg %p63
        $region14: #{tpu_custom_call.1} parent=11 // pred_check_branch
          %211 = sbr.rel (%p209) target = $region16
        $region15: #{tpu_custom_call.1} parent=11 // pred_region
          _
        $region16: #{tpu_custom_call.1} parent=11 // pred_fallthru
          _
        // Predicated region
        $region17: #{tpu_custom_call.1} parent=11 // pred_check
          %p212 = pneg %p84
        $region18: #{tpu_custom_call.1} parent=11 // pred_check_branch
          %214 = sbr.rel (%p212) target = $region20
        $region19: #{tpu_custom_call.1} parent=11 // pred_region
          _
        $region20: #{tpu_custom_call.1} parent=11 // pred_fallthru
          _
        // Predicated region
        $region21: #{tpu_custom_call.1} parent=11 // pred_check
          %p215 = pneg %p105
        $region22: #{tpu_custom_call.1} parent=11 // pred_check_branch
          %217 = sbr.rel (%p215) target = $region24
        $region23: #{tpu_custom_call.1} parent=11 // pred_region
          _
        $region24: #{tpu_custom_call.1} parent=11 // pred_fallthru
          _
        // Predicated region
        $region25: #{tpu_custom_call.1} parent=11 // pred_check
          %p218 = pneg %p126
        $region26: #{tpu_custom_call.1} parent=11 // pred_check_branch
          %220 = sbr.rel (%p218) target = $region28
        $region27: #{tpu_custom_call.1} parent=11 // pred_region
          _
        $region28: #{tpu_custom_call.1} parent=11 // pred_fallthru
          _
        // Predicated region
        $region29: #{tpu_custom_call.1} parent=11 // pred_check
          %p221 = pneg %p147
        $region30: #{tpu_custom_call.1} parent=11 // pred_check_branch
          %223 = sbr.rel (%p221) target = $region32
        $region31: #{tpu_custom_call.1} parent=11 // pred_region
          _
        $region32: #{tpu_custom_call.1} parent=11 // pred_fallthru
          _
        // Predicated region
        $region33: #{tpu_custom_call.1} parent=11 // pred_check
          %p224 = pneg %p168
        $region34: #{tpu_custom_call.1} parent=11 // pred_check_branch
          %226 = sbr.rel (%p224) target = $region36
        $region35: #{tpu_custom_call.1} parent=11 // pred_region
          _
        $region36: #{tpu_custom_call.1} parent=11 // pred_fallthru
          _
      $region12: #{tpu_custom_call.1} parent=5 // pred_fallthru
        _
      %p227 = scmp.lt.s32.totalorder %s16, 2
      // Predicated region
      $region37: #{tpu_custom_call.1} parent=5 // pred_check
        %p228 = pneg %p227
      $region38: #{tpu_custom_call.1} parent=5 // pred_check_branch
        %230 = sbr.rel (%p228) target = $region40
      $region39: #{tpu_custom_call.1} parent=5 // pred_region
        // Predicated region
        $region41: #{tpu_custom_call.1} parent=39 // pred_check
          %p231 = pneg %p36
        $region42: #{tpu_custom_call.1} parent=39 // pred_check_branch
          %233 = sbr.rel (%p231) target = $region44
        $region43: #{tpu_custom_call.1} parent=39 // pred_region
          %p234 = scmp.lt.s32.totalorder %s16, 1
          %s235 = scalar_select %p234, %s16, 1
          %s236 = smul.addr %s235, 32
          %s237 = smul.addr %s236, 4
          %s238 = scalar_lea.vmem %s0, %s237
        $region44: #{tpu_custom_call.1} parent=39 // pred_fallthru
          _
      $region40: #{tpu_custom_call.1} parent=5 // pred_fallthru
        _
      %p239 = scmp.le.s32.totalorder 1, %s16
      %p240 = scmp.lt.s32.totalorder %s16, 3
      %p241 = pnand %p239, %p240
      %p242 = pneg %p241
      // Predicated region
      $region45: #{tpu_custom_call.1} parent=5 // pred_check
        _
      $region46: #{tpu_custom_call.1} parent=5 // pred_check_branch
        %244 = sbr.rel (%p241) target = $region48
      $region47: #{tpu_custom_call.1} parent=5 // pred_region
        %s245 = ssub.s32 %s16, 1
        %p246 = scmp.lt.s32.totalorder %s21, 1
        %s247 = scalar_select %p246, %s21, 1
        %s248 = smul.addr %s247, 32
        %s249 = smul.addr %s248, 4
        %s250 = scalar_lea.vmem %s0, %s249
        %p251 = pneg %p42
        %p252 = pneg %p39
        %p253 = pneg %p63
        %p254 = pneg %p60
        %p255 = pneg %p84
        %p256 = pneg %p81
        %p257 = pneg %p105
        %p258 = pneg %p102
        %p259 = pneg %p126
        %p260 = pneg %p123
        %p261 = pneg %p147
        %p262 = pneg %p144
        %p263 = pneg %p168
        %p264 = pneg %p165
        %p265 = pneg %p194
        %p266 = pneg %p191
        %s267 = sand.u32 %s181, 1
        %s268 = scalar_lea.sflag [#allocation4], %s267
        %s269 = sand.u32 %s181, 1
        %s270 = smul.addr %s269, 256
        %s271 = scalar_lea.vmem [#allocation3], %s270
        %p272 = scmp.lt.s32.totalorder %s21, 1
        %s273 = scalar_select %p272, %s21, 1
        %s274 = smul.addr %s273, 32
        %s275 = smul.addr %s274, 4
        %s276 = scalar_lea.vmem %s0, %s275
        %vm278 = vcmask 64512
        %279 = vst.msk [vmem:[#allocation2] sm:$0xff] %vm278, 0
        %280 = vst.msk [vmem:[#allocation2 + $0x8] sm:$0xff] %vm278, 0
        %281 = vst.msk [vmem:[#allocation2 + $0x10] sm:$0xff] %vm278, 0
        %282 = vst.msk [vmem:[#allocation2 + $0x18] sm:$0xff] %vm278, 0
        %s283 = scalar_lea.vmem [#allocation2], 288
        %284 = vst.msk [vmem:[%s283] sm:$0xff] %vm278, 0
        %285 = vst.msk [vmem:[%s283 + $0x8] sm:$0xff] %vm278, 0
        %286 = vst.msk [vmem:[%s283 + $0x10] sm:$0xff] %vm278, 0
        %287 = vst.msk [vmem:[%s283 + $0x18] sm:$0xff] %vm278, 0
        %s288 = scalar_lea.vmem [#allocation2], 32
        %289 = vst.msk [vmem:[%s288 + $0x8] sm:$0xff] %vm278, 0
        %290 = vst.msk [vmem:[%s288 + $0x18] sm:$0xff] %vm278, 0
        %291 = vst.msk [vmem:[%s288 + $0x28] sm:$0xff] %vm278, 0
        %292 = vst.msk [vmem:[%s288 + $0x38] sm:$0xff] %vm278, 0
        %293 = vst.msk [vmem:[%s288 + $0x48] sm:$0xff] %vm278, 0
        %294 = vst.msk [vmem:[%s288 + $0x58] sm:$0xff] %vm278, 0
        %295 = vst.msk [vmem:[%s288 + $0x68] sm:$0xff] %vm278, 0
        %296 = vst.msk [vmem:[%s288 + $0x78] sm:$0xff] %vm278, 0
        %297 = vst.msk [vmem:[%s288 + $0x88] sm:$0xff] %vm278, 0
        %298 = vst.msk [vmem:[%s288 + $0x98] sm:$0xff] %vm278, 0
        %299 = vst.msk [vmem:[%s288 + $0xa8] sm:$0xff] %vm278, 0
        %300 = vst.msk [vmem:[%s288 + $0xb8] sm:$0xff] %vm278, 0
        %301 = vst.msk [vmem:[%s288 + $0xc8] sm:$0xff] %vm278, 0
        %302 = vst.msk [vmem:[%s288 + $0xd8] sm:$0xff] %vm278, 0
        %303 = vst.msk [vmem:[%s288 + $0xe8] sm:$0xff] %vm278, 0
        %304 = vst.msk [vmem:[%s288 + $0xf8] sm:$0xff] %vm278, 0
        %v305 = vld [vmem:[%s276] sm:$0xf]
        %v306 = vld [vmem:[%s276 + $0x4] sm:$0xf]
        %v307 = vld [vmem:[%s276 + $0x8] sm:$0xf]
        %v308 = vld [vmem:[%s276 + $0xc] sm:$0xf]
        %v309 = vld [vmem:[%s276 + $0x10] sm:$0xf]
        %v310 = vld [vmem:[%s276 + $0x14] sm:$0xf]
        %v311 = vld [vmem:[%s276 + $0x18] sm:$0xf]
        %v312 = vld [vmem:[%s276 + $0x1c] sm:$0xf]
        %v313 = vld [vmem:[%s276 + $0x20] sm:$0xf]
        %v314 = vld [vmem:[%s276 + $0x24] sm:$0xf]
        %v315 = vld [vmem:[%s276 + $0x28] sm:$0xf]
        %v316 = vld [vmem:[%s276 + $0x2c] sm:$0xf]
        %v317 = vld [vmem:[%s276 + $0x30] sm:$0xf]
        %v318 = vld [vmem:[%s276 + $0x34] sm:$0xf]
        %v319 = vld [vmem:[%s276 + $0x38] sm:$0xf]
        %v320 = vld [vmem:[%s276 + $0x3c] sm:$0xf]
        %v321 = vld [vmem:[%s276 + $0x40] sm:$0xf]
        %v322 = vld [vmem:[%s276 + $0x44] sm:$0xf]
        %v323 = vld [vmem:[%s276 + $0x48] sm:$0xf]
        %v324 = vld [vmem:[%s276 + $0x4c] sm:$0xf]
        %v325 = vld [vmem:[%s276 + $0x50] sm:$0xf]
        %v326 = vld [vmem:[%s276 + $0x54] sm:$0xf]
        %v327 = vld [vmem:[%s276 + $0x58] sm:$0xf]
        %v328 = vld [vmem:[%s276 + $0x5c] sm:$0xf]
        %v329 = vld [vmem:[%s276 + $0x60] sm:$0xf]
        %v330 = vld [vmem:[%s276 + $0x64] sm:$0xf]
        %v331 = vld [vmem:[%s276 + $0x68] sm:$0xf]
        %v332 = vld [vmem:[%s276 + $0x6c] sm:$0xf]
        %v333 = vld [vmem:[%s276 + $0x70] sm:$0xf]
        %v334 = vld [vmem:[%s276 + $0x74] sm:$0xf]
        %v335 = vld [vmem:[%s276 + $0x78] sm:$0xf]
        %v336 = vld [vmem:[%s276 + $0x7c] sm:$0xf]
        %v369 = vunpack.c.l.b16 %v305
        %v370 = vunpack.c.l.b16 %v306
        %v371 = vunpack.c.l.b16 %v307
        %v372 = vunpack.c.l.b16 %v308
        %v373 = vunpack.c.l.b16 %v309
        %v374 = vunpack.c.l.b16 %v310
        %v375 = vunpack.c.l.b16 %v311
        %v376 = vunpack.c.l.b16 %v312
        %v377 = vunpack.c.l.b16 %v313
        %v378 = vunpack.c.l.b16 %v314
        %v379 = vunpack.c.l.b16 %v315
        %v380 = vunpack.c.l.b16 %v316
        %v381 = vunpack.c.l.b16 %v317
        %v382 = vunpack.c.l.b16 %v318
        %v383 = vunpack.c.l.b16 %v319
        %v384 = vunpack.c.l.b16 %v320
        %v385 = vunpack.c.l.b16 %v321
        %v386 = vunpack.c.l.b16 %v322
        %v387 = vunpack.c.l.b16 %v323
        %v388 = vunpack.c.l.b16 %v324
        %v389 = vunpack.c.l.b16 %v325
        %v390 = vunpack.c.l.b16 %v326
        %v391 = vunpack.c.l.b16 %v327
        %v392 = vunpack.c.l.b16 %v328
        %v393 = vunpack.c.l.b16 %v329
        %v394 = vunpack.c.l.b16 %v330
        %v395 = vunpack.c.l.b16 %v331
        %v396 = vunpack.c.l.b16 %v332
        %v397 = vunpack.c.l.b16 %v333
        %v398 = vunpack.c.l.b16 %v334
        %v399 = vunpack.c.l.b16 %v335
        %v400 = vunpack.c.l.b16 %v336
        %v401 = vpack.c.b16 %v370, %v369
        %v402 = vpack.c.b16 %v372, %v371
        %v403 = vpack.c.b16 %v374, %v373
        %v404 = vpack.c.b16 %v376, %v375
        %v405 = vpack.c.b16 %v378, %v377
        %v406 = vpack.c.b16 %v380, %v379
        %v407 = vpack.c.b16 %v382, %v381
        %v408 = vpack.c.b16 %v384, %v383
        %v409 = vpack.c.b16 %v386, %v385
        %v410 = vpack.c.b16 %v388, %v387
        %v411 = vpack.c.b16 %v390, %v389
        %v412 = vpack.c.b16 %v392, %v391
        %v413 = vpack.c.b16 %v394, %v393
        %v414 = vpack.c.b16 %v396, %v395
        %v415 = vpack.c.b16 %v398, %v397
        %v416 = vpack.c.b16 %v400, %v399
        %433 = vst.msk [vmem:[%s288] sm:$0xff] %vm278, %v401
        %434 = vst.msk [vmem:[%s288 + $0x10] sm:$0xff] %vm278, %v402
        %435 = vst.msk [vmem:[%s288 + $0x20] sm:$0xff] %vm278, %v403
        %436 = vst.msk [vmem:[%s288 + $0x30] sm:$0xff] %vm278, %v404
        %437 = vst.msk [vmem:[%s288 + $0x40] sm:$0xff] %vm278, %v405
        %438 = vst.msk [vmem:[%s288 + $0x50] sm:$0xff] %vm278, %v406
        %439 = vst.msk [vmem:[%s288 + $0x60] sm:$0xff] %vm278, %v407
        %440 = vst.msk [vmem:[%s288 + $0x70] sm:$0xff] %vm278, %v408
        %441 = vst.msk [vmem:[%s288 + $0x80] sm:$0xff] %vm278, %v409
        %442 = vst.msk [vmem:[%s288 + $0x90] sm:$0xff] %vm278, %v410
        %443 = vst.msk [vmem:[%s288 + $0xa0] sm:$0xff] %vm278, %v411
        %444 = vst.msk [vmem:[%s288 + $0xb0] sm:$0xff] %vm278, %v412
        %445 = vst.msk [vmem:[%s288 + $0xc0] sm:$0xff] %vm278, %v413
        %446 = vst.msk [vmem:[%s288 + $0xd0] sm:$0xff] %vm278, %v414
        %447 = vst.msk [vmem:[%s288 + $0xe0] sm:$0xff] %vm278, %v415
        %448 = vst.msk [vmem:[%s288 + $0xf0] sm:$0xff] %vm278, %v416
        %v449 = vld [vmem:[%s2] sm:$0x1]
        %v450 = vld [vmem:[#allocation2 + $0x8] sm:$0xff]
        %v451 = vld [vmem:[#allocation2 + $0x10] sm:$0xff]
        %v452 = vld [vmem:[#allocation2 + $0x18] sm:$0xff]
        %v453 = vld [vmem:[#allocation2 + $0x20] sm:$0xff]
        %v454 = vld [vmem:[#allocation2 + $0x28] sm:$0xff]
        %v455 = vld [vmem:[#allocation2 + $0x30] sm:$0xff]
        %v456 = vld [vmem:[#allocation2 + $0x38] sm:$0xff]
        %v457 = vld [vmem:[#allocation2 + $0x40] sm:$0xff]
        %v458 = vld [vmem:[#allocation2 + $0x48] sm:$0xff]
        %v459 = vld [vmem:[#allocation2 + $0x50] sm:$0xff]
        %v460 = vld [vmem:[#allocation2 + $0x58] sm:$0xff]
        %v461 = vld [vmem:[#allocation2 + $0x60] sm:$0xff]
        %v462 = vld [vmem:[#allocation2 + $0x68] sm:$0xff]
        %v463 = vld [vmem:[#allocation2 + $0x70] sm:$0xff]
        %v464 = vld [vmem:[#allocation2 + $0x78] sm:$0xff]
        %v465 = vld [vmem:[#allocation2 + $0x80] sm:$0xff]
        %v466 = vld [vmem:[#allocation2 + $0x88] sm:$0xff]
        %v467 = vld [vmem:[#allocation2 + $0x90] sm:$0xff]
        %v468 = vld [vmem:[#allocation2 + $0x98] sm:$0xff]
        %v469 = vld [vmem:[#allocation2 + $0xa0] sm:$0xff]
        %v470 = vld [vmem:[#allocation2 + $0xa8] sm:$0xff]
        %v471 = vld [vmem:[#allocation2 + $0xb0] sm:$0xff]
        %v472 = vld [vmem:[%s1] sm:$0xf]
        %s473 = scalar_lea.vmem %s1, 4
        %v474 = vld [vmem:[%s473] sm:$0xf]
        %v476 = vsel %vm278, %v451, 0
        %v479 = vsel %vm278, %v452, 0
        %v482 = vsel %vm278, %v453, 0
        %v485 = vsel %vm278, %v454, 0
        %v488 = vsel %vm278, %v455, 0
        %v491 = vsel %vm278, %v456, 0
        %v494 = vsel %vm278, %v457, 0
        %v497 = vsel %vm278, %v458, 0
        %v500 = vsel %vm278, %v459, 0
        %v503 = vsel %vm278, %v460, 0
        %v506 = vsel %vm278, %v461, 0
        %v509 = vsel %vm278, %v462, 0
        %v512 = vsel %vm278, %v463, 0
        %v515 = vsel %vm278, %v464, 0
        %v518 = vsel %vm278, %v465, 0
        %v521 = vsel %vm278, %v466, 0
        %vm523 = vcmask 1043456
        %v525 = vsel %vm523, %v474, 0
        %527 = vmatprep.subr.bf16.mxu0 0
        %528 = vmatpush1.bf16.msra.mxu0 %v525
        %529 = vmatprep.subr.bf16.mxu0 0
        %530 = vmatpush1.bf16.msra.mxu0 0
        %531 = vmatprep.subr.bf16.mxu0 0
        %532 = vmatpush1.bf16.msra.mxu0 0
        %533 = vmatprep.subr.bf16.mxu0 0
        %534 = vmatpush1.bf16.msra.mxu0 0
        %535 = vmatprep.subr.bf16.mxu0 0
        %536 = vmatpush1.bf16.msra.mxu0 0
        %537 = vmatprep.subr.bf16.mxu0 0
        %538 = vmatpush1.bf16.msra.mxu0 0
        %539 = vmatprep.subr.bf16.mxu0 0
        %540 = vmatpush1.bf16.msra.mxu0 0
        %541 = vmatprep.subr.bf16.mxu0 0
        %542 = vmatpush1.bf16.msra.mxu0 0
        %543 = vmatprep.subr.bf16.mxu0 0
        %544 = vmatpush1.bf16.msra.mxu0 0
        %545 = vmatprep.subr.bf16.mxu0 0
        %546 = vmatpush1.bf16.msra.mxu0 0
        %547 = vmatprep.subr.bf16.mxu0 0
        %548 = vmatpush1.bf16.msra.mxu0 0
        %549 = vmatprep.subr.bf16.mxu0 0
        %550 = vmatpush1.bf16.msra.mxu0 0
        %551 = vmatprep.subr.bf16.mxu0 0
        %552 = vmatpush1.bf16.msra.mxu0 0
        %553 = vmatprep.subr.bf16.mxu0 0
        %554 = vmatpush1.bf16.msra.mxu0 0
        %555 = vmatprep.subr.bf16.mxu0 0
        %556 = vmatpush1.bf16.msra.mxu0 0
        %557 = vmatprep.subr.bf16.mxu0 0
        %558 = vmatpush1.bf16.msra.mxu0 0
        %559 = vmatprep.mubr.bf16.mxu0 0
        %560 = vmatmul.mubr.bf16.gmra.mrb[0].mxu0 %v476
        %v561 = vpop.f32.mrb[0].mxu0
        %v562 = vadd.f32 0.0, %v561
        %v563 = vpop.f32.mrb[0].mxu0
        %v564 = vpop.f32.mrb[0].mxu0
        %v565 = vadd.f32 0.0, %v564
        %v566 = vpop.f32.mrb[0].mxu0
        %567 = vmatprep.mubr.bf16.mxu0 0
        %568 = vmatmul.mubr.bf16.gmra.mrb[0].mxu0 %v479
        %v569 = vpop.f32.mrb[0].mxu0
        %v570 = vpop.f32.mrb[0].mxu0
        %v571 = vpop.f32.mrb[0].mxu0
        %v572 = vpop.f32.mrb[0].mxu0
        %573 = vmatprep.mubr.bf16.mxu0 0
        %574 = vmatmul.mubr.bf16.gmra.mrb[0].mxu0 %v482
        %v575 = vpop.f32.mrb[0].mxu0
        %v576 = vadd.f32 0.0, %v575
        %v577 = vpop.f32.mrb[0].mxu0
        %v578 = vpop.f32.mrb[0].mxu0
        %v579 = vadd.f32 0.0, %v578
        %v580 = vpop.f32.mrb[0].mxu0
        %581 = vmatprep.mubr.bf16.mxu0 0
        %582 = vmatmul.mubr.bf16.gmra.mrb[0].mxu0 %v485
        %v583 = vpop.f32.mrb[0].mxu0
        %v584 = vpop.f32.mrb[0].mxu0
        %v585 = vpop.f32.mrb[0].mxu0
        %v586 = vpop.f32.mrb[0].mxu0
        %587 = vmatprep.mubr.bf16.mxu0 0
        %588 = vmatmul.mubr.bf16.gmra.mrb[0].mxu0 %v488
        %v589 = vpop.f32.mrb[0].mxu0
        %v590 = vadd.f32 0.0, %v589
        %v591 = vpop.f32.mrb[0].mxu0
        %v592 = vpop.f32.mrb[0].mxu0
        %v593 = vadd.f32 0.0, %v592
        %v594 = vpop.f32.mrb[0].mxu0
        %595 = vmatprep.mubr.bf16.mxu0 0
        %596 = vmatmul.mubr.bf16.gmra.mrb[0].mxu0 %v491
        %v597 = vpop.f32.mrb[0].mxu0
        %v598 = vpop.f32.mrb[0].mxu0
        %v599 = vpop.f32.mrb[0].mxu0
        %v600 = vpop.f32.mrb[0].mxu0
        %601 = vmatprep.mubr.bf16.mxu0 0
        %602 = vmatmul.mubr.bf16.gmra.mrb[0].mxu0 %v494
        %v603 = vpop.f32.mrb[0].mxu0
        %v604 = vadd.f32 0.0, %v603
        %v605 = vpop.f32.mrb[0].mxu0
        %v606 = vpop.f32.mrb[0].mxu0
        %v607 = vadd.f32 0.0, %v606
        %v608 = vpop.f32.mrb[0].mxu0
        %609 = vmatprep.mubr.bf16.mxu0 0
        %610 = vmatmul.mubr.bf16.gmra.mrb[0].mxu0 %v497
        %v611 = vpop.f32.mrb[0].mxu0
        %v612 = vpop.f32.mrb[0].mxu0
        %v613 = vpop.f32.mrb[0].mxu0
        %v614 = vpop.f32.mrb[0].mxu0
        %615 = vmatprep.mubr.bf16.mxu0 0
        %616 = vmatmul.mubr.bf16.gmra.mrb[0].mxu0 %v500
        %v617 = vpop.f32.mrb[0].mxu0
        %v618 = vadd.f32 0.0, %v617
        %v619 = vpop.f32.mrb[0].mxu0
        %v620 = vpop.f32.mrb[0].mxu0
        %v621 = vadd.f32 0.0, %v620
        %v622 = vpop.f32.mrb[0].mxu0
        %623 = vmatprep.mubr.bf16.mxu0 0
        %624 = vmatmul.mubr.bf16.gmra.mrb[0].mxu0 %v503
        %v625 = vpop.f32.mrb[0].mxu0
        %v626 = vpop.f32.mrb[0].mxu0
        %v627 = vpop.f32.mrb[0].mxu0
        %v628 = vpop.f32.mrb[0].mxu0
        %629 = vmatprep.mubr.bf16.mxu0 0
        %630 = vmatmul.mubr.bf16.gmra.mrb[0].mxu0 %v506
        %v631 = vpop.f32.mrb[0].mxu0
        %v632 = vadd.f32 0.0, %v631
        %v633 = vpop.f32.mrb[0].mxu0
        %v634 = vpop.f32.mrb[0].mxu0
        %v635 = vadd.f32 0.0, %v634
        %v636 = vpop.f32.mrb[0].mxu0
        %637 = vmatprep.mubr.bf16.mxu0 0
        %638 = vmatmul.mubr.bf16.gmra.mrb[0].mxu0 %v509
        %v639 = vpop.f32.mrb[0].mxu0
        %v640 = vpop.f32.mrb[0].mxu0
        %v641 = vpop.f32.mrb[0].mxu0
        %v642 = vpop.f32.mrb[0].mxu0
        %643 = vmatprep.mubr.bf16.mxu0 0
        %644 = vmatmul.mubr.bf16.gmra.mrb[0].mxu0 %v512
        %v645 = vpop.f32.mrb[0].mxu0
        %v646 = vadd.f32 0.0, %v645
        %v647 = vpop.f32.mrb[0].mxu0
        %v648 = vpop.f32.mrb[0].mxu0
        %v649 = vadd.f32 0.0, %v648
        %v650 = vpop.f32.mrb[0].mxu0
        %651 = vmatprep.mubr.bf16.mxu0 0
        %652 = vmatmul.mubr.bf16.gmra.mrb[0].mxu0 %v515
        %v653 = vpop.f32.mrb[0].mxu0
        %v654 = vpop.f32.mrb[0].mxu0
        %v655 = vpop.f32.mrb[0].mxu0
        %v656 = vpop.f32.mrb[0].mxu0
        %657 = vmatprep.mubr.bf16.mxu0 0
        %658 = vmatmul.mubr.bf16.gmra.mrb[0].mxu0 %v518
        %v659 = vpop.f32.mrb[0].mxu0
        %v660 = vadd.f32 0.0, %v659
        %v661 = vpop.f32.mrb[0].mxu0
        %v662 = vpop.f32.mrb[0].mxu0
        %v663 = vadd.f32 0.0, %v662
        %v664 = vpop.f32.mrb[0].mxu0
        %665 = vmatprep.mubr.bf16.mxu0 0
        %666 = vmatmul.mubr.bf16.gmra.mrb[0].mxu0 %v521
        %v667 = vpop.f32.mrb[0].mxu0
        %v668 = vpop.f32.mrb[0].mxu0
        %v669 = vpop.f32.mrb[0].mxu0
        %v670 = vpop.f32.mrb[0].mxu0
        %671 = vdwg.mxu0
        %vm672 = vsmask.f32 256
        %v674 = vshrl.u32 %v450, 16
        %v676 = vrot.slane %v674, 7
        %v677 = vshrl.u32 %v451, 16
        %v679 = vrot.slane %v677, 7
        %v680 = vshll.u32 %v451, 16
        %v682 = vor.u32 %v679, %v680
        %v683 = vsel %vm672, %v676, %v682
        %v684 = vshrl.u32 %v452, 16
        %v686 = vrot.slane %v684, 7
        %v687 = vshll.u32 %v452, 16
        %v689 = vor.u32 %v686, %v687
        %v690 = vsel %vm672, %v679, %v689
        %v691 = vshrl.u32 %v453, 16
        %v693 = vrot.slane %v691, 7
        %v694 = vshll.u32 %v453, 16
        %v696 = vor.u32 %v693, %v694
        %v697 = vsel %vm672, %v686, %v696
        %v698 = vshrl.u32 %v454, 16
        %v700 = vrot.slane %v698, 7
        %v701 = vshll.u32 %v454, 16
        %v703 = vor.u32 %v700, %v701
        %v704 = vsel %vm672, %v693, %v703
        %v705 = vshrl.u32 %v455, 16
        %v707 = vrot.slane %v705, 7
        %v708 = vshll.u32 %v455, 16
        %v710 = vor.u32 %v707, %v708
        %v711 = vsel %vm672, %v700, %v710
        %v712 = vshrl.u32 %v456, 16
        %v714 = vrot.slane %v712, 7
        %v715 = vshll.u32 %v456, 16
        %v717 = vor.u32 %v714, %v715
        %v718 = vsel %vm672, %v707, %v717
        %v719 = vshrl.u32 %v457, 16
        %v721 = vrot.slane %v719, 7
        %v722 = vshll.u32 %v457, 16
        %v724 = vor.u32 %v721, %v722
        %v725 = vsel %vm672, %v714, %v724
        %v726 = vshrl.u32 %v458, 16
        %v728 = vrot.slane %v726, 7
        %v729 = vshll.u32 %v458, 16
        %v731 = vor.u32 %v728, %v729
        %v732 = vsel %vm672, %v721, %v731
        %v733 = vshrl.u32 %v459, 16
        %v735 = vrot.slane %v733, 7
        %v736 = vshll.u32 %v459, 16
        %v738 = vor.u32 %v735, %v736
        %v739 = vsel %vm672, %v728, %v738
        %v740 = vshrl.u32 %v460, 16
        %v742 = vrot.slane %v740, 7
        %v743 = vshll.u32 %v460, 16
        %v745 = vor.u32 %v742, %v743
        %v746 = vsel %vm672, %v735, %v745
        %v747 = vshrl.u32 %v461, 16
        %v749 = vrot.slane %v747, 7
        %v750 = vshll.u32 %v461, 16
        %v752 = vor.u32 %v749, %v750
        %v753 = vsel %vm672, %v742, %v752
        %v754 = vshrl.u32 %v462, 16
        %v756 = vrot.slane %v754, 7
        %v757 = vshll.u32 %v462, 16
        %v759 = vor.u32 %v756, %v757
        %v760 = vsel %vm672, %v749, %v759
        %v761 = vshrl.u32 %v463, 16
        %v763 = vrot.slane %v761, 7
        %v764 = vshll.u32 %v463, 16
        %v766 = vor.u32 %v763, %v764
        %v767 = vsel %vm672, %v756, %v766
        %v768 = vshrl.u32 %v464, 16
        %v770 = vrot.slane %v768, 7
        %v771 = vshll.u32 %v464, 16
        %v773 = vor.u32 %v770, %v771
        %v774 = vsel %vm672, %v763, %v773
        %v775 = vshrl.u32 %v465, 16
        %v777 = vrot.slane %v775, 7
        %v778 = vshll.u32 %v465, 16
        %v780 = vor.u32 %v777, %v778
        %v781 = vsel %vm672, %v770, %v780
        %v782 = vshrl.u32 %v466, 16
        %v784 = vrot.slane %v782, 7
        %v785 = vshll.u32 %v466, 16
        %v787 = vor.u32 %v784, %v785
        %v788 = vsel %vm672, %v777, %v787
        %v790 = vsel %vm278, %v683, 0
        %v793 = vsel %vm278, %v690, 0
        %v796 = vsel %vm278, %v697, 0
        %v799 = vsel %vm278, %v704, 0
        %v802 = vsel %vm278, %v711, 0
        %v805 = vsel %vm278, %v718, 0
        %v808 = vsel %vm278, %v725, 0
        %v811 = vsel %vm278, %v732, 0
        %v814 = vsel %vm278, %v739, 0
        %v817 = vsel %vm278, %v746, 0
        %v820 = vsel %vm278, %v753, 0
        %v823 = vsel %vm278, %v760, 0
        %v826 = vsel %vm278, %v767, 0
        %v829 = vsel %vm278, %v774, 0
        %v832 = vsel %vm278, %v781, 0
        %v835 = vsel %vm278, %v788, 0
        %v838 = vsel %vm523, %v472, 0
        %840 = vmatprep.subr.bf16.mxu0 0
        %841 = vmatpush1.bf16.msra.mxu0 %v838
        %842 = vmatprep.subr.bf16.mxu0 0
        %843 = vmatpush1.bf16.msra.mxu0 0
        %844 = vmatprep.subr.bf16.mxu0 0
        %845 = vmatpush1.bf16.msra.mxu0 0
        %846 = vmatprep.subr.bf16.mxu0 0
        %847 = vmatpush1.bf16.msra.mxu0 0
        %848 = vmatprep.subr.bf16.mxu0 0
        %849 = vmatpush1.bf16.msra.mxu0 0
        %850 = vmatprep.subr.bf16.mxu0 0
        %851 = vmatpush1.bf16.msra.mxu0 0
        %852 = vmatprep.subr.bf16.mxu0 0
        %853 = vmatpush1.bf16.msra.mxu0 0
        %854 = vmatprep.subr.bf16.mxu0 0
        %855 = vmatpush1.bf16.msra.mxu0 0
        %856 = vmatprep.subr.bf16.mxu0 0
        %857 = vmatpush1.bf16.msra.mxu0 0
        %858 = vmatprep.subr.bf16.mxu0 0
        %859 = vmatpush1.bf16.msra.mxu0 0
        %860 = vmatprep.subr.bf16.mxu0 0
        %861 = vmatpush1.bf16.msra.mxu0 0
        %862 = vmatprep.subr.bf16.mxu0 0
        %863 = vmatpush1.bf16.msra.mxu0 0
        %864 = vmatprep.subr.bf16.mxu0 0
        %865 = vmatpush1.bf16.msra.mxu0 0
        %866 = vmatprep.subr.bf16.mxu0 0
        %867 = vmatpush1.bf16.msra.mxu0 0
        %868 = vmatprep.subr.bf16.mxu0 0
        %869 = vmatpush1.bf16.msra.mxu0 0
        %870 = vmatprep.subr.bf16.mxu0 0
        %871 = vmatpush1.bf16.msra.mxu0 0
        %872 = vmatprep.mubr.bf16.mxu0 0
        %873 = vmatmul.mubr.bf16.gmra.mrb[0].mxu0 %v790
        %v874 = vpop.f32.mrb[0].mxu0
        %v875 = vadd.f32 %v562, %v874
        %v876 = vpop.f32.mrb[0].mxu0
        %v877 = vpop.f32.mrb[0].mxu0
        %v878 = vadd.f32 %v565, %v877
        %v879 = vpop.f32.mrb[0].mxu0
        %880 = vmatprep.mubr.bf16.mxu0 0
        %881 = vmatmul.mubr.bf16.gmra.mrb[0].mxu0 %v793
        %v882 = vpop.f32.mrb[0].mxu0
        %v883 = vpop.f32.mrb[0].mxu0
        %v884 = vpop.f32.mrb[0].mxu0
        %v885 = vpop.f32.mrb[0].mxu0
        %886 = vmatprep.mubr.bf16.mxu0 0
        %887 = vmatmul.mubr.bf16.gmra.mrb[0].mxu0 %v796
        %v888 = vpop.f32.mrb[0].mxu0
        %v889 = vadd.f32 %v576, %v888
        %v890 = vpop.f32.mrb[0].mxu0
        %v891 = vpop.f32.mrb[0].mxu0
        %v892 = vadd.f32 %v579, %v891
        %v893 = vpop.f32.mrb[0].mxu0
        %894 = vmatprep.mubr.bf16.mxu0 0
        %895 = vmatmul.mubr.bf16.gmra.mrb[0].mxu0 %v799
        %v896 = vpop.f32.mrb[0].mxu0
        %v897 = vpop.f32.mrb[0].mxu0
        %v898 = vpop.f32.mrb[0].mxu0
        %v899 = vpop.f32.mrb[0].mxu0
        %900 = vmatprep.mubr.bf16.mxu0 0
        %901 = vmatmul.mubr.bf16.gmra.mrb[0].mxu0 %v802
        %v902 = vpop.f32.mrb[0].mxu0
        %v903 = vadd.f32 %v590, %v902
        %v904 = vpop.f32.mrb[0].mxu0
        %v905 = vpop.f32.mrb[0].mxu0
        %v906 = vadd.f32 %v593, %v905
        %v907 = vpop.f32.mrb[0].mxu0
        %908 = vmatprep.mubr.bf16.mxu0 0
        %909 = vmatmul.mubr.bf16.gmra.mrb[0].mxu0 %v805
        %v910 = vpop.f32.mrb[0].mxu0
        %v911 = vpop.f32.mrb[0].mxu0
        %v912 = vpop.f32.mrb[0].mxu0
        %v913 = vpop.f32.mrb[0].mxu0
        %914 = vmatprep.mubr.bf16.mxu0 0
        %915 = vmatmul.mubr.bf16.gmra.mrb[0].mxu0 %v808
        %v916 = vpop.f32.mrb[0].mxu0
        %v917 = vadd.f32 %v604, %v916
        %v918 = vpop.f32.mrb[0].mxu0
        %v919 = vpop.f32.mrb[0].mxu0
        %v920 = vadd.f32 %v607, %v919
        %v921 = vpop.f32.mrb[0].mxu0
        %922 = vmatprep.mubr.bf16.mxu0 0
        %923 = vmatmul.mubr.bf16.gmra.mrb[0].mxu0 %v811
        %v924 = vpop.f32.mrb[0].mxu0
        %v925 = vpop.f32.mrb[0].mxu0
        %v926 = vpop.f32.mrb[0].mxu0
        %v927 = vpop.f32.mrb[0].mxu0
        %928 = vmatprep.mubr.bf16.mxu0 0
        %929 = vmatmul.mubr.bf16.gmra.mrb[0].mxu0 %v814
        %v930 = vpop.f32.mrb[0].mxu0
        %v931 = vadd.f32 %v618, %v930
        %v932 = vpop.f32.mrb[0].mxu0
        %v933 = vpop.f32.mrb[0].mxu0
        %v934 = vadd.f32 %v621, %v933
        %v935 = vpop.f32.mrb[0].mxu0
        %936 = vmatprep.mubr.bf16.mxu0 0
        %937 = vmatmul.mubr.bf16.gmra.mrb[0].mxu0 %v817
        %v938 = vpop.f32.mrb[0].mxu0
        %v939 = vpop.f32.mrb[0].mxu0
        %v940 = vpop.f32.mrb[0].mxu0
        %v941 = vpop.f32.mrb[0].mxu0
        %942 = vmatprep.mubr.bf16.mxu0 0
        %943 = vmatmul.mubr.bf16.gmra.mrb[0].mxu0 %v820
        %v944 = vpop.f32.mrb[0].mxu0
        %v945 = vadd.f32 %v632, %v944
        %v946 = vpop.f32.mrb[0].mxu0
        %v947 = vpop.f32.mrb[0].mxu0
        %v948 = vadd.f32 %v635, %v947
        %v949 = vpop.f32.mrb[0].mxu0
        %950 = vmatprep.mubr.bf16.mxu0 0
        %951 = vmatmul.mubr.bf16.gmra.mrb[0].mxu0 %v823
        %v952 = vpop.f32.mrb[0].mxu0
        %v953 = vpop.f32.mrb[0].mxu0
        %v954 = vpop.f32.mrb[0].mxu0
        %v955 = vpop.f32.mrb[0].mxu0
        %956 = vmatprep.mubr.bf16.mxu0 0
        %957 = vmatmul.mubr.bf16.gmra.mrb[0].mxu0 %v826
        %v958 = vpop.f32.mrb[0].mxu0
        %v959 = vadd.f32 %v646, %v958
        %v960 = vpop.f32.mrb[0].mxu0
        %v961 = vpop.f32.mrb[0].mxu0
        %v962 = vadd.f32 %v649, %v961
        %v963 = vpop.f32.mrb[0].mxu0
        %964 = vmatprep.mubr.bf16.mxu0 0
        %965 = vmatmul.mubr.bf16.gmra.mrb[0].mxu0 %v829
        %v966 = vpop.f32.mrb[0].mxu0
        %v967 = vpop.f32.mrb[0].mxu0
        %v968 = vpop.f32.mrb[0].mxu0
        %v969 = vpop.f32.mrb[0].mxu0
        %970 = vmatprep.mubr.bf16.mxu0 0
        %971 = vmatmul.mubr.bf16.gmra.mrb[0].mxu0 %v832
        %v972 = vpop.f32.mrb[0].mxu0
        %v973 = vadd.f32 %v660, %v972
        %v974 = vpop.f32.mrb[0].mxu0
        %v975 = vpop.f32.mrb[0].mxu0
        %v976 = vadd.f32 %v663, %v975
        %v977 = vpop.f32.mrb[0].mxu0
        %978 = vmatprep.mubr.bf16.mxu0 0
        %979 = vmatmul.mubr.bf16.gmra.mrb[0].mxu0 %v835
        %v980 = vpop.f32.mrb[0].mxu0
        %v981 = vpop.f32.mrb[0].mxu0
        %v982 = vpop.f32.mrb[0].mxu0
        %v983 = vpop.f32.mrb[0].mxu0
        %984 = vdwg.mxu0
        %s985 = scalar_lea.vmem %s1, 8
        %v986 = vld [vmem:[%s985] sm:$0xf]
        %vm987 = vsmask.f32 7424
        %v988 = vrot.slane %v680, 1
        %v989 = vor.u32 %v677, %v988
        %v990 = vrot.slane %v687, 1
        %v991 = vsel %vm987, %v989, %v990
        %v992 = vor.u32 %v684, %v990
        %v993 = vrot.slane %v694, 1
        %v994 = vsel %vm987, %v992, %v993
        %v995 = vor.u32 %v691, %v993
        %v996 = vrot.slane %v701, 1
        %v997 = vsel %vm987, %v995, %v996
        %v998 = vor.u32 %v698, %v996
        %v999 = vrot.slane %v708, 1
        %v1000 = vsel %vm987, %v998, %v999
        %v1001 = vor.u32 %v705, %v999
        %v1002 = vrot.slane %v715, 1
        %v1003 = vsel %vm987, %v1001, %v1002
        %v1004 = vor.u32 %v712, %v1002
        %v1005 = vrot.slane %v722, 1
        %v1006 = vsel %vm987, %v1004, %v1005
        %v1007 = vor.u32 %v719, %v1005
        %v1008 = vrot.slane %v729, 1
        %v1009 = vsel %vm987, %v1007, %v1008
        %v1010 = vor.u32 %v726, %v1008
        %v1011 = vrot.slane %v736, 1
        %v1012 = vsel %vm987, %v1010, %v1011
        %v1013 = vor.u32 %v733, %v1011
        %v1014 = vrot.slane %v743, 1
        %v1015 = vsel %vm987, %v1013, %v1014
        %v1016 = vor.u32 %v740, %v1014
        %v1017 = vrot.slane %v750, 1
        %v1018 = vsel %vm987, %v1016, %v1017
        %v1019 = vor.u32 %v747, %v1017
        %v1020 = vrot.slane %v757, 1
        %v1021 = vsel %vm987, %v1019, %v1020
        %v1022 = vor.u32 %v754, %v1020
        %v1023 = vrot.slane %v764, 1
        %v1024 = vsel %vm987, %v1022, %v1023
        %v1025 = vor.u32 %v761, %v1023
        %v1026 = vrot.slane %v771, 1
        %v1027 = vsel %vm987, %v1025, %v1026
        %v1028 = vor.u32 %v768, %v1026
        %v1029 = vrot.slane %v778, 1
        %v1030 = vsel %vm987, %v1028, %v1029
        %v1031 = vor.u32 %v775, %v1029
        %v1032 = vrot.slane %v785, 1
        %v1033 = vsel %vm987, %v1031, %v1032
        %v1034 = vor.u32 %v782, %v1032
        %v1036 = vshll.u32 %v467, 16
        %v1038 = vrot.slane %v1036, 1
        %v1039 = vsel %vm987, %v1034, %v1038
        %v1041 = vsel %vm278, %v991, 0
        %v1044 = vsel %vm278, %v994, 0
        %v1047 = vsel %vm278, %v997, 0
        %v1050 = vsel %vm278, %v1000, 0
        %v1053 = vsel %vm278, %v1003, 0
        %v1056 = vsel %vm278, %v1006, 0
        %v1059 = vsel %vm278, %v1009, 0
        %v1062 = vsel %vm278, %v1012, 0
        %v1065 = vsel %vm278, %v1015, 0
        %v1068 = vsel %vm278, %v1018, 0
        %v1071 = vsel %vm278, %v1021, 0
        %v1074 = vsel %vm278, %v1024, 0
        %v1077 = vsel %vm278, %v1027, 0
        %v1080 = vsel %vm278, %v1030, 0
        %v1083 = vsel %vm278, %v1033, 0
        %v1086 = vsel %vm278, %v1039, 0
        %v1089 = vsel %vm523, %v986, 0
        %1091 = vmatprep.subr.bf16.mxu0 0
        %1092 = vmatpush1.bf16.msra.mxu0 %v1089
        %1093 = vmatprep.subr.bf16.mxu0 0
        %1094 = vmatpush1.bf16.msra.mxu0 0
        %1095 = vmatprep.subr.bf16.mxu0 0
        %1096 = vmatpush1.bf16.msra.mxu0 0
        %1097 = vmatprep.subr.bf16.mxu0 0
        %1098 = vmatpush1.bf16.msra.mxu0 0
        %1099 = vmatprep.subr.bf16.mxu0 0
        %1100 = vmatpush1.bf16.msra.mxu0 0
        %1101 = vmatprep.subr.bf16.mxu0 0
        %1102 = vmatpush1.bf16.msra.mxu0 0
        %1103 = vmatprep.subr.bf16.mxu0 0
        %1104 = vmatpush1.bf16.msra.mxu0 0
        %1105 = vmatprep.subr.bf16.mxu0 0
        %1106 = vmatpush1.bf16.msra.mxu0 0
        %1107 = vmatprep.subr.bf16.mxu0 0
        %1108 = vmatpush1.bf16.msra.mxu0 0
        %1109 = vmatprep.subr.bf16.mxu0 0
        %1110 = vmatpush1.bf16.msra.mxu0 0
        %1111 = vmatprep.subr.bf16.mxu0 0
        %1112 = vmatpush1.bf16.msra.mxu0 0
        %1113 = vmatprep.subr.bf16.mxu0 0
        %1114 = vmatpush1.bf16.msra.mxu0 0
        %1115 = vmatprep.subr.bf16.mxu0 0
        %1116 = vmatpush1.bf16.msra.mxu0 0
        %1117 = vmatprep.subr.bf16.mxu0 0
        %1118 = vmatpush1.bf16.msra.mxu0 0
        %1119 = vmatprep.subr.bf16.mxu0 0
        %1120 = vmatpush1.bf16.msra.mxu0 0
        %1121 = vmatprep.subr.bf16.mxu0 0
        %1122 = vmatpush1.bf16.msra.mxu0 0
        %1123 = vmatprep.mubr.bf16.mxu0 0
        %1124 = vmatmul.mubr.bf16.gmra.mrb[0].mxu0 %v1041
        %v1125 = vpop.f32.mrb[0].mxu0
        %v1126 = vadd.f32 0.0, %v1125
        %v1127 = vpop.f32.mrb[0].mxu0
        %v1128 = vpop.f32.mrb[0].mxu0
        %v1129 = vadd.f32 0.0, %v1128
        %v1130 = vpop.f32.mrb[0].mxu0
        %1131 = vmatprep.mubr.bf16.mxu0 0
        %1132 = vmatmul.mubr.bf16.gmra.mrb[0].mxu0 %v1044
        %v1133 = vpop.f32.mrb[0].mxu0
        %v1134 = vpop.f32.mrb[0].mxu0
        %v1135 = vpop.f32.mrb[0].mxu0
        %v1136 = vpop.f32.mrb[0].mxu0
        %1137 = vmatprep.mubr.bf16.mxu0 0
        %1138 = vmatmul.mubr.bf16.gmra.mrb[0].mxu0 %v1047
        %v1139 = vpop.f32.mrb[0].mxu0
        %v1140 = vadd.f32 0.0, %v1139
        %v1141 = vpop.f32.mrb[0].mxu0
        %v1142 = vpop.f32.mrb[0].mxu0
        %v1143 = vadd.f32 0.0, %v1142
        %v1144 = vpop.f32.mrb[0].mxu0
        %1145 = vmatprep.mubr.bf16.mxu0 0
        %1146 = vmatmul.mubr.bf16.gmra.mrb[0].mxu0 %v1050
        %v1147 = vpop.f32.mrb[0].mxu0
        %v1148 = vpop.f32.mrb[0].mxu0
        %v1149 = vpop.f32.mrb[0].mxu0
        %v1150 = vpop.f32.mrb[0].mxu0
        %1151 = vmatprep.mubr.bf16.mxu0 0
        %1152 = vmatmul.mubr.bf16.gmra.mrb[0].mxu0 %v1053
        %v1153 = vpop.f32.mrb[0].mxu0
        %v1154 = vadd.f32 0.0, %v1153
        %v1155 = vpop.f32.mrb[0].mxu0
        %v1156 = vpop.f32.mrb[0].mxu0
        %v1157 = vadd.f32 0.0, %v1156
        %v1158 = vpop.f32.mrb[0].mxu0
        %1159 = vmatprep.mubr.bf16.mxu0 0
        %1160 = vmatmul.mubr.bf16.gmra.mrb[0].mxu0 %v1056
        %v1161 = vpop.f32.mrb[0].mxu0
        %v1162 = vpop.f32.mrb[0].mxu0
        %v1163 = vpop.f32.mrb[0].mxu0
        %v1164 = vpop.f32.mrb[0].mxu0
        %1165 = vmatprep.mubr.bf16.mxu0 0
        %1166 = vmatmul.mubr.bf16.gmra.mrb[0].mxu0 %v1059
        %v1167 = vpop.f32.mrb[0].mxu0
        %v1168 = vadd.f32 0.0, %v1167
        %v1169 = vpop.f32.mrb[0].mxu0
        %v1170 = vpop.f32.mrb[0].mxu0
        %v1171 = vadd.f32 0.0, %v1170
        %v1172 = vpop.f32.mrb[0].mxu0
        %1173 = vmatprep.mubr.bf16.mxu0 0
        %1174 = vmatmul.mubr.bf16.gmra.mrb[0].mxu0 %v1062
        %v1175 = vpop.f32.mrb[0].mxu0
        %v1176 = vpop.f32.mrb[0].mxu0
        %v1177 = vpop.f32.mrb[0].mxu0
        %v1178 = vpop.f32.mrb[0].mxu0
        %1179 = vmatprep.mubr.bf16.mxu0 0
        %1180 = vmatmul.mubr.bf16.gmra.mrb[0].mxu0 %v1065
        %v1181 = vpop.f32.mrb[0].mxu0
        %v1182 = vadd.f32 0.0, %v1181
        %v1183 = vpop.f32.mrb[0].mxu0
        %v1184 = vpop.f32.mrb[0].mxu0
        %v1185 = vadd.f32 0.0, %v1184
        %v1186 = vpop.f32.mrb[0].mxu0
        %1187 = vmatprep.mubr.bf16.mxu0 0
        %1188 = vmatmul.mubr.bf16.gmra.mrb[0].mxu0 %v1068
        %v1189 = vpop.f32.mrb[0].mxu0
        %v1190 = vpop.f32.mrb[0].mxu0
        %v1191 = vpop.f32.mrb[0].mxu0
        %v1192 = vpop.f32.mrb[0].mxu0
        %1193 = vmatprep.mubr.bf16.mxu0 0
        %1194 = vmatmul.mubr.bf16.gmra.mrb[0].mxu0 %v1071
        %v1195 = vpop.f32.mrb[0].mxu0
        %v1196 = vadd.f32 0.0, %v1195
        %v1197 = vpop.f32.mrb[0].mxu0
        %v1198 = vpop.f32.mrb[0].mxu0
        %v1199 = vadd.f32 0.0, %v1198
        %v1200 = vpop.f32.mrb[0].mxu0
        %1201 = vmatprep.mubr.bf16.mxu0 0
        %1202 = vmatmul.mubr.bf16.gmra.mrb[0].mxu0 %v1074
        %v1203 = vpop.f32.mrb[0].mxu0
        %v1204 = vpop.f32.mrb[0].mxu0
        %v1205 = vpop.f32.mrb[0].mxu0
        %v1206 = vpop.f32.mrb[0].mxu0
        %1207 = vmatprep.mubr.bf16.mxu0 0
        %1208 = vmatmul.mubr.bf16.gmra.mrb[0].mxu0 %v1077
        %v1209 = vpop.f32.mrb[0].mxu0
        %v1210 = vadd.f32 0.0, %v1209
        %v1211 = vpop.f32.mrb[0].mxu0
        %v1212 = vpop.f32.mrb[0].mxu0
        %v1213 = vadd.f32 0.0, %v1212
        %v1214 = vpop.f32.mrb[0].mxu0
        %1215 = vmatprep.mubr.bf16.mxu0 0
        %1216 = vmatmul.mubr.bf16.gmra.mrb[0].mxu0 %v1080
        %v1217 = vpop.f32.mrb[0].mxu0
        %v1218 = vpop.f32.mrb[0].mxu0
        %v1219 = vpop.f32.mrb[0].mxu0
        %v1220 = vpop.f32.mrb[0].mxu0
        %1221 = vmatprep.mubr.bf16.mxu0 0
        %1222 = vmatmul.mubr.bf16.gmra.mrb[0].mxu0 %v1083
        %v1223 = vpop.f32.mrb[0].mxu0
        %v1224 = vadd.f32 0.0, %v1223
        %v1225 = vpop.f32.mrb[0].mxu0
        %v1226 = vpop.f32.mrb[0].mxu0
        %v1227 = vadd.f32 0.0, %v1226
        %v1228 = vpop.f32.mrb[0].mxu0
        %1229 = vmatprep.mubr.bf16.mxu0 0
        %1230 = vmatmul.mubr.bf16.gmra.mrb[0].mxu0 %v1086
        %v1231 = vpop.f32.mrb[0].mxu0
        %v1232 = vpop.f32.mrb[0].mxu0
        %v1233 = vpop.f32.mrb[0].mxu0
        %v1234 = vpop.f32.mrb[0].mxu0
        %1235 = vdwg.mxu0
        %v1236 = vadd.f32 %v875, %v1126
        %v1237 = vadd.f32 %v878, %v1129
        %v1238 = vadd.f32 %v889, %v1140
        %v1239 = vadd.f32 %v892, %v1143
        %v1240 = vadd.f32 %v903, %v1154
        %v1241 = vadd.f32 %v906, %v1157
        %v1242 = vadd.f32 %v917, %v1168
        %v1243 = vadd.f32 %v920, %v1171
        %v1244 = vadd.f32 %v931, %v1182
        %v1245 = vadd.f32 %v934, %v1185
        %v1246 = vadd.f32 %v945, %v1196
        %v1247 = vadd.f32 %v948, %v1199
        %v1248 = vadd.f32 %v959, %v1210
        %v1249 = vadd.f32 %v962, %v1213
        %v1250 = vadd.f32 %v973, %v1224
        %v1251 = vadd.f32 %v976, %v1227
        %s1252 = scalar_lea.vmem %s1, 12
        %v1253 = vld [vmem:[%s1252] sm:$0xf]
        %v1254 = vshrl.u32 %v467, 16
        %v1256 = vrot.slane %v1254, 7
        %v1257 = vor.u32 %v1256, %v1036
        %v1258 = vsel %vm672, %v784, %v1257
        %v1260 = vshrl.u32 %v468, 16
        %v1262 = vrot.slane %v1260, 7
        %v1263 = vshll.u32 %v468, 16
        %v1265 = vor.u32 %v1262, %v1263
        %v1266 = vsel %vm672, %v1256, %v1265
        %v1268 = vsel %vm278, %v1258, 0
        %v1271 = vsel %vm278, %v1266, 0
        %v1274 = vsel %vm523, %v1253, 0
        %1276 = vmatprep.subr.bf16.mxu0 0
        %1277 = vmatpush1.bf16.msra.mxu0 %v1274
        %1278 = vmatprep.subr.bf16.mxu0 0
        %1279 = vmatpush1.bf16.msra.mxu0 0
        %1280 = vmatprep.subr.bf16.mxu0 0
        %1281 = vmatpush1.bf16.msra.mxu0 0
        %1282 = vmatprep.subr.bf16.mxu0 0
        %1283 = vmatpush1.bf16.msra.mxu0 0
        %1284 = vmatprep.subr.bf16.mxu0 0
        %1285 = vmatpush1.bf16.msra.mxu0 0
        %1286 = vmatprep.subr.bf16.mxu0 0
        %1287 = vmatpush1.bf16.msra.mxu0 0
        %1288 = vmatprep.subr.bf16.mxu0 0
        %1289 = vmatpush1.bf16.msra.mxu0 0
        %1290 = vmatprep.subr.bf16.mxu0 0
        %1291 = vmatpush1.bf16.msra.mxu0 0
        %1292 = vmatprep.subr.bf16.mxu0 0
        %1293 = vmatpush1.bf16.msra.mxu0 0
        %1294 = vmatprep.subr.bf16.mxu0 0
        %1295 = vmatpush1.bf16.msra.mxu0 0
        %1296 = vmatprep.subr.bf16.mxu0 0
        %1297 = vmatpush1.bf16.msra.mxu0 0
        %1298 = vmatprep.subr.bf16.mxu0 0
        %1299 = vmatpush1.bf16.msra.mxu0 0
        %1300 = vmatprep.subr.bf16.mxu0 0
        %1301 = vmatpush1.bf16.msra.mxu0 0
        %1302 = vmatprep.subr.bf16.mxu0 0
        %1303 = vmatpush1.bf16.msra.mxu0 0
        %1304 = vmatprep.subr.bf16.mxu0 0
        %1305 = vmatpush1.bf16.msra.mxu0 0
        %1306 = vmatprep.subr.bf16.mxu0 0
        %1307 = vmatpush1.bf16.msra.mxu0 0
        %1308 = vmatprep.mubr.bf16.mxu0 0
        %1309 = vmatmul.mubr.bf16.gmra.mrb[0].mxu0 %v796
        %v1310 = vpop.f32.mrb[0].mxu0
        %v1311 = vadd.f32 0.0, %v1310
        %v1312 = vpop.f32.mrb[0].mxu0
        %v1313 = vpop.f32.mrb[0].mxu0
        %v1314 = vadd.f32 0.0, %v1313
        %v1315 = vpop.f32.mrb[0].mxu0
        %1316 = vmatprep.mubr.bf16.mxu0 0
        %1317 = vmatmul.mubr.bf16.gmra.mrb[0].mxu0 %v799
        %v1318 = vpop.f32.mrb[0].mxu0
        %v1319 = vpop.f32.mrb[0].mxu0
        %v1320 = vpop.f32.mrb[0].mxu0
        %v1321 = vpop.f32.mrb[0].mxu0
        %1322 = vmatprep.mubr.bf16.mxu0 0
        %1323 = vmatmul.mubr.bf16.gmra.mrb[0].mxu0 %v802
        %v1324 = vpop.f32.mrb[0].mxu0
        %v1325 = vadd.f32 0.0, %v1324
        %v1326 = vpop.f32.mrb[0].mxu0
        %v1327 = vpop.f32.mrb[0].mxu0
        %v1328 = vadd.f32 0.0, %v1327
        %v1329 = vpop.f32.mrb[0].mxu0
        %1330 = vmatprep.mubr.bf16.mxu0 0
        %1331 = vmatmul.mubr.bf16.gmra.mrb[0].mxu0 %v805
        %v1332 = vpop.f32.mrb[0].mxu0
        %v1333 = vpop.f32.mrb[0].mxu0
        %v1334 = vpop.f32.mrb[0].mxu0
        %v1335 = vpop.f32.mrb[0].mxu0
        %1336 = vmatprep.mubr.bf16.mxu0 0
        %1337 = vmatmul.mubr.bf16.gmra.mrb[0].mxu0 %v808
        %v1338 = vpop.f32.mrb[0].mxu0
        %v1339 = vadd.f32 0.0, %v1338
        %v1340 = vpop.f32.mrb[0].mxu0
        %v1341 = vpop.f32.mrb[0].mxu0
        %v1342 = vadd.f32 0.0, %v1341
        %v1343 = vpop.f32.mrb[0].mxu0
        %1344 = vmatprep.mubr.bf16.mxu0 0
        %1345 = vmatmul.mubr.bf16.gmra.mrb[0].mxu0 %v811
        %v1346 = vpop.f32.mrb[0].mxu0
        %v1347 = vpop.f32.mrb[0].mxu0
        %v1348 = vpop.f32.mrb[0].mxu0
        %v1349 = vpop.f32.mrb[0].mxu0
        %1350 = vmatprep.mubr.bf16.mxu0 0
        %1351 = vmatmul.mubr.bf16.gmra.mrb[0].mxu0 %v814
        %v1352 = vpop.f32.mrb[0].mxu0
        %v1353 = vadd.f32 0.0, %v1352
        %v1354 = vpop.f32.mrb[0].mxu0
        %v1355 = vpop.f32.mrb[0].mxu0
        %v1356 = vadd.f32 0.0, %v1355
        %v1357 = vpop.f32.mrb[0].mxu0
        %1358 = vmatprep.mubr.bf16.mxu0 0
        %1359 = vmatmul.mubr.bf16.gmra.mrb[0].mxu0 %v817
        %v1360 = vpop.f32.mrb[0].mxu0
        %v1361 = vpop.f32.mrb[0].mxu0
        %v1362 = vpop.f32.mrb[0].mxu0
        %v1363 = vpop.f32.mrb[0].mxu0
        %1364 = vmatprep.mubr.bf16.mxu0 0
        %1365 = vmatmul.mubr.bf16.gmra.mrb[0].mxu0 %v820
        %v1366 = vpop.f32.mrb[0].mxu0
        %v1367 = vadd.f32 0.0, %v1366
        %v1368 = vpop.f32.mrb[0].mxu0
        %v1369 = vpop.f32.mrb[0].mxu0
        %v1370 = vadd.f32 0.0, %v1369
        %v1371 = vpop.f32.mrb[0].mxu0
        %1372 = vmatprep.mubr.bf16.mxu0 0
        %1373 = vmatmul.mubr.bf16.gmra.mrb[0].mxu0 %v823
        %v1374 = vpop.f32.mrb[0].mxu0
        %v1375 = vpop.f32.mrb[0].mxu0
        %v1376 = vpop.f32.mrb[0].mxu0
        %v1377 = vpop.f32.mrb[0].mxu0
        %1378 = vmatprep.mubr.bf16.mxu0 0
        %1379 = vmatmul.mubr.bf16.gmra.mrb[0].mxu0 %v826
        %v1380 = vpop.f32.mrb[0].mxu0
        %v1381 = vadd.f32 0.0, %v1380
        %v1382 = vpop.f32.mrb[0].mxu0
        %v1383 = vpop.f32.mrb[0].mxu0
        %v1384 = vadd.f32 0.0, %v1383
        %v1385 = vpop.f32.mrb[0].mxu0
        %1386 = vmatprep.mubr.bf16.mxu0 0
        %1387 = vmatmul.mubr.bf16.gmra.mrb[0].mxu0 %v829
        %v1388 = vpop.f32.mrb[0].mxu0
        %v1389 = vpop.f32.mrb[0].mxu0
        %v1390 = vpop.f32.mrb[0].mxu0
        %v1391 = vpop.f32.mrb[0].mxu0
        %1392 = vmatprep.mubr.bf16.mxu0 0
        %1393 = vmatmul.mubr.bf16.gmra.mrb[0].mxu0 %v832
        %v1394 = vpop.f32.mrb[0].mxu0
        %v1395 = vadd.f32 0.0, %v1394
        %v1396 = vpop.f32.mrb[0].mxu0
        %v1397 = vpop.f32.mrb[0].mxu0
        %v1398 = vadd.f32 0.0, %v1397
        %v1399 = vpop.f32.mrb[0].mxu0
        %1400 = vmatprep.mubr.bf16.mxu0 0
        %1401 = vmatmul.mubr.bf16.gmra.mrb[0].mxu0 %v835
        %v1402 = vpop.f32.mrb[0].mxu0
        %v1403 = vpop.f32.mrb[0].mxu0
        %v1404 = vpop.f32.mrb[0].mxu0
        %v1405 = vpop.f32.mrb[0].mxu0
        %1406 = vmatprep.mubr.bf16.mxu0 0
        %1407 = vmatmul.mubr.bf16.gmra.mrb[0].mxu0 %v1268
        %v1408 = vpop.f32.mrb[0].mxu0
        %v1409 = vadd.f32 0.0, %v1408
        %v1410 = vpop.f32.mrb[0].mxu0
        %v1411 = vpop.f32.mrb[0].mxu0
        %v1412 = vadd.f32 0.0, %v1411
        %v1413 = vpop.f32.mrb[0].mxu0
        %1414 = vmatprep.mubr.bf16.mxu0 0
        %1415 = vmatmul.mubr.bf16.gmra.mrb[0].mxu0 %v1271
        %v1416 = vpop.f32.mrb[0].mxu0
        %v1417 = vpop.f32.mrb[0].mxu0
        %v1418 = vpop.f32.mrb[0].mxu0
        %v1419 = vpop.f32.mrb[0].mxu0
        %1420 = vdwg.mxu0
        %v1421 = vadd.f32 %v1236, %v1311
        %v1422 = vadd.f32 %v1237, %v1314
        %v1423 = vadd.f32 %v1238, %v1325
        %v1424 = vadd.f32 %v1239, %v1328
        %v1425 = vadd.f32 %v1240, %v1339
        %v1426 = vadd.f32 %v1241, %v1342
        %v1427 = vadd.f32 %v1242, %v1353
        %v1428 = vadd.f32 %v1243, %v1356
        %v1429 = vadd.f32 %v1244, %v1367
        %v1430 = vadd.f32 %v1245, %v1370
        %v1431 = vadd.f32 %v1246, %v1381
        %v1432 = vadd.f32 %v1247, %v1384
        %v1433 = vadd.f32 %v1248, %v1395
        %v1434 = vadd.f32 %v1249, %v1398
        %v1435 = vadd.f32 %v1250, %v1409
        %v1436 = vadd.f32 %v1251, %v1412
        %s1437 = scalar_lea.vmem %s1, 16
        %v1438 = vld [vmem:[%s1437] sm:$0xf]
        %v1439 = vsel %vm278, %v467, 0
        %v1441 = vsel %vm278, %v468, 0
        %v1444 = vsel %vm523, %v1438, 0
        %1446 = vmatprep.subr.bf16.mxu0 0
        %1447 = vmatpush1.bf16.msra.mxu0 %v1444
        %1448 = vmatprep.subr.bf16.mxu0 0
        %1449 = vmatpush1.bf16.msra.mxu0 0
        %1450 = vmatprep.subr.bf16.mxu0 0
        %1451 = vmatpush1.bf16.msra.mxu0 0
        %1452 = vmatprep.subr.bf16.mxu0 0
        %1453 = vmatpush1.bf16.msra.mxu0 0
        %1454 = vmatprep.subr.bf16.mxu0 0
        %1455 = vmatpush1.bf16.msra.mxu0 0
        %1456 = vmatprep.subr.bf16.mxu0 0
        %1457 = vmatpush1.bf16.msra.mxu0 0
        %1458 = vmatprep.subr.bf16.mxu0 0
        %1459 = vmatpush1.bf16.msra.mxu0 0
        %1460 = vmatprep.subr.bf16.mxu0 0
        %1461 = vmatpush1.bf16.msra.mxu0 0
        %1462 = vmatprep.subr.bf16.mxu0 0
        %1463 = vmatpush1.bf16.msra.mxu0 0
        %1464 = vmatprep.subr.bf16.mxu0 0
        %1465 = vmatpush1.bf16.msra.mxu0 0
        %1466 = vmatprep.subr.bf16.mxu0 0
        %1467 = vmatpush1.bf16.msra.mxu0 0
        %1468 = vmatprep.subr.bf16.mxu0 0
        %1469 = vmatpush1.bf16.msra.mxu0 0
        %1470 = vmatprep.subr.bf16.mxu0 0
        %1471 = vmatpush1.bf16.msra.mxu0 0
        %1472 = vmatprep.subr.bf16.mxu0 0
        %1473 = vmatpush1.bf16.msra.mxu0 0
        %1474 = vmatprep.subr.bf16.mxu0 0
        %1475 = vmatpush1.bf16.msra.mxu0 0
        %1476 = vmatprep.subr.bf16.mxu0 0
        %1477 = vmatpush1.bf16.msra.mxu0 0
        %1478 = vmatprep.mubr.bf16.mxu0 0
        %1479 = vmatmul.mubr.bf16.gmra.mrb[0].mxu0 %v482
        %v1480 = vpop.f32.mrb[0].mxu0
        %v1481 = vadd.f32 0.0, %v1480
        %v1482 = vpop.f32.mrb[0].mxu0
        %v1483 = vpop.f32.mrb[0].mxu0
        %v1484 = vadd.f32 0.0, %v1483
        %v1485 = vpop.f32.mrb[0].mxu0
        %1486 = vmatprep.mubr.bf16.mxu0 0
        %1487 = vmatmul.mubr.bf16.gmra.mrb[0].mxu0 %v485
        %v1488 = vpop.f32.mrb[0].mxu0
        %v1489 = vpop.f32.mrb[0].mxu0
        %v1490 = vpop.f32.mrb[0].mxu0
        %v1491 = vpop.f32.mrb[0].mxu0
        %1492 = vmatprep.mubr.bf16.mxu0 0
        %1493 = vmatmul.mubr.bf16.gmra.mrb[0].mxu0 %v488
        %v1494 = vpop.f32.mrb[0].mxu0
        %v1495 = vadd.f32 0.0, %v1494
        %v1496 = vpop.f32.mrb[0].mxu0
        %v1497 = vpop.f32.mrb[0].mxu0
        %v1498 = vadd.f32 0.0, %v1497
        %v1499 = vpop.f32.mrb[0].mxu0
        %1500 = vmatprep.mubr.bf16.mxu0 0
        %1501 = vmatmul.mubr.bf16.gmra.mrb[0].mxu0 %v491
        %v1502 = vpop.f32.mrb[0].mxu0
        %v1503 = vpop.f32.mrb[0].mxu0
        %v1504 = vpop.f32.mrb[0].mxu0
        %v1505 = vpop.f32.mrb[0].mxu0
        %1506 = vmatprep.mubr.bf16.mxu0 0
        %1507 = vmatmul.mubr.bf16.gmra.mrb[0].mxu0 %v494
        %v1508 = vpop.f32.mrb[0].mxu0
        %v1509 = vadd.f32 0.0, %v1508
        %v1510 = vpop.f32.mrb[0].mxu0
        %v1511 = vpop.f32.mrb[0].mxu0
        %v1512 = vadd.f32 0.0, %v1511
        %v1513 = vpop.f32.mrb[0].mxu0
        %1514 = vmatprep.mubr.bf16.mxu0 0
        %1515 = vmatmul.mubr.bf16.gmra.mrb[0].mxu0 %v497
        %v1516 = vpop.f32.mrb[0].mxu0
        %v1517 = vpop.f32.mrb[0].mxu0
        %v1518 = vpop.f32.mrb[0].mxu0
        %v1519 = vpop.f32.mrb[0].mxu0
        %1520 = vmatprep.mubr.bf16.mxu0 0
        %1521 = vmatmul.mubr.bf16.gmra.mrb[0].mxu0 %v500
        %v1522 = vpop.f32.mrb[0].mxu0
        %v1523 = vadd.f32 0.0, %v1522
        %v1524 = vpop.f32.mrb[0].mxu0
        %v1525 = vpop.f32.mrb[0].mxu0
        %v1526 = vadd.f32 0.0, %v1525
        %v1527 = vpop.f32.mrb[0].mxu0
        %1528 = vmatprep.mubr.bf16.mxu0 0
        %1529 = vmatmul.mubr.bf16.gmra.mrb[0].mxu0 %v503
        %v1530 = vpop.f32.mrb[0].mxu0
        %v1531 = vpop.f32.mrb[0].mxu0
        %v1532 = vpop.f32.mrb[0].mxu0
        %v1533 = vpop.f32.mrb[0].mxu0
        %1534 = vmatprep.mubr.bf16.mxu0 0
        %1535 = vmatmul.mubr.bf16.gmra.mrb[0].mxu0 %v506
        %v1536 = vpop.f32.mrb[0].mxu0
        %v1537 = vadd.f32 0.0, %v1536
        %v1538 = vpop.f32.mrb[0].mxu0
        %v1539 = vpop.f32.mrb[0].mxu0
        %v1540 = vadd.f32 0.0, %v1539
        %v1541 = vpop.f32.mrb[0].mxu0
        %1542 = vmatprep.mubr.bf16.mxu0 0
        %1543 = vmatmul.mubr.bf16.gmra.mrb[0].mxu0 %v509
        %v1544 = vpop.f32.mrb[0].mxu0
        %v1545 = vpop.f32.mrb[0].mxu0
        %v1546 = vpop.f32.mrb[0].mxu0
        %v1547 = vpop.f32.mrb[0].mxu0
        %1548 = vmatprep.mubr.bf16.mxu0 0
        %1549 = vmatmul.mubr.bf16.gmra.mrb[0].mxu0 %v512
        %v1550 = vpop.f32.mrb[0].mxu0
        %v1551 = vadd.f32 0.0, %v1550
        %v1552 = vpop.f32.mrb[0].mxu0
        %v1553 = vpop.f32.mrb[0].mxu0
        %v1554 = vadd.f32 0.0, %v1553
        %v1555 = vpop.f32.mrb[0].mxu0
        %1556 = vmatprep.mubr.bf16.mxu0 0
        %1557 = vmatmul.mubr.bf16.gmra.mrb[0].mxu0 %v515
        %v1558 = vpop.f32.mrb[0].mxu0
        %v1559 = vpop.f32.mrb[0].mxu0
        %v1560 = vpop.f32.mrb[0].mxu0
        %v1561 = vpop.f32.mrb[0].mxu0
        %1562 = vmatprep.mubr.bf16.mxu0 0
        %1563 = vmatmul.mubr.bf16.gmra.mrb[0].mxu0 %v518
        %v1564 = vpop.f32.mrb[0].mxu0
        %v1565 = vadd.f32 0.0, %v1564
        %v1566 = vpop.f32.mrb[0].mxu0
        %v1567 = vpop.f32.mrb[0].mxu0
        %v1568 = vadd.f32 0.0, %v1567
        %v1569 = vpop.f32.mrb[0].mxu0
        %1570 = vmatprep.mubr.bf16.mxu0 0
        %1571 = vmatmul.mubr.bf16.gmra.mrb[0].mxu0 %v521
        %v1572 = vpop.f32.mrb[0].mxu0
        %v1573 = vpop.f32.mrb[0].mxu0
        %v1574 = vpop.f32.mrb[0].mxu0
        %v1575 = vpop.f32.mrb[0].mxu0
        %1576 = vmatprep.mubr.bf16.mxu0 0
        %1577 = vmatmul.mubr.bf16.gmra.mrb[0].mxu0 %v1439
        %v1578 = vpop.f32.mrb[0].mxu0
        %v1579 = vadd.f32 0.0, %v1578
        %v1580 = vpop.f32.mrb[0].mxu0
        %v1581 = vpop.f32.mrb[0].mxu0
        %v1582 = vadd.f32 0.0, %v1581
        %v1583 = vpop.f32.mrb[0].mxu0
        %1584 = vmatprep.mubr.bf16.mxu0 0
        %1585 = vmatmul.mubr.bf16.gmra.mrb[0].mxu0 %v1441
        %v1586 = vpop.f32.mrb[0].mxu0
        %v1587 = vpop.f32.mrb[0].mxu0
        %v1588 = vpop.f32.mrb[0].mxu0
        %v1589 = vpop.f32.mrb[0].mxu0
        %1590 = vdwg.mxu0
        %v1591 = vadd.f32 %v1421, %v1481
        %v1592 = vadd.f32 %v1422, %v1484
        %v1593 = vadd.f32 %v1423, %v1495
        %v1594 = vadd.f32 %v1424, %v1498
        %v1595 = vadd.f32 %v1425, %v1509
        %v1596 = vadd.f32 %v1426, %v1512
        %v1597 = vadd.f32 %v1427, %v1523
        %v1598 = vadd.f32 %v1428, %v1526
        %v1599 = vadd.f32 %v1429, %v1537
        %v1600 = vadd.f32 %v1430, %v1540
        %v1601 = vadd.f32 %v1431, %v1551
        %v1602 = vadd.f32 %v1432, %v1554
        %v1603 = vadd.f32 %v1433, %v1565
        %v1604 = vadd.f32 %v1434, %v1568
        %v1605 = vadd.f32 %v1435, %v1579
        %v1606 = vadd.f32 %v1436, %v1582
        %s1607 = scalar_lea.vmem %s1, 20
        %v1608 = vld [vmem:[%s1607] sm:$0xf]
        %v1609 = vor.u32 %v1254, %v1038
        %v1610 = vrot.slane %v1263, 1
        %v1611 = vsel %vm987, %v1609, %v1610
        %v1612 = vor.u32 %v1260, %v1610
        %v1614 = vshll.u32 %v469, 16
        %v1616 = vrot.slane %v1614, 1
        %v1617 = vsel %vm987, %v1612, %v1616
        %v1619 = vsel %vm278, %v1611, 0
        %v1622 = vsel %vm278, %v1617, 0
        %v1625 = vsel %vm523, %v1608, 0
        %1627 = vmatprep.subr.bf16.mxu0 0
        %1628 = vmatpush1.bf16.msra.mxu0 %v1625
        %1629 = vmatprep.subr.bf16.mxu0 0
        %1630 = vmatpush1.bf16.msra.mxu0 0
        %1631 = vmatprep.subr.bf16.mxu0 0
        %1632 = vmatpush1.bf16.msra.mxu0 0
        %1633 = vmatprep.subr.bf16.mxu0 0
        %1634 = vmatpush1.bf16.msra.mxu0 0
        %1635 = vmatprep.subr.bf16.mxu0 0
        %1636 = vmatpush1.bf16.msra.mxu0 0
        %1637 = vmatprep.subr.bf16.mxu0 0
        %1638 = vmatpush1.bf16.msra.mxu0 0
        %1639 = vmatprep.subr.bf16.mxu0 0
        %1640 = vmatpush1.bf16.msra.mxu0 0
        %1641 = vmatprep.subr.bf16.mxu0 0
        %1642 = vmatpush1.bf16.msra.mxu0 0
        %1643 = vmatprep.subr.bf16.mxu0 0
        %1644 = vmatpush1.bf16.msra.mxu0 0
        %1645 = vmatprep.subr.bf16.mxu0 0
        %1646 = vmatpush1.bf16.msra.mxu0 0
        %1647 = vmatprep.subr.bf16.mxu0 0
        %1648 = vmatpush1.bf16.msra.mxu0 0
        %1649 = vmatprep.subr.bf16.mxu0 0
        %1650 = vmatpush1.bf16.msra.mxu0 0
        %1651 = vmatprep.subr.bf16.mxu0 0
        %1652 = vmatpush1.bf16.msra.mxu0 0
        %1653 = vmatprep.subr.bf16.mxu0 0
        %1654 = vmatpush1.bf16.msra.mxu0 0
        %1655 = vmatprep.subr.bf16.mxu0 0
        %1656 = vmatpush1.bf16.msra.mxu0 0
        %1657 = vmatprep.subr.bf16.mxu0 0
        %1658 = vmatpush1.bf16.msra.mxu0 0
        %1659 = vmatprep.mubr.bf16.mxu0 0
        %1660 = vmatmul.mubr.bf16.gmra.mrb[0].mxu0 %v1047
        %v1661 = vpop.f32.mrb[0].mxu0
        %v1662 = vadd.f32 0.0, %v1661
        %v1663 = vpop.f32.mrb[0].mxu0
        %v1664 = vpop.f32.mrb[0].mxu0
        %v1665 = vadd.f32 0.0, %v1664
        %v1666 = vpop.f32.mrb[0].mxu0
        %1667 = vmatprep.mubr.bf16.mxu0 0
        %1668 = vmatmul.mubr.bf16.gmra.mrb[0].mxu0 %v1050
        %v1669 = vpop.f32.mrb[0].mxu0
        %v1670 = vpop.f32.mrb[0].mxu0
        %v1671 = vpop.f32.mrb[0].mxu0
        %v1672 = vpop.f32.mrb[0].mxu0
        %1673 = vmatprep.mubr.bf16.mxu0 0
        %1674 = vmatmul.mubr.bf16.gmra.mrb[0].mxu0 %v1053
        %v1675 = vpop.f32.mrb[0].mxu0
        %v1676 = vadd.f32 0.0, %v1675
        %v1677 = vpop.f32.mrb[0].mxu0
        %v1678 = vpop.f32.mrb[0].mxu0
        %v1679 = vadd.f32 0.0, %v1678
        %v1680 = vpop.f32.mrb[0].mxu0
        %1681 = vmatprep.mubr.bf16.mxu0 0
        %1682 = vmatmul.mubr.bf16.gmra.mrb[0].mxu0 %v1056
        %v1683 = vpop.f32.mrb[0].mxu0
        %v1684 = vpop.f32.mrb[0].mxu0
        %v1685 = vpop.f32.mrb[0].mxu0
        %v1686 = vpop.f32.mrb[0].mxu0
        %1687 = vmatprep.mubr.bf16.mxu0 0
        %1688 = vmatmul.mubr.bf16.gmra.mrb[0].mxu0 %v1059
        %v1689 = vpop.f32.mrb[0].mxu0
        %v1690 = vadd.f32 0.0, %v1689
        %v1691 = vpop.f32.mrb[0].mxu0
        %v1692 = vpop.f32.mrb[0].mxu0
        %v1693 = vadd.f32 0.0, %v1692
        %v1694 = vpop.f32.mrb[0].mxu0
        %1695 = vmatprep.mubr.bf16.mxu0 0
        %1696 = vmatmul.mubr.bf16.gmra.mrb[0].mxu0 %v1062
        %v1697 = vpop.f32.mrb[0].mxu0
        %v1698 = vpop.f32.mrb[0].mxu0
        %v1699 = vpop.f32.mrb[0].mxu0
        %v1700 = vpop.f32.mrb[0].mxu0
        %1701 = vmatprep.mubr.bf16.mxu0 0
        %1702 = vmatmul.mubr.bf16.gmra.mrb[0].mxu0 %v1065
        %v1703 = vpop.f32.mrb[0].mxu0
        %v1704 = vadd.f32 0.0, %v1703
        %v1705 = vpop.f32.mrb[0].mxu0
        %v1706 = vpop.f32.mrb[0].mxu0
        %v1707 = vadd.f32 0.0, %v1706
        %v1708 = vpop.f32.mrb[0].mxu0
        %1709 = vmatprep.mubr.bf16.mxu0 0
        %1710 = vmatmul.mubr.bf16.gmra.mrb[0].mxu0 %v1068
        %v1711 = vpop.f32.mrb[0].mxu0
        %v1712 = vpop.f32.mrb[0].mxu0
        %v1713 = vpop.f32.mrb[0].mxu0
        %v1714 = vpop.f32.mrb[0].mxu0
        %1715 = vmatprep.mubr.bf16.mxu0 0
        %1716 = vmatmul.mubr.bf16.gmra.mrb[0].mxu0 %v1071
        %v1717 = vpop.f32.mrb[0].mxu0
        %v1718 = vadd.f32 0.0, %v1717
        %v1719 = vpop.f32.mrb[0].mxu0
        %v1720 = vpop.f32.mrb[0].mxu0
        %v1721 = vadd.f32 0.0, %v1720
        %v1722 = vpop.f32.mrb[0].mxu0
        %1723 = vmatprep.mubr.bf16.mxu0 0
        %1724 = vmatmul.mubr.bf16.gmra.mrb[0].mxu0 %v1074
        %v1725 = vpop.f32.mrb[0].mxu0
        %v1726 = vpop.f32.mrb[0].mxu0
        %v1727 = vpop.f32.mrb[0].mxu0
        %v1728 = vpop.f32.mrb[0].mxu0
        %1729 = vmatprep.mubr.bf16.mxu0 0
        %1730 = vmatmul.mubr.bf16.gmra.mrb[0].mxu0 %v1077
        %v1731 = vpop.f32.mrb[0].mxu0
        %v1732 = vadd.f32 0.0, %v1731
        %v1733 = vpop.f32.mrb[0].mxu0
        %v1734 = vpop.f32.mrb[0].mxu0
        %v1735 = vadd.f32 0.0, %v1734
        %v1736 = vpop.f32.mrb[0].mxu0
        %1737 = vmatprep.mubr.bf16.mxu0 0
        %1738 = vmatmul.mubr.bf16.gmra.mrb[0].mxu0 %v1080
        %v1739 = vpop.f32.mrb[0].mxu0
        %v1740 = vpop.f32.mrb[0].mxu0
        %v1741 = vpop.f32.mrb[0].mxu0
        %v1742 = vpop.f32.mrb[0].mxu0
        %1743 = vmatprep.mubr.bf16.mxu0 0
        %1744 = vmatmul.mubr.bf16.gmra.mrb[0].mxu0 %v1083
        %v1745 = vpop.f32.mrb[0].mxu0
        %v1746 = vadd.f32 0.0, %v1745
        %v1747 = vpop.f32.mrb[0].mxu0
        %v1748 = vpop.f32.mrb[0].mxu0
        %v1749 = vadd.f32 0.0, %v1748
        %v1750 = vpop.f32.mrb[0].mxu0
        %1751 = vmatprep.mubr.bf16.mxu0 0
        %1752 = vmatmul.mubr.bf16.gmra.mrb[0].mxu0 %v1086
        %v1753 = vpop.f32.mrb[0].mxu0
        %v1754 = vpop.f32.mrb[0].mxu0
        %v1755 = vpop.f32.mrb[0].mxu0
        %v1756 = vpop.f32.mrb[0].mxu0
        %1757 = vmatprep.mubr.bf16.mxu0 0
        %1758 = vmatmul.mubr.bf16.gmra.mrb[0].mxu0 %v1619
        %v1759 = vpop.f32.mrb[0].mxu0
        %v1760 = vadd.f32 0.0, %v1759
        %v1761 = vpop.f32.mrb[0].mxu0
        %v1762 = vpop.f32.mrb[0].mxu0
        %v1763 = vadd.f32 0.0, %v1762
        %v1764 = vpop.f32.mrb[0].mxu0
        %1765 = vmatprep.mubr.bf16.mxu0 0
        %1766 = vmatmul.mubr.bf16.gmra.mrb[0].mxu0 %v1622
        %v1767 = vpop.f32.mrb[0].mxu0
        %v1768 = vpop.f32.mrb[0].mxu0
        %v1769 = vpop.f32.mrb[0].mxu0
        %v1770 = vpop.f32.mrb[0].mxu0
        %1771 = vdwg.mxu0
        %v1772 = vadd.f32 %v1591, %v1662
        %v1773 = vadd.f32 %v1592, %v1665
        %v1774 = vadd.f32 %v1593, %v1676
        %v1775 = vadd.f32 %v1594, %v1679
        %v1776 = vadd.f32 %v1595, %v1690
        %v1777 = vadd.f32 %v1596, %v1693
        %v1778 = vadd.f32 %v1597, %v1704
        %v1779 = vadd.f32 %v1598, %v1707
        %v1780 = vadd.f32 %v1599, %v1718
        %v1781 = vadd.f32 %v1600, %v1721
        %v1782 = vadd.f32 %v1601, %v1732
        %v1783 = vadd.f32 %v1602, %v1735
        %v1784 = vadd.f32 %v1603, %v1746
        %v1785 = vadd.f32 %v1604, %v1749
        %v1786 = vadd.f32 %v1605, %v1760
        %v1787 = vadd.f32 %v1606, %v1763
        %s1788 = scalar_lea.vmem %s1, 24
        %v1789 = vld [vmem:[%s1788] sm:$0xf]
        %v1790 = vshrl.u32 %v469, 16
        %v1792 = vrot.slane %v1790, 7
        %v1793 = vor.u32 %v1792, %v1614
        %v1794 = vsel %vm672, %v1262, %v1793
        %v1796 = vshrl.u32 %v470, 16
        %v1798 = vrot.slane %v1796, 7
        %v1799 = vshll.u32 %v470, 16
        %v1801 = vor.u32 %v1798, %v1799
        %v1802 = vsel %vm672, %v1792, %v1801
        %v1804 = vsel %vm278, %v1794, 0
        %v1807 = vsel %vm278, %v1802, 0
        %v1810 = vsel %vm523, %v1789, 0
        %1812 = vmatprep.subr.bf16.mxu0 0
        %1813 = vmatpush1.bf16.msra.mxu0 %v1810
        %1814 = vmatprep.subr.bf16.mxu0 0
        %1815 = vmatpush1.bf16.msra.mxu0 0
        %1816 = vmatprep.subr.bf16.mxu0 0
        %1817 = vmatpush1.bf16.msra.mxu0 0
        %1818 = vmatprep.subr.bf16.mxu0 0
        %1819 = vmatpush1.bf16.msra.mxu0 0
        %1820 = vmatprep.subr.bf16.mxu0 0
        %1821 = vmatpush1.bf16.msra.mxu0 0
        %1822 = vmatprep.subr.bf16.mxu0 0
        %1823 = vmatpush1.bf16.msra.mxu0 0
        %1824 = vmatprep.subr.bf16.mxu0 0
        %1825 = vmatpush1.bf16.msra.mxu0 0
        %1826 = vmatprep.subr.bf16.mxu0 0
        %1827 = vmatpush1.bf16.msra.mxu0 0
        %1828 = vmatprep.subr.bf16.mxu0 0
        %1829 = vmatpush1.bf16.msra.mxu0 0
        %1830 = vmatprep.subr.bf16.mxu0 0
        %1831 = vmatpush1.bf16.msra.mxu0 0
        %1832 = vmatprep.subr.bf16.mxu0 0
        %1833 = vmatpush1.bf16.msra.mxu0 0
        %1834 = vmatprep.subr.bf16.mxu0 0
        %1835 = vmatpush1.bf16.msra.mxu0 0
        %1836 = vmatprep.subr.bf16.mxu0 0
        %1837 = vmatpush1.bf16.msra.mxu0 0
        %1838 = vmatprep.subr.bf16.mxu0 0
        %1839 = vmatpush1.bf16.msra.mxu0 0
        %1840 = vmatprep.subr.bf16.mxu0 0
        %1841 = vmatpush1.bf16.msra.mxu0 0
        %1842 = vmatprep.subr.bf16.mxu0 0
        %1843 = vmatpush1.bf16.msra.mxu0 0
        %1844 = vmatprep.mubr.bf16.mxu0 0
        %1845 = vmatmul.mubr.bf16.gmra.mrb[0].mxu0 %v802
        %v1846 = vpop.f32.mrb[0].mxu0
        %v1847 = vadd.f32 0.0, %v1846
        %v1848 = vpop.f32.mrb[0].mxu0
        %v1849 = vpop.f32.mrb[0].mxu0
        %v1850 = vadd.f32 0.0, %v1849
        %v1851 = vpop.f32.mrb[0].mxu0
        %1852 = vmatprep.mubr.bf16.mxu0 0
        %1853 = vmatmul.mubr.bf16.gmra.mrb[0].mxu0 %v805
        %v1854 = vpop.f32.mrb[0].mxu0
        %v1855 = vpop.f32.mrb[0].mxu0
        %v1856 = vpop.f32.mrb[0].mxu0
        %v1857 = vpop.f32.mrb[0].mxu0
        %1858 = vmatprep.mubr.bf16.mxu0 0
        %1859 = vmatmul.mubr.bf16.gmra.mrb[0].mxu0 %v808
        %v1860 = vpop.f32.mrb[0].mxu0
        %v1861 = vadd.f32 0.0, %v1860
        %v1862 = vpop.f32.mrb[0].mxu0
        %v1863 = vpop.f32.mrb[0].mxu0
        %v1864 = vadd.f32 0.0, %v1863
        %v1865 = vpop.f32.mrb[0].mxu0
        %1866 = vmatprep.mubr.bf16.mxu0 0
        %1867 = vmatmul.mubr.bf16.gmra.mrb[0].mxu0 %v811
        %v1868 = vpop.f32.mrb[0].mxu0
        %v1869 = vpop.f32.mrb[0].mxu0
        %v1870 = vpop.f32.mrb[0].mxu0
        %v1871 = vpop.f32.mrb[0].mxu0
        %1872 = vmatprep.mubr.bf16.mxu0 0
        %1873 = vmatmul.mubr.bf16.gmra.mrb[0].mxu0 %v814
        %v1874 = vpop.f32.mrb[0].mxu0
        %v1875 = vadd.f32 0.0, %v1874
        %v1876 = vpop.f32.mrb[0].mxu0
        %v1877 = vpop.f32.mrb[0].mxu0
        %v1878 = vadd.f32 0.0, %v1877
        %v1879 = vpop.f32.mrb[0].mxu0
        %1880 = vmatprep.mubr.bf16.mxu0 0
        %1881 = vmatmul.mubr.bf16.gmra.mrb[0].mxu0 %v817
        %v1882 = vpop.f32.mrb[0].mxu0
        %v1883 = vpop.f32.mrb[0].mxu0
        %v1884 = vpop.f32.mrb[0].mxu0
        %v1885 = vpop.f32.mrb[0].mxu0
        %1886 = vmatprep.mubr.bf16.mxu0 0
        %1887 = vmatmul.mubr.bf16.gmra.mrb[0].mxu0 %v820
        %v1888 = vpop.f32.mrb[0].mxu0
        %v1889 = vadd.f32 0.0, %v1888
        %v1890 = vpop.f32.mrb[0].mxu0
        %v1891 = vpop.f32.mrb[0].mxu0
        %v1892 = vadd.f32 0.0, %v1891
        %v1893 = vpop.f32.mrb[0].mxu0
        %1894 = vmatprep.mubr.bf16.mxu0 0
        %1895 = vmatmul.mubr.bf16.gmra.mrb[0].mxu0 %v823
        %v1896 = vpop.f32.mrb[0].mxu0
        %v1897 = vpop.f32.mrb[0].mxu0
        %v1898 = vpop.f32.mrb[0].mxu0
        %v1899 = vpop.f32.mrb[0].mxu0
        %1900 = vmatprep.mubr.bf16.mxu0 0
        %1901 = vmatmul.mubr.bf16.gmra.mrb[0].mxu0 %v826
        %v1902 = vpop.f32.mrb[0].mxu0
        %v1903 = vadd.f32 0.0, %v1902
        %v1904 = vpop.f32.mrb[0].mxu0
        %v1905 = vpop.f32.mrb[0].mxu0
        %v1906 = vadd.f32 0.0, %v1905
        %v1907 = vpop.f32.mrb[0].mxu0
        %1908 = vmatprep.mubr.bf16.mxu0 0
        %1909 = vmatmul.mubr.bf16.gmra.mrb[0].mxu0 %v829
        %v1910 = vpop.f32.mrb[0].mxu0
        %v1911 = vpop.f32.mrb[0].mxu0
        %v1912 = vpop.f32.mrb[0].mxu0
        %v1913 = vpop.f32.mrb[0].mxu0
        %1914 = vmatprep.mubr.bf16.mxu0 0
        %1915 = vmatmul.mubr.bf16.gmra.mrb[0].mxu0 %v832
        %v1916 = vpop.f32.mrb[0].mxu0
        %v1917 = vadd.f32 0.0, %v1916
        %v1918 = vpop.f32.mrb[0].mxu0
        %v1919 = vpop.f32.mrb[0].mxu0
        %v1920 = vadd.f32 0.0, %v1919
        %v1921 = vpop.f32.mrb[0].mxu0
        %1922 = vmatprep.mubr.bf16.mxu0 0
        %1923 = vmatmul.mubr.bf16.gmra.mrb[0].mxu0 %v835
        %v1924 = vpop.f32.mrb[0].mxu0
        %v1925 = vpop.f32.mrb[0].mxu0
        %v1926 = vpop.f32.mrb[0].mxu0
        %v1927 = vpop.f32.mrb[0].mxu0
        %1928 = vmatprep.mubr.bf16.mxu0 0
        %1929 = vmatmul.mubr.bf16.gmra.mrb[0].mxu0 %v1268
        %v1930 = vpop.f32.mrb[0].mxu0
        %v1931 = vadd.f32 0.0, %v1930
        %v1932 = vpop.f32.mrb[0].mxu0
        %v1933 = vpop.f32.mrb[0].mxu0
        %v1934 = vadd.f32 0.0, %v1933
        %v1935 = vpop.f32.mrb[0].mxu0
        %1936 = vmatprep.mubr.bf16.mxu0 0
        %1937 = vmatmul.mubr.bf16.gmra.mrb[0].mxu0 %v1271
        %v1938 = vpop.f32.mrb[0].mxu0
        %v1939 = vpop.f32.mrb[0].mxu0
        %v1940 = vpop.f32.mrb[0].mxu0
        %v1941 = vpop.f32.mrb[0].mxu0
        %1942 = vmatprep.mubr.bf16.mxu0 0
        %1943 = vmatmul.mubr.bf16.gmra.mrb[0].mxu0 %v1804
        %v1944 = vpop.f32.mrb[0].mxu0
        %v1945 = vadd.f32 0.0, %v1944
        %v1946 = vpop.f32.mrb[0].mxu0
        %v1947 = vpop.f32.mrb[0].mxu0
        %v1948 = vadd.f32 0.0, %v1947
        %v1949 = vpop.f32.mrb[0].mxu0
        %1950 = vmatprep.mubr.bf16.mxu0 0
        %1951 = vmatmul.mubr.bf16.gmra.mrb[0].mxu0 %v1807
        %v1952 = vpop.f32.mrb[0].mxu0
        %v1953 = vpop.f32.mrb[0].mxu0
        %v1954 = vpop.f32.mrb[0].mxu0
        %v1955 = vpop.f32.mrb[0].mxu0
        %1956 = vdwg.mxu0
        %v1957 = vadd.f32 %v1772, %v1847
        %v1958 = vadd.f32 %v1773, %v1850
        %v1959 = vadd.f32 %v1774, %v1861
        %v1960 = vadd.f32 %v1775, %v1864
        %v1961 = vadd.f32 %v1776, %v1875
        %v1962 = vadd.f32 %v1777, %v1878
        %v1963 = vadd.f32 %v1778, %v1889
        %v1964 = vadd.f32 %v1779, %v1892
        %v1965 = vadd.f32 %v1780, %v1903
        %v1966 = vadd.f32 %v1781, %v1906
        %v1967 = vadd.f32 %v1782, %v1917
        %v1968 = vadd.f32 %v1783, %v1920
        %v1969 = vadd.f32 %v1784, %v1931
        %v1970 = vadd.f32 %v1785, %v1934
        %v1971 = vadd.f32 %v1786, %v1945
        %v1972 = vadd.f32 %v1787, %v1948
        %s1973 = scalar_lea.vmem %s1, 28
        %v1974 = vld [vmem:[%s1973] sm:$0xf]
        %v1975 = vsel %vm278, %v469, 0
        %v1977 = vsel %vm278, %v470, 0
        %v1980 = vsel %vm523, %v1974, 0
        %1982 = vmatprep.subr.bf16.mxu0 0
        %1983 = vmatpush1.bf16.msra.mxu0 %v1980
        %1984 = vmatprep.subr.bf16.mxu0 0
        %1985 = vmatpush1.bf16.msra.mxu0 0
        %1986 = vmatprep.subr.bf16.mxu0 0
        %1987 = vmatpush1.bf16.msra.mxu0 0
        %1988 = vmatprep.subr.bf16.mxu0 0
        %1989 = vmatpush1.bf16.msra.mxu0 0
        %1990 = vmatprep.subr.bf16.mxu0 0
        %1991 = vmatpush1.bf16.msra.mxu0 0
        %1992 = vmatprep.subr.bf16.mxu0 0
        %1993 = vmatpush1.bf16.msra.mxu0 0
        %1994 = vmatprep.subr.bf16.mxu0 0
        %1995 = vmatpush1.bf16.msra.mxu0 0
        %1996 = vmatprep.subr.bf16.mxu0 0
        %1997 = vmatpush1.bf16.msra.mxu0 0
        %1998 = vmatprep.subr.bf16.mxu0 0
        %1999 = vmatpush1.bf16.msra.mxu0 0
        %2000 = vmatprep.subr.bf16.mxu0 0
        %2001 = vmatpush1.bf16.msra.mxu0 0
        %2002 = vmatprep.subr.bf16.mxu0 0
        %2003 = vmatpush1.bf16.msra.mxu0 0
        %2004 = vmatprep.subr.bf16.mxu0 0
        %2005 = vmatpush1.bf16.msra.mxu0 0
        %2006 = vmatprep.subr.bf16.mxu0 0
        %2007 = vmatpush1.bf16.msra.mxu0 0
        %2008 = vmatprep.subr.bf16.mxu0 0
        %2009 = vmatpush1.bf16.msra.mxu0 0
        %2010 = vmatprep.subr.bf16.mxu0 0
        %2011 = vmatpush1.bf16.msra.mxu0 0
        %2012 = vmatprep.subr.bf16.mxu0 0
        %2013 = vmatpush1.bf16.msra.mxu0 0
        %2014 = vmatprep.mubr.bf16.mxu0 0
        %2015 = vmatmul.mubr.bf16.gmra.mrb[0].mxu0 %v488
        %v2016 = vpop.f32.mrb[0].mxu0
        %v2017 = vadd.f32 0.0, %v2016
        %v2018 = vpop.f32.mrb[0].mxu0
        %v2019 = vpop.f32.mrb[0].mxu0
        %v2020 = vadd.f32 0.0, %v2019
        %v2021 = vpop.f32.mrb[0].mxu0
        %2022 = vmatprep.mubr.bf16.mxu0 0
        %2023 = vmatmul.mubr.bf16.gmra.mrb[0].mxu0 %v491
        %v2024 = vpop.f32.mrb[0].mxu0
        %v2025 = vpop.f32.mrb[0].mxu0
        %v2026 = vpop.f32.mrb[0].mxu0
        %v2027 = vpop.f32.mrb[0].mxu0
        %2028 = vmatprep.mubr.bf16.mxu0 0
        %2029 = vmatmul.mubr.bf16.gmra.mrb[0].mxu0 %v494
        %v2030 = vpop.f32.mrb[0].mxu0
        %v2031 = vadd.f32 0.0, %v2030
        %v2032 = vpop.f32.mrb[0].mxu0
        %v2033 = vpop.f32.mrb[0].mxu0
        %v2034 = vadd.f32 0.0, %v2033
        %v2035 = vpop.f32.mrb[0].mxu0
        %2036 = vmatprep.mubr.bf16.mxu0 0
        %2037 = vmatmul.mubr.bf16.gmra.mrb[0].mxu0 %v497
        %v2038 = vpop.f32.mrb[0].mxu0
        %v2039 = vpop.f32.mrb[0].mxu0
        %v2040 = vpop.f32.mrb[0].mxu0
        %v2041 = vpop.f32.mrb[0].mxu0
        %2042 = vmatprep.mubr.bf16.mxu0 0
        %2043 = vmatmul.mubr.bf16.gmra.mrb[0].mxu0 %v500
        %v2044 = vpop.f32.mrb[0].mxu0
        %v2045 = vadd.f32 0.0, %v2044
        %v2046 = vpop.f32.mrb[0].mxu0
        %v2047 = vpop.f32.mrb[0].mxu0
        %v2048 = vadd.f32 0.0, %v2047
        %v2049 = vpop.f32.mrb[0].mxu0
        %2050 = vmatprep.mubr.bf16.mxu0 0
        %2051 = vmatmul.mubr.bf16.gmra.mrb[0].mxu0 %v503
        %v2052 = vpop.f32.mrb[0].mxu0
        %v2053 = vpop.f32.mrb[0].mxu0
        %v2054 = vpop.f32.mrb[0].mxu0
        %v2055 = vpop.f32.mrb[0].mxu0
        %2056 = vmatprep.mubr.bf16.mxu0 0
        %2057 = vmatmul.mubr.bf16.gmra.mrb[0].mxu0 %v506
        %v2058 = vpop.f32.mrb[0].mxu0
        %v2059 = vadd.f32 0.0, %v2058
        %v2060 = vpop.f32.mrb[0].mxu0
        %v2061 = vpop.f32.mrb[0].mxu0
        %v2062 = vadd.f32 0.0, %v2061
        %v2063 = vpop.f32.mrb[0].mxu0
        %2064 = vmatprep.mubr.bf16.mxu0 0
        %2065 = vmatmul.mubr.bf16.gmra.mrb[0].mxu0 %v509
        %v2066 = vpop.f32.mrb[0].mxu0
        %v2067 = vpop.f32.mrb[0].mxu0
        %v2068 = vpop.f32.mrb[0].mxu0
        %v2069 = vpop.f32.mrb[0].mxu0
        %2070 = vmatprep.mubr.bf16.mxu0 0
        %2071 = vmatmul.mubr.bf16.gmra.mrb[0].mxu0 %v512
        %v2072 = vpop.f32.mrb[0].mxu0
        %v2073 = vadd.f32 0.0, %v2072
        %v2074 = vpop.f32.mrb[0].mxu0
        %v2075 = vpop.f32.mrb[0].mxu0
        %v2076 = vadd.f32 0.0, %v2075
        %v2077 = vpop.f32.mrb[0].mxu0
        %2078 = vmatprep.mubr.bf16.mxu0 0
        %2079 = vmatmul.mubr.bf16.gmra.mrb[0].mxu0 %v515
        %v2080 = vpop.f32.mrb[0].mxu0
        %v2081 = vpop.f32.mrb[0].mxu0
        %v2082 = vpop.f32.mrb[0].mxu0
        %v2083 = vpop.f32.mrb[0].mxu0
        %2084 = vmatprep.mubr.bf16.mxu0 0
        %2085 = vmatmul.mubr.bf16.gmra.mrb[0].mxu0 %v518
        %v2086 = vpop.f32.mrb[0].mxu0
        %v2087 = vadd.f32 0.0, %v2086
        %v2088 = vpop.f32.mrb[0].mxu0
        %v2089 = vpop.f32.mrb[0].mxu0
        %v2090 = vadd.f32 0.0, %v2089
        %v2091 = vpop.f32.mrb[0].mxu0
        %2092 = vmatprep.mubr.bf16.mxu0 0
        %2093 = vmatmul.mubr.bf16.gmra.mrb[0].mxu0 %v521
        %v2094 = vpop.f32.mrb[0].mxu0
        %v2095 = vpop.f32.mrb[0].mxu0
        %v2096 = vpop.f32.mrb[0].mxu0
        %v2097 = vpop.f32.mrb[0].mxu0
        %2098 = vmatprep.mubr.bf16.mxu0 0
        %2099 = vmatmul.mubr.bf16.gmra.mrb[0].mxu0 %v1439
        %v2100 = vpop.f32.mrb[0].mxu0
        %v2101 = vadd.f32 0.0, %v2100
        %v2102 = vpop.f32.mrb[0].mxu0
        %v2103 = vpop.f32.mrb[0].mxu0
        %v2104 = vadd.f32 0.0, %v2103
        %v2105 = vpop.f32.mrb[0].mxu0
        %2106 = vmatprep.mubr.bf16.mxu0 0
        %2107 = vmatmul.mubr.bf16.gmra.mrb[0].mxu0 %v1441
        %v2108 = vpop.f32.mrb[0].mxu0
        %v2109 = vpop.f32.mrb[0].mxu0
        %v2110 = vpop.f32.mrb[0].mxu0
        %v2111 = vpop.f32.mrb[0].mxu0
        %2112 = vmatprep.mubr.bf16.mxu0 0
        %2113 = vmatmul.mubr.bf16.gmra.mrb[0].mxu0 %v1975
        %v2114 = vpop.f32.mrb[0].mxu0
        %v2115 = vadd.f32 0.0, %v2114
        %v2116 = vpop.f32.mrb[0].mxu0
        %v2117 = vpop.f32.mrb[0].mxu0
        %v2118 = vadd.f32 0.0, %v2117
        %v2119 = vpop.f32.mrb[0].mxu0
        %2120 = vmatprep.mubr.bf16.mxu0 0
        %2121 = vmatmul.mubr.bf16.gmra.mrb[0].mxu0 %v1977
        %v2122 = vpop.f32.mrb[0].mxu0
        %v2123 = vpop.f32.mrb[0].mxu0
        %v2124 = vpop.f32.mrb[0].mxu0
        %v2125 = vpop.f32.mrb[0].mxu0
        %2126 = vdwg.mxu0
        %v2127 = vadd.f32 %v1957, %v2017
        %v2128 = vadd.f32 %v1958, %v2020
        %v2129 = vadd.f32 %v1959, %v2031
        %v2130 = vadd.f32 %v1960, %v2034
        %v2131 = vadd.f32 %v1961, %v2045
        %v2132 = vadd.f32 %v1962, %v2048
        %v2133 = vadd.f32 %v1963, %v2059
        %v2134 = vadd.f32 %v1964, %v2062
        %v2135 = vadd.f32 %v1965, %v2073
        %v2136 = vadd.f32 %v1966, %v2076
        %v2137 = vadd.f32 %v1967, %v2087
        %v2138 = vadd.f32 %v1968, %v2090
        %v2139 = vadd.f32 %v1969, %v2101
        %v2140 = vadd.f32 %v1970, %v2104
        %v2141 = vadd.f32 %v1971, %v2115
        %v2142 = vadd.f32 %v1972, %v2118
        %s2143 = scalar_lea.vmem %s1, 32
        %v2144 = vld [vmem:[%s2143] sm:$0xf]
        %v2145 = vor.u32 %v1790, %v1616
        %v2146 = vrot.slane %v1799, 1
        %v2147 = vsel %vm987, %v2145, %v2146
        %v2148 = vor.u32 %v1796, %v2146
        %v2150 = vshll.u32 %v471, 16
        %v2152 = vrot.slane %v2150, 1
        %v2153 = vsel %vm987, %v2148, %v2152
        %v2155 = vsel %vm278, %v2147, 0
        %v2158 = vsel %vm278, %v2153, 0
        %v2161 = vsel %vm523, %v2144, 0
        %2163 = vmatprep.subr.bf16.mxu0 0
        %2164 = vmatpush1.bf16.msra.mxu0 %v2161
        %2165 = vmatprep.subr.bf16.mxu0 0
        %2166 = vmatpush1.bf16.msra.mxu0 0
        %2167 = vmatprep.subr.bf16.mxu0 0
        %2168 = vmatpush1.bf16.msra.mxu0 0
        %2169 = vmatprep.subr.bf16.mxu0 0
        %2170 = vmatpush1.bf16.msra.mxu0 0
        %2171 = vmatprep.subr.bf16.mxu0 0
        %2172 = vmatpush1.bf16.msra.mxu0 0
        %2173 = vmatprep.subr.bf16.mxu0 0
        %2174 = vmatpush1.bf16.msra.mxu0 0
        %2175 = vmatprep.subr.bf16.mxu0 0
        %2176 = vmatpush1.bf16.msra.mxu0 0
        %2177 = vmatprep.subr.bf16.mxu0 0
        %2178 = vmatpush1.bf16.msra.mxu0 0
        %2179 = vmatprep.subr.bf16.mxu0 0
        %2180 = vmatpush1.bf16.msra.mxu0 0
        %2181 = vmatprep.subr.bf16.mxu0 0
        %2182 = vmatpush1.bf16.msra.mxu0 0
        %2183 = vmatprep.subr.bf16.mxu0 0
        %2184 = vmatpush1.bf16.msra.mxu0 0
        %2185 = vmatprep.subr.bf16.mxu0 0
        %2186 = vmatpush1.bf16.msra.mxu0 0
        %2187 = vmatprep.subr.bf16.mxu0 0
        %2188 = vmatpush1.bf16.msra.mxu0 0
        %2189 = vmatprep.subr.bf16.mxu0 0
        %2190 = vmatpush1.bf16.msra.mxu0 0
        %2191 = vmatprep.subr.bf16.mxu0 0
        %2192 = vmatpush1.bf16.msra.mxu0 0
        %2193 = vmatprep.subr.bf16.mxu0 0
        %2194 = vmatpush1.bf16.msra.mxu0 0
        %2195 = vmatprep.mubr.bf16.mxu0 0
        %2196 = vmatmul.mubr.bf16.gmra.mrb[0].mxu0 %v1053
        %v2197 = vpop.f32.mrb[0].mxu0
        %v2198 = vadd.f32 0.0, %v2197
        %v2199 = vpop.f32.mrb[0].mxu0
        %v2200 = vpop.f32.mrb[0].mxu0
        %v2201 = vadd.f32 0.0, %v2200
        %v2202 = vpop.f32.mrb[0].mxu0
        %2203 = vmatprep.mubr.bf16.mxu0 0
        %2204 = vmatmul.mubr.bf16.gmra.mrb[0].mxu0 %v1056
        %v2205 = vpop.f32.mrb[0].mxu0
        %v2206 = vpop.f32.mrb[0].mxu0
        %v2207 = vpop.f32.mrb[0].mxu0
        %v2208 = vpop.f32.mrb[0].mxu0
        %2209 = vmatprep.mubr.bf16.mxu0 0
        %2210 = vmatmul.mubr.bf16.gmra.mrb[0].mxu0 %v1059
        %v2211 = vpop.f32.mrb[0].mxu0
        %v2212 = vadd.f32 0.0, %v2211
        %v2213 = vpop.f32.mrb[0].mxu0
        %v2214 = vpop.f32.mrb[0].mxu0
        %v2215 = vadd.f32 0.0, %v2214
        %v2216 = vpop.f32.mrb[0].mxu0
        %2217 = vmatprep.mubr.bf16.mxu0 0
        %2218 = vmatmul.mubr.bf16.gmra.mrb[0].mxu0 %v1062
        %v2219 = vpop.f32.mrb[0].mxu0
        %v2220 = vpop.f32.mrb[0].mxu0
        %v2221 = vpop.f32.mrb[0].mxu0
        %v2222 = vpop.f32.mrb[0].mxu0
        %2223 = vmatprep.mubr.bf16.mxu0 0
        %2224 = vmatmul.mubr.bf16.gmra.mrb[0].mxu0 %v1065
        %v2225 = vpop.f32.mrb[0].mxu0
        %v2226 = vadd.f32 0.0, %v2225
        %v2227 = vpop.f32.mrb[0].mxu0
        %v2228 = vpop.f32.mrb[0].mxu0
        %v2229 = vadd.f32 0.0, %v2228
        %v2230 = vpop.f32.mrb[0].mxu0
        %2231 = vmatprep.mubr.bf16.mxu0 0
        %2232 = vmatmul.mubr.bf16.gmra.mrb[0].mxu0 %v1068
        %v2233 = vpop.f32.mrb[0].mxu0
        %v2234 = vpop.f32.mrb[0].mxu0
        %v2235 = vpop.f32.mrb[0].mxu0
        %v2236 = vpop.f32.mrb[0].mxu0
        %2237 = vmatprep.mubr.bf16.mxu0 0
        %2238 = vmatmul.mubr.bf16.gmra.mrb[0].mxu0 %v1071
        %v2239 = vpop.f32.mrb[0].mxu0
        %v2240 = vadd.f32 0.0, %v2239
        %v2241 = vpop.f32.mrb[0].mxu0
        %v2242 = vpop.f32.mrb[0].mxu0
        %v2243 = vadd.f32 0.0, %v2242
        %v2244 = vpop.f32.mrb[0].mxu0
        %2245 = vmatprep.mubr.bf16.mxu0 0
        %2246 = vmatmul.mubr.bf16.gmra.mrb[0].mxu0 %v1074
        %v2247 = vpop.f32.mrb[0].mxu0
        %v2248 = vpop.f32.mrb[0].mxu0
        %v2249 = vpop.f32.mrb[0].mxu0
        %v2250 = vpop.f32.mrb[0].mxu0
        %2251 = vmatprep.mubr.bf16.mxu0 0
        %2252 = vmatmul.mubr.bf16.gmra.mrb[0].mxu0 %v1077
        %v2253 = vpop.f32.mrb[0].mxu0
        %v2254 = vadd.f32 0.0, %v2253
        %v2255 = vpop.f32.mrb[0].mxu0
        %v2256 = vpop.f32.mrb[0].mxu0
        %v2257 = vadd.f32 0.0, %v2256
        %v2258 = vpop.f32.mrb[0].mxu0
        %2259 = vmatprep.mubr.bf16.mxu0 0
        %2260 = vmatmul.mubr.bf16.gmra.mrb[0].mxu0 %v1080
        %v2261 = vpop.f32.mrb[0].mxu0
        %v2262 = vpop.f32.mrb[0].mxu0
        %v2263 = vpop.f32.mrb[0].mxu0
        %v2264 = vpop.f32.mrb[0].mxu0
        %2265 = vmatprep.mubr.bf16.mxu0 0
        %2266 = vmatmul.mubr.bf16.gmra.mrb[0].mxu0 %v1083
        %v2267 = vpop.f32.mrb[0].mxu0
        %v2268 = vadd.f32 0.0, %v2267
        %v2269 = vpop.f32.mrb[0].mxu0
        %v2270 = vpop.f32.mrb[0].mxu0
        %v2271 = vadd.f32 0.0, %v2270
        %v2272 = vpop.f32.mrb[0].mxu0
        %2273 = vmatprep.mubr.bf16.mxu0 0
        %2274 = vmatmul.mubr.bf16.gmra.mrb[0].mxu0 %v1086
        %v2275 = vpop.f32.mrb[0].mxu0
        %v2276 = vpop.f32.mrb[0].mxu0
        %v2277 = vpop.f32.mrb[0].mxu0
        %v2278 = vpop.f32.mrb[0].mxu0
        %2279 = vmatprep.mubr.bf16.mxu0 0
        %2280 = vmatmul.mubr.bf16.gmra.mrb[0].mxu0 %v1619
        %v2281 = vpop.f32.mrb[0].mxu0
        %v2282 = vadd.f32 0.0, %v2281
        %v2283 = vpop.f32.mrb[0].mxu0
        %v2284 = vpop.f32.mrb[0].mxu0
        %v2285 = vadd.f32 0.0, %v2284
        %v2286 = vpop.f32.mrb[0].mxu0
        %2287 = vmatprep.mubr.bf16.mxu0 0
        %2288 = vmatmul.mubr.bf16.gmra.mrb[0].mxu0 %v1622
        %v2289 = vpop.f32.mrb[0].mxu0
        %v2290 = vpop.f32.mrb[0].mxu0
        %v2291 = vpop.f32.mrb[0].mxu0
        %v2292 = vpop.f32.mrb[0].mxu0
        %2293 = vmatprep.mubr.bf16.mxu0 0
        %2294 = vmatmul.mubr.bf16.gmra.mrb[0].mxu0 %v2155
        %v2295 = vpop.f32.mrb[0].mxu0
        %v2296 = vadd.f32 0.0, %v2295
        %v2297 = vpop.f32.mrb[0].mxu0
        %v2298 = vpop.f32.mrb[0].mxu0
        %v2299 = vadd.f32 0.0, %v2298
        %v2300 = vpop.f32.mrb[0].mxu0
        %2301 = vmatprep.mubr.bf16.mxu0 0
        %2302 = vmatmul.mubr.bf16.gmra.mrb[0].mxu0 %v2158
        %v2303 = vpop.f32.mrb[0].mxu0
        %v2304 = vpop.f32.mrb[0].mxu0
        %v2305 = vpop.f32.mrb[0].mxu0
        %v2306 = vpop.f32.mrb[0].mxu0
        %2307 = vdwg.mxu0
        %v2308 = vadd.f32 %v2127, %v2198
        %v2309 = vadd.f32 %v2128, %v2201
        %v2310 = vadd.f32 %v2129, %v2212
        %v2311 = vadd.f32 %v2130, %v2215
        %v2312 = vadd.f32 %v2131, %v2226
        %v2313 = vadd.f32 %v2132, %v2229
        %v2314 = vadd.f32 %v2133, %v2240
        %v2315 = vadd.f32 %v2134, %v2243
        %v2316 = vadd.f32 %v2135, %v2254
        %v2317 = vadd.f32 %v2136, %v2257
        %v2318 = vadd.f32 %v2137, %v2268
        %v2319 = vadd.f32 %v2138, %v2271
        %v2320 = vadd.f32 %v2139, %v2282
        %v2321 = vadd.f32 %v2140, %v2285
        %v2322 = vadd.f32 %v2141, %v2296
        %v2323 = vadd.f32 %v2142, %v2299
        %v2325 = vlaneseq
        %v2326 = vshrl.u32 %v2325, 7
        %v2327 = vsub.s32 0, %v2326
        %v2328 = vrot.slane %v449, %v2327
        %v2330 = vadd.f32 %v2308, %v2328
        %v2331 = vadd.f32 %v2309, %v2328
        %v2332 = vadd.f32 %v2310, %v2328
        %v2333 = vadd.f32 %v2311, %v2328
        %v2334 = vadd.f32 %v2312, %v2328
        %v2335 = vadd.f32 %v2313, %v2328
        %v2336 = vadd.f32 %v2314, %v2328
        %v2337 = vadd.f32 %v2315, %v2328
        %v2338 = vadd.f32 %v2316, %v2328
        %v2339 = vadd.f32 %v2317, %v2328
        %v2340 = vadd.f32 %v2318, %v2328
        %v2341 = vadd.f32 %v2319, %v2328
        %v2342 = vadd.f32 %v2320, %v2328
        %v2343 = vadd.f32 %v2321, %v2328
        %v2344 = vadd.f32 %v2322, %v2328
        %v2345 = vadd.f32 %v2323, %v2328
        %v2346 = vmax.f32 %v2330, 0.0
        %v2347 = vmax.f32 %v2331, 0.0
        %v2348 = vmax.f32 %v2332, 0.0
        %v2349 = vmax.f32 %v2333, 0.0
        %v2350 = vmax.f32 %v2334, 0.0
        %v2351 = vmax.f32 %v2335, 0.0
        %v2352 = vmax.f32 %v2336, 0.0
        %v2353 = vmax.f32 %v2337, 0.0
        %v2354 = vmax.f32 %v2338, 0.0
        %v2355 = vmax.f32 %v2339, 0.0
        %v2356 = vmax.f32 %v2340, 0.0
        %v2357 = vmax.f32 %v2341, 0.0
        %v2358 = vmax.f32 %v2342, 0.0
        %v2359 = vmax.f32 %v2343, 0.0
        %v2360 = vmax.f32 %v2344, 0.0
        %v2361 = vmax.f32 %v2345, 0.0
        %v2362 = vadd.f32 %v2346, %v2348
        %v2363 = vadd.f32 %v2362, %v2350
        %v2364 = vadd.f32 %v2363, %v2352
        %v2365 = vadd.f32 %v2364, %v2354
        %v2366 = vadd.f32 %v2365, %v2356
        %v2367 = vadd.f32 %v2366, %v2358
        %v2368 = vadd.f32 %v2367, %v2360
        %v2369 = vadd.f32 %v2347, %v2349
        %v2370 = vadd.f32 %v2369, %v2351
        %v2371 = vadd.f32 %v2370, %v2353
        %v2372 = vadd.f32 %v2371, %v2355
        %v2373 = vadd.f32 %v2372, %v2357
        %v2374 = vadd.f32 %v2373, %v2359
        %v2375 = vadd.f32 %v2374, %v2361
        %v2376 = vadd.f32 %v2368, %v2375
        %v2377 = vrot.slane %v2376, 4
        %v2378 = vadd.f32 %v2376, %v2377
        %v2379 = vrot.slane %v2378, 2
        %v2380 = vadd.f32 %v2378, %v2379
        %v2381 = vrot.slane %v2380, 1
        %v2382 = vadd.f32 %v2380, %v2381
        %v2383 = vadd.f32 %v2382, 0.0
        %2384 = vst [vmem:[%s271] sm:$0xff] %v2346
        %2385 = vst [vmem:[%s271 + $0x8] sm:$0xff] %v2347
        %2386 = vst [vmem:[%s271 + $0x10] sm:$0xff] %v2348
        %2387 = vst [vmem:[%s271 + $0x18] sm:$0xff] %v2349
        %2388 = vst [vmem:[%s271 + $0x20] sm:$0xff] %v2350
        %2389 = vst [vmem:[%s271 + $0x28] sm:$0xff] %v2351
        %2390 = vst [vmem:[%s271 + $0x30] sm:$0xff] %v2352
        %2391 = vst [vmem:[%s271 + $0x38] sm:$0xff] %v2353
        %2392 = vst [vmem:[%s271 + $0x40] sm:$0xff] %v2354
        %2393 = vst [vmem:[%s271 + $0x48] sm:$0xff] %v2355
        %2394 = vst [vmem:[%s271 + $0x50] sm:$0xff] %v2356
        %2395 = vst [vmem:[%s271 + $0x58] sm:$0xff] %v2357
        %2396 = vst [vmem:[%s271 + $0x60] sm:$0xff] %v2358
        %2397 = vst [vmem:[%s271 + $0x68] sm:$0xff] %v2359
        %2398 = vst [vmem:[%s271 + $0x70] sm:$0xff] %v2360
        %2399 = vst [vmem:[%s271 + $0x78] sm:$0xff] %v2361
        %s2400 = scalar_lea.vmem [#allocation2], 128
        %v2401 = vld [vmem:[%s2400 + $0x8] sm:$0xff]
        %v2402 = vld [vmem:[%s2400 + $0x10] sm:$0xff]
        %v2403 = vld [vmem:[%s2400 + $0x18] sm:$0xff]
        %v2404 = vld [vmem:[%s2400 + $0x20] sm:$0xff]
        %v2405 = vld [vmem:[%s2400 + $0x28] sm:$0xff]
        %v2406 = vld [vmem:[%s2400 + $0x30] sm:$0xff]
        %v2407 = vld [vmem:[%s2400 + $0x38] sm:$0xff]
        %v2408 = vld [vmem:[%s2400 + $0x40] sm:$0xff]
        %v2409 = vld [vmem:[%s2400 + $0x48] sm:$0xff]
        %v2410 = vld [vmem:[%s2400 + $0x50] sm:$0xff]
        %v2411 = vld [vmem:[%s2400 + $0x58] sm:$0xff]
        %v2412 = vld [vmem:[%s2400 + $0x60] sm:$0xff]
        %v2413 = vld [vmem:[%s2400 + $0x68] sm:$0xff]
        %v2414 = vld [vmem:[%s2400 + $0x70] sm:$0xff]
        %v2415 = vld [vmem:[%s2400 + $0x78] sm:$0xff]
        %v2416 = vld [vmem:[%s2400 + $0x80] sm:$0xff]
        %v2417 = vld [vmem:[%s2400 + $0x88] sm:$0xff]
        %v2418 = vld [vmem:[%s2400 + $0x90] sm:$0xff]
        %v2419 = vld [vmem:[%s2400 + $0x98] sm:$0xff]
        %v2420 = vld [vmem:[%s2400 + $0xa0] sm:$0xff]
        %v2421 = vld [vmem:[%s2400 + $0xa8] sm:$0xff]
        %v2422 = vld [vmem:[%s2400 + $0xb0] sm:$0xff]
        %v2423 = vld [vmem:[%s1] sm:$0xf]
        %v2424 = vld [vmem:[%s473] sm:$0xf]
        %v2426 = vsel %vm278, %v2402, 0
        %v2429 = vsel %vm278, %v2403, 0
        %v2432 = vsel %vm278, %v2404, 0
        %v2435 = vsel %vm278, %v2405, 0
        %v2438 = vsel %vm278, %v2406, 0
        %v2441 = vsel %vm278, %v2407, 0
        %v2444 = vsel %vm278, %v2408, 0
        %v2447 = vsel %vm278, %v2409, 0
        %v2450 = vsel %vm278, %v2410, 0
        %v2453 = vsel %vm278, %v2411, 0
        %v2456 = vsel %vm278, %v2412, 0
        %v2459 = vsel %vm278, %v2413, 0
        %v2462 = vsel %vm278, %v2414, 0
        %v2465 = vsel %vm278, %v2415, 0
        %v2468 = vsel %vm278, %v2416, 0
        %v2471 = vsel %vm278, %v2417, 0
        %v2474 = vsel %vm523, %v2424, 0
        %2476 = vmatprep.subr.bf16.mxu0 0
        %2477 = vmatpush1.bf16.msra.mxu0 %v2474
        %2478 = vmatprep.subr.bf16.mxu0 0
        %2479 = vmatpush1.bf16.msra.mxu0 0
        %2480 = vmatprep.subr.bf16.mxu0 0
        %2481 = vmatpush1.bf16.msra.mxu0 0
        %2482 = vmatprep.subr.bf16.mxu0 0
        %2483 = vmatpush1.bf16.msra.mxu0 0
        %2484 = vmatprep.subr.bf16.mxu0 0
        %2485 = vmatpush1.bf16.msra.mxu0 0
        %2486 = vmatprep.subr.bf16.mxu0 0
        %2487 = vmatpush1.bf16.msra.mxu0 0
        %2488 = vmatprep.subr.bf16.mxu0 0
        %2489 = vmatpush1.bf16.msra.mxu0 0
        %2490 = vmatprep.subr.bf16.mxu0 0
        %2491 = vmatpush1.bf16.msra.mxu0 0
        %2492 = vmatprep.subr.bf16.mxu0 0
        %2493 = vmatpush1.bf16.msra.mxu0 0
        %2494 = vmatprep.subr.bf16.mxu0 0
        %2495 = vmatpush1.bf16.msra.mxu0 0
        %2496 = vmatprep.subr.bf16.mxu0 0
        %2497 = vmatpush1.bf16.msra.mxu0 0
        %2498 = vmatprep.subr.bf16.mxu0 0
        %2499 = vmatpush1.bf16.msra.mxu0 0
        %2500 = vmatprep.subr.bf16.mxu0 0
        %2501 = vmatpush1.bf16.msra.mxu0 0
        %2502 = vmatprep.subr.bf16.mxu0 0
        %2503 = vmatpush1.bf16.msra.mxu0 0
        %2504 = vmatprep.subr.bf16.mxu0 0
        %2505 = vmatpush1.bf16.msra.mxu0 0
        %2506 = vmatprep.subr.bf16.mxu0 0
        %2507 = vmatpush1.bf16.msra.mxu0 0
        %2508 = vmatprep.mubr.bf16.mxu0 0
        %2509 = vmatmul.mubr.bf16.gmra.mrb[0].mxu0 %v2426
        %v2510 = vpop.f32.mrb[0].mxu0
        %v2511 = vadd.f32 0.0, %v2510
        %v2512 = vpop.f32.mrb[0].mxu0
        %v2513 = vpop.f32.mrb[0].mxu0
        %v2514 = vadd.f32 0.0, %v2513
        %v2515 = vpop.f32.mrb[0].mxu0
        %2516 = vmatprep.mubr.bf16.mxu0 0
        %2517 = vmatmul.mubr.bf16.gmra.mrb[0].mxu0 %v2429
        %v2518 = vpop.f32.mrb[0].mxu0
        %v2519 = vpop.f32.mrb[0].mxu0
        %v2520 = vpop.f32.mrb[0].mxu0
        %v2521 = vpop.f32.mrb[0].mxu0
        %2522 = vmatprep.mubr.bf16.mxu0 0
        %2523 = vmatmul.mubr.bf16.gmra.mrb[0].mxu0 %v2432
        %v2524 = vpop.f32.mrb[0].mxu0
        %v2525 = vadd.f32 0.0, %v2524
        %v2526 = vpop.f32.mrb[0].mxu0
        %v2527 = vpop.f32.mrb[0].mxu0
        %v2528 = vadd.f32 0.0, %v2527
        %v2529 = vpop.f32.mrb[0].mxu0
        %2530 = vmatprep.mubr.bf16.mxu0 0
        %2531 = vmatmul.mubr.bf16.gmra.mrb[0].mxu0 %v2435
        %v2532 = vpop.f32.mrb[0].mxu0
        %v2533 = vpop.f32.mrb[0].mxu0
        %v2534 = vpop.f32.mrb[0].mxu0
        %v2535 = vpop.f32.mrb[0].mxu0
        %2536 = vmatprep.mubr.bf16.mxu0 0
        %2537 = vmatmul.mubr.bf16.gmra.mrb[0].mxu0 %v2438
        %v2538 = vpop.f32.mrb[0].mxu0
        %v2539 = vadd.f32 0.0, %v2538
        %v2540 = vpop.f32.mrb[0].mxu0
        %v2541 = vpop.f32.mrb[0].mxu0
        %v2542 = vadd.f32 0.0, %v2541
        %v2543 = vpop.f32.mrb[0].mxu0
        %2544 = vmatprep.mubr.bf16.mxu0 0
        %2545 = vmatmul.mubr.bf16.gmra.mrb[0].mxu0 %v2441
        %v2546 = vpop.f32.mrb[0].mxu0
        %v2547 = vpop.f32.mrb[0].mxu0
        %v2548 = vpop.f32.mrb[0].mxu0
        %v2549 = vpop.f32.mrb[0].mxu0
        %2550 = vmatprep.mubr.bf16.mxu0 0
        %2551 = vmatmul.mubr.bf16.gmra.mrb[0].mxu0 %v2444
        %v2552 = vpop.f32.mrb[0].mxu0
        %v2553 = vadd.f32 0.0, %v2552
        %v2554 = vpop.f32.mrb[0].mxu0
        %v2555 = vpop.f32.mrb[0].mxu0
        %v2556 = vadd.f32 0.0, %v2555
        %v2557 = vpop.f32.mrb[0].mxu0
        %2558 = vmatprep.mubr.bf16.mxu0 0
        %2559 = vmatmul.mubr.bf16.gmra.mrb[0].mxu0 %v2447
        %v2560 = vpop.f32.mrb[0].mxu0
        %v2561 = vpop.f32.mrb[0].mxu0
        %v2562 = vpop.f32.mrb[0].mxu0
        %v2563 = vpop.f32.mrb[0].mxu0
        %2564 = vmatprep.mubr.bf16.mxu0 0
        %2565 = vmatmul.mubr.bf16.gmra.mrb[0].mxu0 %v2450
        %v2566 = vpop.f32.mrb[0].mxu0
        %v2567 = vadd.f32 0.0, %v2566
        %v2568 = vpop.f32.mrb[0].mxu0
        %v2569 = vpop.f32.mrb[0].mxu0
        %v2570 = vadd.f32 0.0, %v2569
        %v2571 = vpop.f32.mrb[0].mxu0
        %2572 = vmatprep.mubr.bf16.mxu0 0
        %2573 = vmatmul.mubr.bf16.gmra.mrb[0].mxu0 %v2453
        %v2574 = vpop.f32.mrb[0].mxu0
        %v2575 = vpop.f32.mrb[0].mxu0
        %v2576 = vpop.f32.mrb[0].mxu0
        %v2577 = vpop.f32.mrb[0].mxu0
        %2578 = vmatprep.mubr.bf16.mxu0 0
        %2579 = vmatmul.mubr.bf16.gmra.mrb[0].mxu0 %v2456
        %v2580 = vpop.f32.mrb[0].mxu0
        %v2581 = vadd.f32 0.0, %v2580
        %v2582 = vpop.f32.mrb[0].mxu0
        %v2583 = vpop.f32.mrb[0].mxu0
        %v2584 = vadd.f32 0.0, %v2583
        %v2585 = vpop.f32.mrb[0].mxu0
        %2586 = vmatprep.mubr.bf16.mxu0 0
        %2587 = vmatmul.mubr.bf16.gmra.mrb[0].mxu0 %v2459
        %v2588 = vpop.f32.mrb[0].mxu0
        %v2589 = vpop.f32.mrb[0].mxu0
        %v2590 = vpop.f32.mrb[0].mxu0
        %v2591 = vpop.f32.mrb[0].mxu0
        %2592 = vmatprep.mubr.bf16.mxu0 0
        %2593 = vmatmul.mubr.bf16.gmra.mrb[0].mxu0 %v2462
        %v2594 = vpop.f32.mrb[0].mxu0
        %v2595 = vadd.f32 0.0, %v2594
        %v2596 = vpop.f32.mrb[0].mxu0
        %v2597 = vpop.f32.mrb[0].mxu0
        %v2598 = vadd.f32 0.0, %v2597
        %v2599 = vpop.f32.mrb[0].mxu0
        %2600 = vmatprep.mubr.bf16.mxu0 0
        %2601 = vmatmul.mubr.bf16.gmra.mrb[0].mxu0 %v2465
        %v2602 = vpop.f32.mrb[0].mxu0
        %v2603 = vpop.f32.mrb[0].mxu0
        %v2604 = vpop.f32.mrb[0].mxu0
        %v2605 = vpop.f32.mrb[0].mxu0
        %2606 = vmatprep.mubr.bf16.mxu0 0
        %2607 = vmatmul.mubr.bf16.gmra.mrb[0].mxu0 %v2468
        %v2608 = vpop.f32.mrb[0].mxu0
        %v2609 = vadd.f32 0.0, %v2608
        %v2610 = vpop.f32.mrb[0].mxu0
        %v2611 = vpop.f32.mrb[0].mxu0
        %v2612 = vadd.f32 0.0, %v2611
        %v2613 = vpop.f32.mrb[0].mxu0
        %2614 = vmatprep.mubr.bf16.mxu0 0
        %2615 = vmatmul.mubr.bf16.gmra.mrb[0].mxu0 %v2471
        %v2616 = vpop.f32.mrb[0].mxu0
        %v2617 = vpop.f32.mrb[0].mxu0
        %v2618 = vpop.f32.mrb[0].mxu0
        %v2619 = vpop.f32.mrb[0].mxu0
        %2620 = vdwg.mxu0
        %v2622 = vshrl.u32 %v2401, 16
        %v2624 = vrot.slane %v2622, 7
        %v2625 = vshrl.u32 %v2402, 16
        %v2627 = vrot.slane %v2625, 7
        %v2628 = vshll.u32 %v2402, 16
        %v2630 = vor.u32 %v2627, %v2628
        %v2631 = vsel %vm672, %v2624, %v2630
        %v2632 = vshrl.u32 %v2403, 16
        %v2634 = vrot.slane %v2632, 7
        %v2635 = vshll.u32 %v2403, 16
        %v2637 = vor.u32 %v2634, %v2635
        %v2638 = vsel %vm672, %v2627, %v2637
        %v2639 = vshrl.u32 %v2404, 16
        %v2641 = vrot.slane %v2639, 7
        %v2642 = vshll.u32 %v2404, 16
        %v2644 = vor.u32 %v2641, %v2642
        %v2645 = vsel %vm672, %v2634, %v2644
        %v2646 = vshrl.u32 %v2405, 16
        %v2648 = vrot.slane %v2646, 7
        %v2649 = vshll.u32 %v2405, 16
        %v2651 = vor.u32 %v2648, %v2649
        %v2652 = vsel %vm672, %v2641, %v2651
        %v2653 = vshrl.u32 %v2406, 16
        %v2655 = vrot.slane %v2653, 7
        %v2656 = vshll.u32 %v2406, 16
        %v2658 = vor.u32 %v2655, %v2656
        %v2659 = vsel %vm672, %v2648, %v2658
        %v2660 = vshrl.u32 %v2407, 16
        %v2662 = vrot.slane %v2660, 7
        %v2663 = vshll.u32 %v2407, 16
        %v2665 = vor.u32 %v2662, %v2663
        %v2666 = vsel %vm672, %v2655, %v2665
        %v2667 = vshrl.u32 %v2408, 16
        %v2669 = vrot.slane %v2667, 7
        %v2670 = vshll.u32 %v2408, 16
        %v2672 = vor.u32 %v2669, %v2670
        %v2673 = vsel %vm672, %v2662, %v2672
        %v2674 = vshrl.u32 %v2409, 16
        %v2676 = vrot.slane %v2674, 7
        %v2677 = vshll.u32 %v2409, 16
        %v2679 = vor.u32 %v2676, %v2677
        %v2680 = vsel %vm672, %v2669, %v2679
        %v2681 = vshrl.u32 %v2410, 16
        %v2683 = vrot.slane %v2681, 7
        %v2684 = vshll.u32 %v2410, 16
        %v2686 = vor.u32 %v2683, %v2684
        %v2687 = vsel %vm672, %v2676, %v2686
        %v2688 = vshrl.u32 %v2411, 16
        %v2690 = vrot.slane %v2688, 7
        %v2691 = vshll.u32 %v2411, 16
        %v2693 = vor.u32 %v2690, %v2691
        %v2694 = vsel %vm672, %v2683, %v2693
        %v2695 = vshrl.u32 %v2412, 16
        %v2697 = vrot.slane %v2695, 7
        %v2698 = vshll.u32 %v2412, 16
        %v2700 = vor.u32 %v2697, %v2698
        %v2701 = vsel %vm672, %v2690, %v2700
        %v2702 = vshrl.u32 %v2413, 16
        %v2704 = vrot.slane %v2702, 7
        %v2705 = vshll.u32 %v2413, 16
        %v2707 = vor.u32 %v2704, %v2705
        %v2708 = vsel %vm672, %v2697, %v2707
        %v2709 = vshrl.u32 %v2414, 16
        %v2711 = vrot.slane %v2709, 7
        %v2712 = vshll.u32 %v2414, 16
        %v2714 = vor.u32 %v2711, %v2712
        %v2715 = vsel %vm672, %v2704, %v2714
        %v2716 = vshrl.u32 %v2415, 16
        %v2718 = vrot.slane %v2716, 7
        %v2719 = vshll.u32 %v2415, 16
        %v2721 = vor.u32 %v2718, %v2719
        %v2722 = vsel %vm672, %v2711, %v2721
        %v2723 = vshrl.u32 %v2416, 16
        %v2725 = vrot.slane %v2723, 7
        %v2726 = vshll.u32 %v2416, 16
        %v2728 = vor.u32 %v2725, %v2726
        %v2729 = vsel %vm672, %v2718, %v2728
        %v2730 = vshrl.u32 %v2417, 16
        %v2732 = vrot.slane %v2730, 7
        %v2733 = vshll.u32 %v2417, 16
        %v2735 = vor.u32 %v2732, %v2733
        %v2736 = vsel %vm672, %v2725, %v2735
        %v2738 = vsel %vm278, %v2631, 0
        %v2741 = vsel %vm278, %v2638, 0
        %v2744 = vsel %vm278, %v2645, 0
        %v2747 = vsel %vm278, %v2652, 0
        %v2750 = vsel %vm278, %v2659, 0
        %v2753 = vsel %vm278, %v2666, 0
        %v2756 = vsel %vm278, %v2673, 0
        %v2759 = vsel %vm278, %v2680, 0
        %v2762 = vsel %vm278, %v2687, 0
        %v2765 = vsel %vm278, %v2694, 0
        %v2768 = vsel %vm278, %v2701, 0
        %v2771 = vsel %vm278, %v2708, 0
        %v2774 = vsel %vm278, %v2715, 0
        %v2777 = vsel %vm278, %v2722, 0
        %v2780 = vsel %vm278, %v2729, 0
        %v2783 = vsel %vm278, %v2736, 0
        %v2786 = vsel %vm523, %v2423, 0
        %2788 = vmatprep.subr.bf16.mxu0 0
        %2789 = vmatpush1.bf16.msra.mxu0 %v2786
        %2790 = vmatprep.subr.bf16.mxu0 0
        %2791 = vmatpush1.bf16.msra.mxu0 0
        %2792 = vmatprep.subr.bf16.mxu0 0
        %2793 = vmatpush1.bf16.msra.mxu0 0
        %2794 = vmatprep.subr.bf16.mxu0 0
        %2795 = vmatpush1.bf16.msra.mxu0 0
        %2796 = vmatprep.subr.bf16.mxu0 0
        %2797 = vmatpush1.bf16.msra.mxu0 0
        %2798 = vmatprep.subr.bf16.mxu0 0
        %2799 = vmatpush1.bf16.msra.mxu0 0
        %2800 = vmatprep.subr.bf16.mxu0 0
        %2801 = vmatpush1.bf16.msra.mxu0 0
        %2802 = vmatprep.subr.bf16.mxu0 0
        %2803 = vmatpush1.bf16.msra.mxu0 0
        %2804 = vmatprep.subr.bf16.mxu0 0
        %2805 = vmatpush1.bf16.msra.mxu0 0
        %2806 = vmatprep.subr.bf16.mxu0 0
        %2807 = vmatpush1.bf16.msra.mxu0 0
        %2808 = vmatprep.subr.bf16.mxu0 0
        %2809 = vmatpush1.bf16.msra.mxu0 0
        %2810 = vmatprep.subr.bf16.mxu0 0
        %2811 = vmatpush1.bf16.msra.mxu0 0
        %2812 = vmatprep.subr.bf16.mxu0 0
        %2813 = vmatpush1.bf16.msra.mxu0 0
        %2814 = vmatprep.subr.bf16.mxu0 0
        %2815 = vmatpush1.bf16.msra.mxu0 0
        %2816 = vmatprep.subr.bf16.mxu0 0
        %2817 = vmatpush1.bf16.msra.mxu0 0
        %2818 = vmatprep.subr.bf16.mxu0 0
        %2819 = vmatpush1.bf16.msra.mxu0 0
        %2820 = vmatprep.mubr.bf16.mxu0 0
        %2821 = vmatmul.mubr.bf16.gmra.mrb[0].mxu0 %v2738
        %v2822 = vpop.f32.mrb[0].mxu0
        %v2823 = vadd.f32 %v2511, %v2822
        %v2824 = vpop.f32.mrb[0].mxu0
        %v2825 = vpop.f32.mrb[0].mxu0
        %v2826 = vadd.f32 %v2514, %v2825
        %v2827 = vpop.f32.mrb[0].mxu0
        %2828 = vmatprep.mubr.bf16.mxu0 0
        %2829 = vmatmul.mubr.bf16.gmra.mrb[0].mxu0 %v2741
        %v2830 = vpop.f32.mrb[0].mxu0
        %v2831 = vpop.f32.mrb[0].mxu0
        %v2832 = vpop.f32.mrb[0].mxu0
        %v2833 = vpop.f32.mrb[0].mxu0
        %2834 = vmatprep.mubr.bf16.mxu0 0
        %2835 = vmatmul.mubr.bf16.gmra.mrb[0].mxu0 %v2744
        %v2836 = vpop.f32.mrb[0].mxu0
        %v2837 = vadd.f32 %v2525, %v2836
        %v2838 = vpop.f32.mrb[0].mxu0
        %v2839 = vpop.f32.mrb[0].mxu0
        %v2840 = vadd.f32 %v2528, %v2839
        %v2841 = vpop.f32.mrb[0].mxu0
        %2842 = vmatprep.mubr.bf16.mxu0 0
        %2843 = vmatmul.mubr.bf16.gmra.mrb[0].mxu0 %v2747
        %v2844 = vpop.f32.mrb[0].mxu0
        %v2845 = vpop.f32.mrb[0].mxu0
        %v2846 = vpop.f32.mrb[0].mxu0
        %v2847 = vpop.f32.mrb[0].mxu0
        %2848 = vmatprep.mubr.bf16.mxu0 0
        %2849 = vmatmul.mubr.bf16.gmra.mrb[0].mxu0 %v2750
        %v2850 = vpop.f32.mrb[0].mxu0
        %v2851 = vadd.f32 %v2539, %v2850
        %v2852 = vpop.f32.mrb[0].mxu0
        %v2853 = vpop.f32.mrb[0].mxu0
        %v2854 = vadd.f32 %v2542, %v2853
        %v2855 = vpop.f32.mrb[0].mxu0
        %2856 = vmatprep.mubr.bf16.mxu0 0
        %2857 = vmatmul.mubr.bf16.gmra.mrb[0].mxu0 %v2753
        %v2858 = vpop.f32.mrb[0].mxu0
        %v2859 = vpop.f32.mrb[0].mxu0
        %v2860 = vpop.f32.mrb[0].mxu0
        %v2861 = vpop.f32.mrb[0].mxu0
        %2862 = vmatprep.mubr.bf16.mxu0 0
        %2863 = vmatmul.mubr.bf16.gmra.mrb[0].mxu0 %v2756
        %v2864 = vpop.f32.mrb[0].mxu0
        %v2865 = vadd.f32 %v2553, %v2864
        %v2866 = vpop.f32.mrb[0].mxu0
        %v2867 = vpop.f32.mrb[0].mxu0
        %v2868 = vadd.f32 %v2556, %v2867
        %v2869 = vpop.f32.mrb[0].mxu0
        %2870 = vmatprep.mubr.bf16.mxu0 0
        %2871 = vmatmul.mubr.bf16.gmra.mrb[0].mxu0 %v2759
        %v2872 = vpop.f32.mrb[0].mxu0
        %v2873 = vpop.f32.mrb[0].mxu0
        %v2874 = vpop.f32.mrb[0].mxu0
        %v2875 = vpop.f32.mrb[0].mxu0
        %2876 = vmatprep.mubr.bf16.mxu0 0
        %2877 = vmatmul.mubr.bf16.gmra.mrb[0].mxu0 %v2762
        %v2878 = vpop.f32.mrb[0].mxu0
        %v2879 = vadd.f32 %v2567, %v2878
        %v2880 = vpop.f32.mrb[0].mxu0
        %v2881 = vpop.f32.mrb[0].mxu0
        %v2882 = vadd.f32 %v2570, %v2881
        %v2883 = vpop.f32.mrb[0].mxu0
        %2884 = vmatprep.mubr.bf16.mxu0 0
        %2885 = vmatmul.mubr.bf16.gmra.mrb[0].mxu0 %v2765
        %v2886 = vpop.f32.mrb[0].mxu0
        %v2887 = vpop.f32.mrb[0].mxu0
        %v2888 = vpop.f32.mrb[0].mxu0
        %v2889 = vpop.f32.mrb[0].mxu0
        %2890 = vmatprep.mubr.bf16.mxu0 0
        %2891 = vmatmul.mubr.bf16.gmra.mrb[0].mxu0 %v2768
        %v2892 = vpop.f32.mrb[0].mxu0
        %v2893 = vadd.f32 %v2581, %v2892
        %v2894 = vpop.f32.mrb[0].mxu0
        %v2895 = vpop.f32.mrb[0].mxu0
        %v2896 = vadd.f32 %v2584, %v2895
        %v2897 = vpop.f32.mrb[0].mxu0
        %2898 = vmatprep.mubr.bf16.mxu0 0
        %2899 = vmatmul.mubr.bf16.gmra.mrb[0].mxu0 %v2771
        %v2900 = vpop.f32.mrb[0].mxu0
        %v2901 = vpop.f32.mrb[0].mxu0
        %v2902 = vpop.f32.mrb[0].mxu0
        %v2903 = vpop.f32.mrb[0].mxu0
        %2904 = vmatprep.mubr.bf16.mxu0 0
        %2905 = vmatmul.mubr.bf16.gmra.mrb[0].mxu0 %v2774
        %v2906 = vpop.f32.mrb[0].mxu0
        %v2907 = vadd.f32 %v2595, %v2906
        %v2908 = vpop.f32.mrb[0].mxu0
        %v2909 = vpop.f32.mrb[0].mxu0
        %v2910 = vadd.f32 %v2598, %v2909
        %v2911 = vpop.f32.mrb[0].mxu0
        %2912 = vmatprep.mubr.bf16.mxu0 0
        %2913 = vmatmul.mubr.bf16.gmra.mrb[0].mxu0 %v2777
        %v2914 = vpop.f32.mrb[0].mxu0
        %v2915 = vpop.f32.mrb[0].mxu0
        %v2916 = vpop.f32.mrb[0].mxu0
        %v2917 = vpop.f32.mrb[0].mxu0
        %2918 = vmatprep.mubr.bf16.mxu0 0
        %2919 = vmatmul.mubr.bf16.gmra.mrb[0].mxu0 %v2780
        %v2920 = vpop.f32.mrb[0].mxu0
        %v2921 = vadd.f32 %v2609, %v2920
        %v2922 = vpop.f32.mrb[0].mxu0
        %v2923 = vpop.f32.mrb[0].mxu0
        %v2924 = vadd.f32 %v2612, %v2923
        %v2925 = vpop.f32.mrb[0].mxu0
        %2926 = vmatprep.mubr.bf16.mxu0 0
        %2927 = vmatmul.mubr.bf16.gmra.mrb[0].mxu0 %v2783
        %v2928 = vpop.f32.mrb[0].mxu0
        %v2929 = vpop.f32.mrb[0].mxu0
        %v2930 = vpop.f32.mrb[0].mxu0
        %v2931 = vpop.f32.mrb[0].mxu0
        %2932 = vdwg.mxu0
        %v2933 = vld [vmem:[%s985] sm:$0xf]
        %v2934 = vrot.slane %v2628, 1
        %v2935 = vor.u32 %v2625, %v2934
        %v2936 = vrot.slane %v2635, 1
        %v2937 = vsel %vm987, %v2935, %v2936
        %v2938 = vor.u32 %v2632, %v2936
        %v2939 = vrot.slane %v2642, 1
        %v2940 = vsel %vm987, %v2938, %v2939
        %v2941 = vor.u32 %v2639, %v2939
        %v2942 = vrot.slane %v2649, 1
        %v2943 = vsel %vm987, %v2941, %v2942
        %v2944 = vor.u32 %v2646, %v2942
        %v2945 = vrot.slane %v2656, 1
        %v2946 = vsel %vm987, %v2944, %v2945
        %v2947 = vor.u32 %v2653, %v2945
        %v2948 = vrot.slane %v2663, 1
        %v2949 = vsel %vm987, %v2947, %v2948
        %v2950 = vor.u32 %v2660, %v2948
        %v2951 = vrot.slane %v2670, 1
        %v2952 = vsel %vm987, %v2950, %v2951
        %v2953 = vor.u32 %v2667, %v2951
        %v2954 = vrot.slane %v2677, 1
        %v2955 = vsel %vm987, %v2953, %v2954
        %v2956 = vor.u32 %v2674, %v2954
        %v2957 = vrot.slane %v2684, 1
        %v2958 = vsel %vm987, %v2956, %v2957
        %v2959 = vor.u32 %v2681, %v2957
        %v2960 = vrot.slane %v2691, 1
        %v2961 = vsel %vm987, %v2959, %v2960
        %v2962 = vor.u32 %v2688, %v2960
        %v2963 = vrot.slane %v2698, 1
        %v2964 = vsel %vm987, %v2962, %v2963
        %v2965 = vor.u32 %v2695, %v2963
        %v2966 = vrot.slane %v2705, 1
        %v2967 = vsel %vm987, %v2965, %v2966
        %v2968 = vor.u32 %v2702, %v2966
        %v2969 = vrot.slane %v2712, 1
        %v2970 = vsel %vm987, %v2968, %v2969
        %v2971 = vor.u32 %v2709, %v2969
        %v2972 = vrot.slane %v2719, 1
        %v2973 = vsel %vm987, %v2971, %v2972
        %v2974 = vor.u32 %v2716, %v2972
        %v2975 = vrot.slane %v2726, 1
        %v2976 = vsel %vm987, %v2974, %v2975
        %v2977 = vor.u32 %v2723, %v2975
        %v2978 = vrot.slane %v2733, 1
        %v2979 = vsel %vm987, %v2977, %v2978
        %v2980 = vor.u32 %v2730, %v2978
        %v2982 = vshll.u32 %v2418, 16
        %v2984 = vrot.slane %v2982, 1
        %v2985 = vsel %vm987, %v2980, %v2984
        %v2987 = vsel %vm278, %v2937, 0
        %v2990 = vsel %vm278, %v2940, 0
        %v2993 = vsel %vm278, %v2943, 0
        %v2996 = vsel %vm278, %v2946, 0
        %v2999 = vsel %vm278, %v2949, 0
        %v3002 = vsel %vm278, %v2952, 0
        %v3005 = vsel %vm278, %v2955, 0
        %v3008 = vsel %vm278, %v2958, 0
        %v3011 = vsel %vm278, %v2961, 0
        %v3014 = vsel %vm278, %v2964, 0
        %v3017 = vsel %vm278, %v2967, 0
        %v3020 = vsel %vm278, %v2970, 0
        %v3023 = vsel %vm278, %v2973, 0
        %v3026 = vsel %vm278, %v2976, 0
        %v3029 = vsel %vm278, %v2979, 0
        %v3032 = vsel %vm278, %v2985, 0
        %v3035 = vsel %vm523, %v2933, 0
        %3037 = vmatprep.subr.bf16.mxu0 0
        %3038 = vmatpush1.bf16.msra.mxu0 %v3035
        %3039 = vmatprep.subr.bf16.mxu0 0
        %3040 = vmatpush1.bf16.msra.mxu0 0
        %3041 = vmatprep.subr.bf16.mxu0 0
        %3042 = vmatpush1.bf16.msra.mxu0 0
        %3043 = vmatprep.subr.bf16.mxu0 0
        %3044 = vmatpush1.bf16.msra.mxu0 0
        %3045 = vmatprep.subr.bf16.mxu0 0
        %3046 = vmatpush1.bf16.msra.mxu0 0
        %3047 = vmatprep.subr.bf16.mxu0 0
        %3048 = vmatpush1.bf16.msra.mxu0 0
        %3049 = vmatprep.subr.bf16.mxu0 0
        %3050 = vmatpush1.bf16.msra.mxu0 0
        %3051 = vmatprep.subr.bf16.mxu0 0
        %3052 = vmatpush1.bf16.msra.mxu0 0
        %3053 = vmatprep.subr.bf16.mxu0 0
        %3054 = vmatpush1.bf16.msra.mxu0 0
        %3055 = vmatprep.subr.bf16.mxu0 0
        %3056 = vmatpush1.bf16.msra.mxu0 0
        %3057 = vmatprep.subr.bf16.mxu0 0
        %3058 = vmatpush1.bf16.msra.mxu0 0
        %3059 = vmatprep.subr.bf16.mxu0 0
        %3060 = vmatpush1.bf16.msra.mxu0 0
        %3061 = vmatprep.subr.bf16.mxu0 0
        %3062 = vmatpush1.bf16.msra.mxu0 0
        %3063 = vmatprep.subr.bf16.mxu0 0
        %3064 = vmatpush1.bf16.msra.mxu0 0
        %3065 = vmatprep.subr.bf16.mxu0 0
        %3066 = vmatpush1.bf16.msra.mxu0 0
        %3067 = vmatprep.subr.bf16.mxu0 0
        %3068 = vmatpush1.bf16.msra.mxu0 0
        %3069 = vmatprep.mubr.bf16.mxu0 0
        %3070 = vmatmul.mubr.bf16.gmra.mrb[0].mxu0 %v2987
        %v3071 = vpop.f32.mrb[0].mxu0
        %v3072 = vadd.f32 0.0, %v3071
        %v3073 = vpop.f32.mrb[0].mxu0
        %v3074 = vpop.f32.mrb[0].mxu0
        %v3075 = vadd.f32 0.0, %v3074
        %v3076 = vpop.f32.mrb[0].mxu0
        %3077 = vmatprep.mubr.bf16.mxu0 0
        %3078 = vmatmul.mubr.bf16.gmra.mrb[0].mxu0 %v2990
        %v3079 = vpop.f32.mrb[0].mxu0
        %v3080 = vpop.f32.mrb[0].mxu0
        %v3081 = vpop.f32.mrb[0].mxu0
        %v3082 = vpop.f32.mrb[0].mxu0
        %3083 = vmatprep.mubr.bf16.mxu0 0
        %3084 = vmatmul.mubr.bf16.gmra.mrb[0].mxu0 %v2993
        %v3085 = vpop.f32.mrb[0].mxu0
        %v3086 = vadd.f32 0.0, %v3085
        %v3087 = vpop.f32.mrb[0].mxu0
        %v3088 = vpop.f32.mrb[0].mxu0
        %v3089 = vadd.f32 0.0, %v3088
        %v3090 = vpop.f32.mrb[0].mxu0
        %3091 = vmatprep.mubr.bf16.mxu0 0
        %3092 = vmatmul.mubr.bf16.gmra.mrb[0].mxu0 %v2996
        %v3093 = vpop.f32.mrb[0].mxu0
        %v3094 = vpop.f32.mrb[0].mxu0
        %v3095 = vpop.f32.mrb[0].mxu0
        %v3096 = vpop.f32.mrb[0].mxu0
        %3097 = vmatprep.mubr.bf16.mxu0 0
        %3098 = vmatmul.mubr.bf16.gmra.mrb[0].mxu0 %v2999
        %v3099 = vpop.f32.mrb[0].mxu0
        %v3100 = vadd.f32 0.0, %v3099
        %v3101 = vpop.f32.mrb[0].mxu0
        %v3102 = vpop.f32.mrb[0].mxu0
        %v3103 = vadd.f32 0.0, %v3102
        %v3104 = vpop.f32.mrb[0].mxu0
        %3105 = vmatprep.mubr.bf16.mxu0 0
        %3106 = vmatmul.mubr.bf16.gmra.mrb[0].mxu0 %v3002
        %v3107 = vpop.f32.mrb[0].mxu0
        %v3108 = vpop.f32.mrb[0].mxu0
        %v3109 = vpop.f32.mrb[0].mxu0
        %v3110 = vpop.f32.mrb[0].mxu0
        %3111 = vmatprep.mubr.bf16.mxu0 0
        %3112 = vmatmul.mubr.bf16.gmra.mrb[0].mxu0 %v3005
        %v3113 = vpop.f32.mrb[0].mxu0
        %v3114 = vadd.f32 0.0, %v3113
        %v3115 = vpop.f32.mrb[0].mxu0
        %v3116 = vpop.f32.mrb[0].mxu0
        %v3117 = vadd.f32 0.0, %v3116
        %v3118 = vpop.f32.mrb[0].mxu0
        %3119 = vmatprep.mubr.bf16.mxu0 0
        %3120 = vmatmul.mubr.bf16.gmra.mrb[0].mxu0 %v3008
        %v3121 = vpop.f32.mrb[0].mxu0
        %v3122 = vpop.f32.mrb[0].mxu0
        %v3123 = vpop.f32.mrb[0].mxu0
        %v3124 = vpop.f32.mrb[0].mxu0
        %3125 = vmatprep.mubr.bf16.mxu0 0
        %3126 = vmatmul.mubr.bf16.gmra.mrb[0].mxu0 %v3011
        %v3127 = vpop.f32.mrb[0].mxu0
        %v3128 = vadd.f32 0.0, %v3127
        %v3129 = vpop.f32.mrb[0].mxu0
        %v3130 = vpop.f32.mrb[0].mxu0
        %v3131 = vadd.f32 0.0, %v3130
        %v3132 = vpop.f32.mrb[0].mxu0
        %3133 = vmatprep.mubr.bf16.mxu0 0
        %3134 = vmatmul.mubr.bf16.gmra.mrb[0].mxu0 %v3014
        %v3135 = vpop.f32.mrb[0].mxu0
        %v3136 = vpop.f32.mrb[0].mxu0
        %v3137 = vpop.f32.mrb[0].mxu0
        %v3138 = vpop.f32.mrb[0].mxu0
        %3139 = vmatprep.mubr.bf16.mxu0 0
        %3140 = vmatmul.mubr.bf16.gmra.mrb[0].mxu0 %v3017
        %v3141 = vpop.f32.mrb[0].mxu0
        %v3142 = vadd.f32 0.0, %v3141
        %v3143 = vpop.f32.mrb[0].mxu0
        %v3144 = vpop.f32.mrb[0].mxu0
        %v3145 = vadd.f32 0.0, %v3144
        %v3146 = vpop.f32.mrb[0].mxu0
        %3147 = vmatprep.mubr.bf16.mxu0 0
        %3148 = vmatmul.mubr.bf16.gmra.mrb[0].mxu0 %v3020
        %v3149 = vpop.f32.mrb[0].mxu0
        %v3150 = vpop.f32.mrb[0].mxu0
        %v3151 = vpop.f32.mrb[0].mxu0
        %v3152 = vpop.f32.mrb[0].mxu0
        %3153 = vmatprep.mubr.bf16.mxu0 0
        %3154 = vmatmul.mubr.bf16.gmra.mrb[0].mxu0 %v3023
        %v3155 = vpop.f32.mrb[0].mxu0
        %v3156 = vadd.f32 0.0, %v3155
        %v3157 = vpop.f32.mrb[0].mxu0
        %v3158 = vpop.f32.mrb[0].mxu0
        %v3159 = vadd.f32 0.0, %v3158
        %v3160 = vpop.f32.mrb[0].mxu0
        %3161 = vmatprep.mubr.bf16.mxu0 0
        %3162 = vmatmul.mubr.bf16.gmra.mrb[0].mxu0 %v3026
        %v3163 = vpop.f32.mrb[0].mxu0
        %v3164 = vpop.f32.mrb[0].mxu0
        %v3165 = vpop.f32.mrb[0].mxu0
        %v3166 = vpop.f32.mrb[0].mxu0
        %3167 = vmatprep.mubr.bf16.mxu0 0
        %3168 = vmatmul.mubr.bf16.gmra.mrb[0].mxu0 %v3029
        %v3169 = vpop.f32.mrb[0].mxu0
        %v3170 = vadd.f32 0.0, %v3169
        %v3171 = vpop.f32.mrb[0].mxu0
        %v3172 = vpop.f32.mrb[0].mxu0
        %v3173 = vadd.f32 0.0, %v3172
        %v3174 = vpop.f32.mrb[0].mxu0
        %3175 = vmatprep.mubr.bf16.mxu0 0
        %3176 = vmatmul.mubr.bf16.gmra.mrb[0].mxu0 %v3032
        %v3177 = vpop.f32.mrb[0].mxu0
        %v3178 = vpop.f32.mrb[0].mxu0
        %v3179 = vpop.f32.mrb[0].mxu0
        %v3180 = vpop.f32.mrb[0].mxu0
        %3181 = vdwg.mxu0
        %v3182 = vadd.f32 %v2823, %v3072
        %v3183 = vadd.f32 %v2826, %v3075
        %v3184 = vadd.f32 %v2837, %v3086
        %v3185 = vadd.f32 %v2840, %v3089
        %v3186 = vadd.f32 %v2851, %v3100
        %v3187 = vadd.f32 %v2854, %v3103
        %v3188 = vadd.f32 %v2865, %v3114
        %v3189 = vadd.f32 %v2868, %v3117
        %v3190 = vadd.f32 %v2879, %v3128
        %v3191 = vadd.f32 %v2882, %v3131
        %v3192 = vadd.f32 %v2893, %v3142
        %v3193 = vadd.f32 %v2896, %v3145
        %v3194 = vadd.f32 %v2907, %v3156
        %v3195 = vadd.f32 %v2910, %v3159
        %v3196 = vadd.f32 %v2921, %v3170
        %v3197 = vadd.f32 %v2924, %v3173
        %v3198 = vld [vmem:[%s1252] sm:$0xf]
        %v3199 = vshrl.u32 %v2418, 16
        %v3201 = vrot.slane %v3199, 7
        %v3202 = vor.u32 %v3201, %v2982
        %v3203 = vsel %vm672, %v2732, %v3202
        %v3205 = vshrl.u32 %v2419, 16
        %v3207 = vrot.slane %v3205, 7
        %v3208 = vshll.u32 %v2419, 16
        %v3210 = vor.u32 %v3207, %v3208
        %v3211 = vsel %vm672, %v3201, %v3210
        %v3213 = vsel %vm278, %v3203, 0
        %v3216 = vsel %vm278, %v3211, 0
        %v3219 = vsel %vm523, %v3198, 0
        %3221 = vmatprep.subr.bf16.mxu0 0
        %3222 = vmatpush1.bf16.msra.mxu0 %v3219
        %3223 = vmatprep.subr.bf16.mxu0 0
        %3224 = vmatpush1.bf16.msra.mxu0 0
        %3225 = vmatprep.subr.bf16.mxu0 0
        %3226 = vmatpush1.bf16.msra.mxu0 0
        %3227 = vmatprep.subr.bf16.mxu0 0
        %3228 = vmatpush1.bf16.msra.mxu0 0
        %3229 = vmatprep.subr.bf16.mxu0 0
        %3230 = vmatpush1.bf16.msra.mxu0 0
        %3231 = vmatprep.subr.bf16.mxu0 0
        %3232 = vmatpush1.bf16.msra.mxu0 0
        %3233 = vmatprep.subr.bf16.mxu0 0
        %3234 = vmatpush1.bf16.msra.mxu0 0
        %3235 = vmatprep.subr.bf16.mxu0 0
        %3236 = vmatpush1.bf16.msra.mxu0 0
        %3237 = vmatprep.subr.bf16.mxu0 0
        %3238 = vmatpush1.bf16.msra.mxu0 0
        %3239 = vmatprep.subr.bf16.mxu0 0
        %3240 = vmatpush1.bf16.msra.mxu0 0
        %3241 = vmatprep.subr.bf16.mxu0 0
        %3242 = vmatpush1.bf16.msra.mxu0 0
        %3243 = vmatprep.subr.bf16.mxu0 0
        %3244 = vmatpush1.bf16.msra.mxu0 0
        %3245 = vmatprep.subr.bf16.mxu0 0
        %3246 = vmatpush1.bf16.msra.mxu0 0
        %3247 = vmatprep.subr.bf16.mxu0 0
        %3248 = vmatpush1.bf16.msra.mxu0 0
        %3249 = vmatprep.subr.bf16.mxu0 0
        %3250 = vmatpush1.bf16.msra.mxu0 0
        %3251 = vmatprep.subr.bf16.mxu0 0
        %3252 = vmatpush1.bf16.msra.mxu0 0
        %3253 = vmatprep.mubr.bf16.mxu0 0
        %3254 = vmatmul.mubr.bf16.gmra.mrb[0].mxu0 %v2744
        %v3255 = vpop.f32.mrb[0].mxu0
        %v3256 = vadd.f32 0.0, %v3255
        %v3257 = vpop.f32.mrb[0].mxu0
        %v3258 = vpop.f32.mrb[0].mxu0
        %v3259 = vadd.f32 0.0, %v3258
        %v3260 = vpop.f32.mrb[0].mxu0
        %3261 = vmatprep.mubr.bf16.mxu0 0
        %3262 = vmatmul.mubr.bf16.gmra.mrb[0].mxu0 %v2747
        %v3263 = vpop.f32.mrb[0].mxu0
        %v3264 = vpop.f32.mrb[0].mxu0
        %v3265 = vpop.f32.mrb[0].mxu0
        %v3266 = vpop.f32.mrb[0].mxu0
        %3267 = vmatprep.mubr.bf16.mxu0 0
        %3268 = vmatmul.mubr.bf16.gmra.mrb[0].mxu0 %v2750
        %v3269 = vpop.f32.mrb[0].mxu0
        %v3270 = vadd.f32 0.0, %v3269
        %v3271 = vpop.f32.mrb[0].mxu0
        %v3272 = vpop.f32.mrb[0].mxu0
        %v3273 = vadd.f32 0.0, %v3272
        %v3274 = vpop.f32.mrb[0].mxu0
        %3275 = vmatprep.mubr.bf16.mxu0 0
        %3276 = vmatmul.mubr.bf16.gmra.mrb[0].mxu0 %v2753
        %v3277 = vpop.f32.mrb[0].mxu0
        %v3278 = vpop.f32.mrb[0].mxu0
        %v3279 = vpop.f32.mrb[0].mxu0
        %v3280 = vpop.f32.mrb[0].mxu0
        %3281 = vmatprep.mubr.bf16.mxu0 0
        %3282 = vmatmul.mubr.bf16.gmra.mrb[0].mxu0 %v2756
        %v3283 = vpop.f32.mrb[0].mxu0
        %v3284 = vadd.f32 0.0, %v3283
        %v3285 = vpop.f32.mrb[0].mxu0
        %v3286 = vpop.f32.mrb[0].mxu0
        %v3287 = vadd.f32 0.0, %v3286
        %v3288 = vpop.f32.mrb[0].mxu0
        %3289 = vmatprep.mubr.bf16.mxu0 0
        %3290 = vmatmul.mubr.bf16.gmra.mrb[0].mxu0 %v2759
        %v3291 = vpop.f32.mrb[0].mxu0
        %v3292 = vpop.f32.mrb[0].mxu0
        %v3293 = vpop.f32.mrb[0].mxu0
        %v3294 = vpop.f32.mrb[0].mxu0
        %3295 = vmatprep.mubr.bf16.mxu0 0
        %3296 = vmatmul.mubr.bf16.gmra.mrb[0].mxu0 %v2762
        %v3297 = vpop.f32.mrb[0].mxu0
        %v3298 = vadd.f32 0.0, %v3297
        %v3299 = vpop.f32.mrb[0].mxu0
        %v3300 = vpop.f32.mrb[0].mxu0
        %v3301 = vadd.f32 0.0, %v3300
        %v3302 = vpop.f32.mrb[0].mxu0
        %3303 = vmatprep.mubr.bf16.mxu0 0
        %3304 = vmatmul.mubr.bf16.gmra.mrb[0].mxu0 %v2765
        %v3305 = vpop.f32.mrb[0].mxu0
        %v3306 = vpop.f32.mrb[0].mxu0
        %v3307 = vpop.f32.mrb[0].mxu0
        %v3308 = vpop.f32.mrb[0].mxu0
        %3309 = vmatprep.mubr.bf16.mxu0 0
        %3310 = vmatmul.mubr.bf16.gmra.mrb[0].mxu0 %v2768
        %v3311 = vpop.f32.mrb[0].mxu0
        %v3312 = vadd.f32 0.0, %v3311
        %v3313 = vpop.f32.mrb[0].mxu0
        %v3314 = vpop.f32.mrb[0].mxu0
        %v3315 = vadd.f32 0.0, %v3314
        %v3316 = vpop.f32.mrb[0].mxu0
        %3317 = vmatprep.mubr.bf16.mxu0 0
        %3318 = vmatmul.mubr.bf16.gmra.mrb[0].mxu0 %v2771
        %v3319 = vpop.f32.mrb[0].mxu0
        %v3320 = vpop.f32.mrb[0].mxu0
        %v3321 = vpop.f32.mrb[0].mxu0
        %v3322 = vpop.f32.mrb[0].mxu0
        %3323 = vmatprep.mubr.bf16.mxu0 0
        %3324 = vmatmul.mubr.bf16.gmra.mrb[0].mxu0 %v2774
        %v3325 = vpop.f32.mrb[0].mxu0
        %v3326 = vadd.f32 0.0, %v3325
        %v3327 = vpop.f32.mrb[0].mxu0
        %v3328 = vpop.f32.mrb[0].mxu0
        %v3329 = vadd.f32 0.0, %v3328
        %v3330 = vpop.f32.mrb[0].mxu0
        %3331 = vmatprep.mubr.bf16.mxu0 0
        %3332 = vmatmul.mubr.bf16.gmra.mrb[0].mxu0 %v2777
        %v3333 = vpop.f32.mrb[0].mxu0
        %v3334 = vpop.f32.mrb[0].mxu0
        %v3335 = vpop.f32.mrb[0].mxu0
        %v3336 = vpop.f32.mrb[0].mxu0
        %3337 = vmatprep.mubr.bf16.mxu0 0
        %3338 = vmatmul.mubr.bf16.gmra.mrb[0].mxu0 %v2780
        %v3339 = vpop.f32.mrb[0].mxu0
        %v3340 = vadd.f32 0.0, %v3339
        %v3341 = vpop.f32.mrb[0].mxu0
        %v3342 = vpop.f32.mrb[0].mxu0
        %v3343 = vadd.f32 0.0, %v3342
        %v3344 = vpop.f32.mrb[0].mxu0
        %3345 = vmatprep.mubr.bf16.mxu0 0
        %3346 = vmatmul.mubr.bf16.gmra.mrb[0].mxu0 %v2783
        %v3347 = vpop.f32.mrb[0].mxu0
        %v3348 = vpop.f32.mrb[0].mxu0
        %v3349 = vpop.f32.mrb[0].mxu0
        %v3350 = vpop.f32.mrb[0].mxu0
        %3351 = vmatprep.mubr.bf16.mxu0 0
        %3352 = vmatmul.mubr.bf16.gmra.mrb[0].mxu0 %v3213
        %v3353 = vpop.f32.mrb[0].mxu0
        %v3354 = vadd.f32 0.0, %v3353
        %v3355 = vpop.f32.mrb[0].mxu0
        %v3356 = vpop.f32.mrb[0].mxu0
        %v3357 = vadd.f32 0.0, %v3356
        %v3358 = vpop.f32.mrb[0].mxu0
        %3359 = vmatprep.mubr.bf16.mxu0 0
        %3360 = vmatmul.mubr.bf16.gmra.mrb[0].mxu0 %v3216
        %v3361 = vpop.f32.mrb[0].mxu0
        %v3362 = vpop.f32.mrb[0].mxu0
        %v3363 = vpop.f32.mrb[0].mxu0
        %v3364 = vpop.f32.mrb[0].mxu0
        %3365 = vdwg.mxu0
        %v3366 = vadd.f32 %v3182, %v3256
        %v3367 = vadd.f32 %v3183, %v3259
        %v3368 = vadd.f32 %v3184, %v3270
        %v3369 = vadd.f32 %v3185, %v3273
        %v3370 = vadd.f32 %v3186, %v3284
        %v3371 = vadd.f32 %v3187, %v3287
        %v3372 = vadd.f32 %v3188, %v3298
        %v3373 = vadd.f32 %v3189, %v3301
        %v3374 = vadd.f32 %v3190, %v3312
        %v3375 = vadd.f32 %v3191, %v3315
        %v3376 = vadd.f32 %v3192, %v3326
        %v3377 = vadd.f32 %v3193, %v3329
        %v3378 = vadd.f32 %v3194, %v3340
        %v3379 = vadd.f32 %v3195, %v3343
        %v3380 = vadd.f32 %v3196, %v3354
        %v3381 = vadd.f32 %v3197, %v3357
        %v3382 = vld [vmem:[%s1437] sm:$0xf]
        %v3383 = vsel %vm278, %v2418, 0
        %v3385 = vsel %vm278, %v2419, 0
        %v3388 = vsel %vm523, %v3382, 0
        %3390 = vmatprep.subr.bf16.mxu0 0
        %3391 = vmatpush1.bf16.msra.mxu0 %v3388
        %3392 = vmatprep.subr.bf16.mxu0 0
        %3393 = vmatpush1.bf16.msra.mxu0 0
        %3394 = vmatprep.subr.bf16.mxu0 0
        %3395 = vmatpush1.bf16.msra.mxu0 0
        %3396 = vmatprep.subr.bf16.mxu0 0
        %3397 = vmatpush1.bf16.msra.mxu0 0
        %3398 = vmatprep.subr.bf16.mxu0 0
        %3399 = vmatpush1.bf16.msra.mxu0 0
        %3400 = vmatprep.subr.bf16.mxu0 0
        %3401 = vmatpush1.bf16.msra.mxu0 0
        %3402 = vmatprep.subr.bf16.mxu0 0
        %3403 = vmatpush1.bf16.msra.mxu0 0
        %3404 = vmatprep.subr.bf16.mxu0 0
        %3405 = vmatpush1.bf16.msra.mxu0 0
        %3406 = vmatprep.subr.bf16.mxu0 0
        %3407 = vmatpush1.bf16.msra.mxu0 0
        %3408 = vmatprep.subr.bf16.mxu0 0
        %3409 = vmatpush1.bf16.msra.mxu0 0
        %3410 = vmatprep.subr.bf16.mxu0 0
        %3411 = vmatpush1.bf16.msra.mxu0 0
        %3412 = vmatprep.subr.bf16.mxu0 0
        %3413 = vmatpush1.bf16.msra.mxu0 0
        %3414 = vmatprep.subr.bf16.mxu0 0
        %3415 = vmatpush1.bf16.msra.mxu0 0
        %3416 = vmatprep.subr.bf16.mxu0 0
        %3417 = vmatpush1.bf16.msra.mxu0 0
        %3418 = vmatprep.subr.bf16.mxu0 0
        %3419 = vmatpush1.bf16.msra.mxu0 0
        %3420 = vmatprep.subr.bf16.mxu0 0
        %3421 = vmatpush1.bf16.msra.mxu0 0
        %3422 = vmatprep.mubr.bf16.mxu0 0
        %3423 = vmatmul.mubr.bf16.gmra.mrb[0].mxu0 %v2432
        %v3424 = vpop.f32.mrb[0].mxu0
        %v3425 = vadd.f32 0.0, %v3424
        %v3426 = vpop.f32.mrb[0].mxu0
        %v3427 = vpop.f32.mrb[0].mxu0
        %v3428 = vadd.f32 0.0, %v3427
        %v3429 = vpop.f32.mrb[0].mxu0
        %3430 = vmatprep.mubr.bf16.mxu0 0
        %3431 = vmatmul.mubr.bf16.gmra.mrb[0].mxu0 %v2435
        %v3432 = vpop.f32.mrb[0].mxu0
        %v3433 = vpop.f32.mrb[0].mxu0
        %v3434 = vpop.f32.mrb[0].mxu0
        %v3435 = vpop.f32.mrb[0].mxu0
        %3436 = vmatprep.mubr.bf16.mxu0 0
        %3437 = vmatmul.mubr.bf16.gmra.mrb[0].mxu0 %v2438
        %v3438 = vpop.f32.mrb[0].mxu0
        %v3439 = vadd.f32 0.0, %v3438
        %v3440 = vpop.f32.mrb[0].mxu0
        %v3441 = vpop.f32.mrb[0].mxu0
        %v3442 = vadd.f32 0.0, %v3441
        %v3443 = vpop.f32.mrb[0].mxu0
        %3444 = vmatprep.mubr.bf16.mxu0 0
        %3445 = vmatmul.mubr.bf16.gmra.mrb[0].mxu0 %v2441
        %v3446 = vpop.f32.mrb[0].mxu0
        %v3447 = vpop.f32.mrb[0].mxu0
        %v3448 = vpop.f32.mrb[0].mxu0
        %v3449 = vpop.f32.mrb[0].mxu0
        %3450 = vmatprep.mubr.bf16.mxu0 0
        %3451 = vmatmul.mubr.bf16.gmra.mrb[0].mxu0 %v2444
        %v3452 = vpop.f32.mrb[0].mxu0
        %v3453 = vadd.f32 0.0, %v3452
        %v3454 = vpop.f32.mrb[0].mxu0
        %v3455 = vpop.f32.mrb[0].mxu0
        %v3456 = vadd.f32 0.0, %v3455
        %v3457 = vpop.f32.mrb[0].mxu0
        %3458 = vmatprep.mubr.bf16.mxu0 0
        %3459 = vmatmul.mubr.bf16.gmra.mrb[0].mxu0 %v2447
        %v3460 = vpop.f32.mrb[0].mxu0
        %v3461 = vpop.f32.mrb[0].mxu0
        %v3462 = vpop.f32.mrb[0].mxu0
        %v3463 = vpop.f32.mrb[0].mxu0
        %3464 = vmatprep.mubr.bf16.mxu0 0
        %3465 = vmatmul.mubr.bf16.gmra.mrb[0].mxu0 %v2450
        %v3466 = vpop.f32.mrb[0].mxu0
        %v3467 = vadd.f32 0.0, %v3466
        %v3468 = vpop.f32.mrb[0].mxu0
        %v3469 = vpop.f32.mrb[0].mxu0
        %v3470 = vadd.f32 0.0, %v3469
        %v3471 = vpop.f32.mrb[0].mxu0
        %3472 = vmatprep.mubr.bf16.mxu0 0
        %3473 = vmatmul.mubr.bf16.gmra.mrb[0].mxu0 %v2453
        %v3474 = vpop.f32.mrb[0].mxu0
        %v3475 = vpop.f32.mrb[0].mxu0
        %v3476 = vpop.f32.mrb[0].mxu0
        %v3477 = vpop.f32.mrb[0].mxu0
        %3478 = vmatprep.mubr.bf16.mxu0 0
        %3479 = vmatmul.mubr.bf16.gmra.mrb[0].mxu0 %v2456
        %v3480 = vpop.f32.mrb[0].mxu0
        %v3481 = vadd.f32 0.0, %v3480
        %v3482 = vpop.f32.mrb[0].mxu0
        %v3483 = vpop.f32.mrb[0].mxu0
        %v3484 = vadd.f32 0.0, %v3483
        %v3485 = vpop.f32.mrb[0].mxu0
        %3486 = vmatprep.mubr.bf16.mxu0 0
        %3487 = vmatmul.mubr.bf16.gmra.mrb[0].mxu0 %v2459
        %v3488 = vpop.f32.mrb[0].mxu0
        %v3489 = vpop.f32.mrb[0].mxu0
        %v3490 = vpop.f32.mrb[0].mxu0
        %v3491 = vpop.f32.mrb[0].mxu0
        %3492 = vmatprep.mubr.bf16.mxu0 0
        %3493 = vmatmul.mubr.bf16.gmra.mrb[0].mxu0 %v2462
        %v3494 = vpop.f32.mrb[0].mxu0
        %v3495 = vadd.f32 0.0, %v3494
        %v3496 = vpop.f32.mrb[0].mxu0
        %v3497 = vpop.f32.mrb[0].mxu0
        %v3498 = vadd.f32 0.0, %v3497
        %v3499 = vpop.f32.mrb[0].mxu0
        %3500 = vmatprep.mubr.bf16.mxu0 0
        %3501 = vmatmul.mubr.bf16.gmra.mrb[0].mxu0 %v2465
        %v3502 = vpop.f32.mrb[0].mxu0
        %v3503 = vpop.f32.mrb[0].mxu0
        %v3504 = vpop.f32.mrb[0].mxu0
        %v3505 = vpop.f32.mrb[0].mxu0
        %3506 = vmatprep.mubr.bf16.mxu0 0
        %3507 = vmatmul.mubr.bf16.gmra.mrb[0].mxu0 %v2468
        %v3508 = vpop.f32.mrb[0].mxu0
        %v3509 = vadd.f32 0.0, %v3508
        %v3510 = vpop.f32.mrb[0].mxu0
        %v3511 = vpop.f32.mrb[0].mxu0
        %v3512 = vadd.f32 0.0, %v3511
        %v3513 = vpop.f32.mrb[0].mxu0
        %3514 = vmatprep.mubr.bf16.mxu0 0
        %3515 = vmatmul.mubr.bf16.gmra.mrb[0].mxu0 %v2471
        %v3516 = vpop.f32.mrb[0].mxu0
        %v3517 = vpop.f32.mrb[0].mxu0
        %v3518 = vpop.f32.mrb[0].mxu0
        %v3519 = vpop.f32.mrb[0].mxu0
        %3520 = vmatprep.mubr.bf16.mxu0 0
        %3521 = vmatmul.mubr.bf16.gmra.mrb[0].mxu0 %v3383
        %v3522 = vpop.f32.mrb[0].mxu0
        %v3523 = vadd.f32 0.0, %v3522
        %v3524 = vpop.f32.mrb[0].mxu0
        %v3525 = vpop.f32.mrb[0].mxu0
        %v3526 = vadd.f32 0.0, %v3525
        %v3527 = vpop.f32.mrb[0].mxu0
        %3528 = vmatprep.mubr.bf16.mxu0 0
        %3529 = vmatmul.mubr.bf16.gmra.mrb[0].mxu0 %v3385
        %v3530 = vpop.f32.mrb[0].mxu0
        %v3531 = vpop.f32.mrb[0].mxu0
        %v3532 = vpop.f32.mrb[0].mxu0
        %v3533 = vpop.f32.mrb[0].mxu0
        %3534 = vdwg.mxu0
        %v3535 = vadd.f32 %v3366, %v3425
        %v3536 = vadd.f32 %v3367, %v3428
        %v3537 = vadd.f32 %v3368, %v3439
        %v3538 = vadd.f32 %v3369, %v3442
        %v3539 = vadd.f32 %v3370, %v3453
        %v3540 = vadd.f32 %v3371, %v3456
        %v3541 = vadd.f32 %v3372, %v3467
        %v3542 = vadd.f32 %v3373, %v3470
        %v3543 = vadd.f32 %v3374, %v3481
        %v3544 = vadd.f32 %v3375, %v3484
        %v3545 = vadd.f32 %v3376, %v3495
        %v3546 = vadd.f32 %v3377, %v3498
        %v3547 = vadd.f32 %v3378, %v3509
        %v3548 = vadd.f32 %v3379, %v3512
        %v3549 = vadd.f32 %v3380, %v3523
        %v3550 = vadd.f32 %v3381, %v3526
        %v3551 = vld [vmem:[%s1607] sm:$0xf]
        %v3552 = vor.u32 %v3199, %v2984
        %v3553 = vrot.slane %v3208, 1
        %v3554 = vsel %vm987, %v3552, %v3553
        %v3555 = vor.u32 %v3205, %v3553
        %v3557 = vshll.u32 %v2420, 16
        %v3559 = vrot.slane %v3557, 1
        %v3560 = vsel %vm987, %v3555, %v3559
        %v3562 = vsel %vm278, %v3554, 0
        %v3565 = vsel %vm278, %v3560, 0
        %v3568 = vsel %vm523, %v3551, 0
        %3570 = vmatprep.subr.bf16.mxu0 0
        %3571 = vmatpush1.bf16.msra.mxu0 %v3568
        %3572 = vmatprep.subr.bf16.mxu0 0
        %3573 = vmatpush1.bf16.msra.mxu0 0
        %3574 = vmatprep.subr.bf16.mxu0 0
        %3575 = vmatpush1.bf16.msra.mxu0 0
        %3576 = vmatprep.subr.bf16.mxu0 0
        %3577 = vmatpush1.bf16.msra.mxu0 0
        %3578 = vmatprep.subr.bf16.mxu0 0
        %3579 = vmatpush1.bf16.msra.mxu0 0
        %3580 = vmatprep.subr.bf16.mxu0 0
        %3581 = vmatpush1.bf16.msra.mxu0 0
        %3582 = vmatprep.subr.bf16.mxu0 0
        %3583 = vmatpush1.bf16.msra.mxu0 0
        %3584 = vmatprep.subr.bf16.mxu0 0
        %3585 = vmatpush1.bf16.msra.mxu0 0
        %3586 = vmatprep.subr.bf16.mxu0 0
        %3587 = vmatpush1.bf16.msra.mxu0 0
        %3588 = vmatprep.subr.bf16.mxu0 0
        %3589 = vmatpush1.bf16.msra.mxu0 0
        %3590 = vmatprep.subr.bf16.mxu0 0
        %3591 = vmatpush1.bf16.msra.mxu0 0
        %3592 = vmatprep.subr.bf16.mxu0 0
        %3593 = vmatpush1.bf16.msra.mxu0 0
        %3594 = vmatprep.subr.bf16.mxu0 0
        %3595 = vmatpush1.bf16.msra.mxu0 0
        %3596 = vmatprep.subr.bf16.mxu0 0
        %3597 = vmatpush1.bf16.msra.mxu0 0
        %3598 = vmatprep.subr.bf16.mxu0 0
        %3599 = vmatpush1.bf16.msra.mxu0 0
        %3600 = vmatprep.subr.bf16.mxu0 0
        %3601 = vmatpush1.bf16.msra.mxu0 0
        %3602 = vmatprep.mubr.bf16.mxu0 0
        %3603 = vmatmul.mubr.bf16.gmra.mrb[0].mxu0 %v2993
        %v3604 = vpop.f32.mrb[0].mxu0
        %v3605 = vadd.f32 0.0, %v3604
        %v3606 = vpop.f32.mrb[0].mxu0
        %v3607 = vpop.f32.mrb[0].mxu0
        %v3608 = vadd.f32 0.0, %v3607
        %v3609 = vpop.f32.mrb[0].mxu0
        %3610 = vmatprep.mubr.bf16.mxu0 0
        %3611 = vmatmul.mubr.bf16.gmra.mrb[0].mxu0 %v2996
        %v3612 = vpop.f32.mrb[0].mxu0
        %v3613 = vpop.f32.mrb[0].mxu0
        %v3614 = vpop.f32.mrb[0].mxu0
        %v3615 = vpop.f32.mrb[0].mxu0
        %3616 = vmatprep.mubr.bf16.mxu0 0
        %3617 = vmatmul.mubr.bf16.gmra.mrb[0].mxu0 %v2999
        %v3618 = vpop.f32.mrb[0].mxu0
        %v3619 = vadd.f32 0.0, %v3618
        %v3620 = vpop.f32.mrb[0].mxu0
        %v3621 = vpop.f32.mrb[0].mxu0
        %v3622 = vadd.f32 0.0, %v3621
        %v3623 = vpop.f32.mrb[0].mxu0
        %3624 = vmatprep.mubr.bf16.mxu0 0
        %3625 = vmatmul.mubr.bf16.gmra.mrb[0].mxu0 %v3002
        %v3626 = vpop.f32.mrb[0].mxu0
        %v3627 = vpop.f32.mrb[0].mxu0
        %v3628 = vpop.f32.mrb[0].mxu0
        %v3629 = vpop.f32.mrb[0].mxu0
        %3630 = vmatprep.mubr.bf16.mxu0 0
        %3631 = vmatmul.mubr.bf16.gmra.mrb[0].mxu0 %v3005
        %v3632 = vpop.f32.mrb[0].mxu0
        %v3633 = vadd.f32 0.0, %v3632
        %v3634 = vpop.f32.mrb[0].mxu0
        %v3635 = vpop.f32.mrb[0].mxu0
        %v3636 = vadd.f32 0.0, %v3635
        %v3637 = vpop.f32.mrb[0].mxu0
        %3638 = vmatprep.mubr.bf16.mxu0 0
        %3639 = vmatmul.mubr.bf16.gmra.mrb[0].mxu0 %v3008
        %v3640 = vpop.f32.mrb[0].mxu0
        %v3641 = vpop.f32.mrb[0].mxu0
        %v3642 = vpop.f32.mrb[0].mxu0
        %v3643 = vpop.f32.mrb[0].mxu0
        %3644 = vmatprep.mubr.bf16.mxu0 0
        %3645 = vmatmul.mubr.bf16.gmra.mrb[0].mxu0 %v3011
        %v3646 = vpop.f32.mrb[0].mxu0
        %v3647 = vadd.f32 0.0, %v3646
        %v3648 = vpop.f32.mrb[0].mxu0
        %v3649 = vpop.f32.mrb[0].mxu0
        %v3650 = vadd.f32 0.0, %v3649
        %v3651 = vpop.f32.mrb[0].mxu0
        %3652 = vmatprep.mubr.bf16.mxu0 0
        %3653 = vmatmul.mubr.bf16.gmra.mrb[0].mxu0 %v3014
        %v3654 = vpop.f32.mrb[0].mxu0
        %v3655 = vpop.f32.mrb[0].mxu0
        %v3656 = vpop.f32.mrb[0].mxu0
        %v3657 = vpop.f32.mrb[0].mxu0
        %3658 = vmatprep.mubr.bf16.mxu0 0
        %3659 = vmatmul.mubr.bf16.gmra.mrb[0].mxu0 %v3017
        %v3660 = vpop.f32.mrb[0].mxu0
        %v3661 = vadd.f32 0.0, %v3660
        %v3662 = vpop.f32.mrb[0].mxu0
        %v3663 = vpop.f32.mrb[0].mxu0
        %v3664 = vadd.f32 0.0, %v3663
        %v3665 = vpop.f32.mrb[0].mxu0
        %3666 = vmatprep.mubr.bf16.mxu0 0
        %3667 = vmatmul.mubr.bf16.gmra.mrb[0].mxu0 %v3020
        %v3668 = vpop.f32.mrb[0].mxu0
        %v3669 = vpop.f32.mrb[0].mxu0
        %v3670 = vpop.f32.mrb[0].mxu0
        %v3671 = vpop.f32.mrb[0].mxu0
        %3672 = vmatprep.mubr.bf16.mxu0 0
        %3673 = vmatmul.mubr.bf16.gmra.mrb[0].mxu0 %v3023
        %v3674 = vpop.f32.mrb[0].mxu0
        %v3675 = vadd.f32 0.0, %v3674
        %v3676 = vpop.f32.mrb[0].mxu0
        %v3677 = vpop.f32.mrb[0].mxu0
        %v3678 = vadd.f32 0.0, %v3677
        %v3679 = vpop.f32.mrb[0].mxu0
        %3680 = vmatprep.mubr.bf16.mxu0 0
        %3681 = vmatmul.mubr.bf16.gmra.mrb[0].mxu0 %v3026
        %v3682 = vpop.f32.mrb[0].mxu0
        %v3683 = vpop.f32.mrb[0].mxu0
        %v3684 = vpop.f32.mrb[0].mxu0
        %v3685 = vpop.f32.mrb[0].mxu0
        %3686 = vmatprep.mubr.bf16.mxu0 0
        %3687 = vmatmul.mubr.bf16.gmra.mrb[0].mxu0 %v3029
        %v3688 = vpop.f32.mrb[0].mxu0
        %v3689 = vadd.f32 0.0, %v3688
        %v3690 = vpop.f32.mrb[0].mxu0
        %v3691 = vpop.f32.mrb[0].mxu0
        %v3692 = vadd.f32 0.0, %v3691
        %v3693 = vpop.f32.mrb[0].mxu0
        %3694 = vmatprep.mubr.bf16.mxu0 0
        %3695 = vmatmul.mubr.bf16.gmra.mrb[0].mxu0 %v3032
        %v3696 = vpop.f32.mrb[0].mxu0
        %v3697 = vpop.f32.mrb[0].mxu0
        %v3698 = vpop.f32.mrb[0].mxu0
        %v3699 = vpop.f32.mrb[0].mxu0
        %3700 = vmatprep.mubr.bf16.mxu0 0
        %3701 = vmatmul.mubr.bf16.gmra.mrb[0].mxu0 %v3562
        %v3702 = vpop.f32.mrb[0].mxu0
        %v3703 = vadd.f32 0.0, %v3702
        %v3704 = vpop.f32.mrb[0].mxu0
        %v3705 = vpop.f32.mrb[0].mxu0
        %v3706 = vadd.f32 0.0, %v3705
        %v3707 = vpop.f32.mrb[0].mxu0
        %3708 = vmatprep.mubr.bf16.mxu0 0
        %3709 = vmatmul.mubr.bf16.gmra.mrb[0].mxu0 %v3565
        %v3710 = vpop.f32.mrb[0].mxu0
        %v3711 = vpop.f32.mrb[0].mxu0
        %v3712 = vpop.f32.mrb[0].mxu0
        %v3713 = vpop.f32.mrb[0].mxu0
        %3714 = vdwg.mxu0
        %v3715 = vadd.f32 %v3535, %v3605
        %v3716 = vadd.f32 %v3536, %v3608
        %v3717 = vadd.f32 %v3537, %v3619
        %v3718 = vadd.f32 %v3538, %v3622
        %v3719 = vadd.f32 %v3539, %v3633
        %v3720 = vadd.f32 %v3540, %v3636
        %v3721 = vadd.f32 %v3541, %v3647
        %v3722 = vadd.f32 %v3542, %v3650
        %v3723 = vadd.f32 %v3543, %v3661
        %v3724 = vadd.f32 %v3544, %v3664
        %v3725 = vadd.f32 %v3545, %v3675
        %v3726 = vadd.f32 %v3546, %v3678
        %v3727 = vadd.f32 %v3547, %v3689
        %v3728 = vadd.f32 %v3548, %v3692
        %v3729 = vadd.f32 %v3549, %v3703
        %v3730 = vadd.f32 %v3550, %v3706
        %v3731 = vld [vmem:[%s1788] sm:$0xf]
        %v3732 = vshrl.u32 %v2420, 16
        %v3734 = vrot.slane %v3732, 7
        %v3735 = vor.u32 %v3734, %v3557
        %v3736 = vsel %vm672, %v3207, %v3735
        %v3738 = vshrl.u32 %v2421, 16
        %v3740 = vrot.slane %v3738, 7
        %v3741 = vshll.u32 %v2421, 16
        %v3743 = vor.u32 %v3740, %v3741
        %v3744 = vsel %vm672, %v3734, %v3743
        %v3746 = vsel %vm278, %v3736, 0
        %v3749 = vsel %vm278, %v3744, 0
        %v3752 = vsel %vm523, %v3731, 0
        %3754 = vmatprep.subr.bf16.mxu0 0
        %3755 = vmatpush1.bf16.msra.mxu0 %v3752
        %3756 = vmatprep.subr.bf16.mxu0 0
        %3757 = vmatpush1.bf16.msra.mxu0 0
        %3758 = vmatprep.subr.bf16.mxu0 0
        %3759 = vmatpush1.bf16.msra.mxu0 0
        %3760 = vmatprep.subr.bf16.mxu0 0
        %3761 = vmatpush1.bf16.msra.mxu0 0
        %3762 = vmatprep.subr.bf16.mxu0 0
        %3763 = vmatpush1.bf16.msra.mxu0 0
        %3764 = vmatprep.subr.bf16.mxu0 0
        %3765 = vmatpush1.bf16.msra.mxu0 0
        %3766 = vmatprep.subr.bf16.mxu0 0
        %3767 = vmatpush1.bf16.msra.mxu0 0
        %3768 = vmatprep.subr.bf16.mxu0 0
        %3769 = vmatpush1.bf16.msra.mxu0 0
        %3770 = vmatprep.subr.bf16.mxu0 0
        %3771 = vmatpush1.bf16.msra.mxu0 0
        %3772 = vmatprep.subr.bf16.mxu0 0
        %3773 = vmatpush1.bf16.msra.mxu0 0
        %3774 = vmatprep.subr.bf16.mxu0 0
        %3775 = vmatpush1.bf16.msra.mxu0 0
        %3776 = vmatprep.subr.bf16.mxu0 0
        %3777 = vmatpush1.bf16.msra.mxu0 0
        %3778 = vmatprep.subr.bf16.mxu0 0
        %3779 = vmatpush1.bf16.msra.mxu0 0
        %3780 = vmatprep.subr.bf16.mxu0 0
        %3781 = vmatpush1.bf16.msra.mxu0 0
        %3782 = vmatprep.subr.bf16.mxu0 0
        %3783 = vmatpush1.bf16.msra.mxu0 0
        %3784 = vmatprep.subr.bf16.mxu0 0
        %3785 = vmatpush1.bf16.msra.mxu0 0
        %3786 = vmatprep.mubr.bf16.mxu0 0
        %3787 = vmatmul.mubr.bf16.gmra.mrb[0].mxu0 %v2750
        %v3788 = vpop.f32.mrb[0].mxu0
        %v3789 = vadd.f32 0.0, %v3788
        %v3790 = vpop.f32.mrb[0].mxu0
        %v3791 = vpop.f32.mrb[0].mxu0
        %v3792 = vadd.f32 0.0, %v3791
        %v3793 = vpop.f32.mrb[0].mxu0
        %3794 = vmatprep.mubr.bf16.mxu0 0
        %3795 = vmatmul.mubr.bf16.gmra.mrb[0].mxu0 %v2753
        %v3796 = vpop.f32.mrb[0].mxu0
        %v3797 = vpop.f32.mrb[0].mxu0
        %v3798 = vpop.f32.mrb[0].mxu0
        %v3799 = vpop.f32.mrb[0].mxu0
        %3800 = vmatprep.mubr.bf16.mxu0 0
        %3801 = vmatmul.mubr.bf16.gmra.mrb[0].mxu0 %v2756
        %v3802 = vpop.f32.mrb[0].mxu0
        %v3803 = vadd.f32 0.0, %v3802
        %v3804 = vpop.f32.mrb[0].mxu0
        %v3805 = vpop.f32.mrb[0].mxu0
        %v3806 = vadd.f32 0.0, %v3805
        %v3807 = vpop.f32.mrb[0].mxu0
        %3808 = vmatprep.mubr.bf16.mxu0 0
        %3809 = vmatmul.mubr.bf16.gmra.mrb[0].mxu0 %v2759
        %v3810 = vpop.f32.mrb[0].mxu0
        %v3811 = vpop.f32.mrb[0].mxu0
        %v3812 = vpop.f32.mrb[0].mxu0
        %v3813 = vpop.f32.mrb[0].mxu0
        %3814 = vmatprep.mubr.bf16.mxu0 0
        %3815 = vmatmul.mubr.bf16.gmra.mrb[0].mxu0 %v2762
        %v3816 = vpop.f32.mrb[0].mxu0
        %v3817 = vadd.f32 0.0, %v3816
        %v3818 = vpop.f32.mrb[0].mxu0
        %v3819 = vpop.f32.mrb[0].mxu0
        %v3820 = vadd.f32 0.0, %v3819
        %v3821 = vpop.f32.mrb[0].mxu0
        %3822 = vmatprep.mubr.bf16.mxu0 0
        %3823 = vmatmul.mubr.bf16.gmra.mrb[0].mxu0 %v2765
        %v3824 = vpop.f32.mrb[0].mxu0
        %v3825 = vpop.f32.mrb[0].mxu0
        %v3826 = vpop.f32.mrb[0].mxu0
        %v3827 = vpop.f32.mrb[0].mxu0
        %3828 = vmatprep.mubr.bf16.mxu0 0
        %3829 = vmatmul.mubr.bf16.gmra.mrb[0].mxu0 %v2768
        %v3830 = vpop.f32.mrb[0].mxu0
        %v3831 = vadd.f32 0.0, %v3830
        %v3832 = vpop.f32.mrb[0].mxu0
        %v3833 = vpop.f32.mrb[0].mxu0
        %v3834 = vadd.f32 0.0, %v3833
        %v3835 = vpop.f32.mrb[0].mxu0
        %3836 = vmatprep.mubr.bf16.mxu0 0
        %3837 = vmatmul.mubr.bf16.gmra.mrb[0].mxu0 %v2771
        %v3838 = vpop.f32.mrb[0].mxu0
        %v3839 = vpop.f32.mrb[0].mxu0
        %v3840 = vpop.f32.mrb[0].mxu0
        %v3841 = vpop.f32.mrb[0].mxu0
        %3842 = vmatprep.mubr.bf16.mxu0 0
        %3843 = vmatmul.mubr.bf16.gmra.mrb[0].mxu0 %v2774
        %v3844 = vpop.f32.mrb[0].mxu0
        %v3845 = vadd.f32 0.0, %v3844
        %v3846 = vpop.f32.mrb[0].mxu0
        %v3847 = vpop.f32.mrb[0].mxu0
        %v3848 = vadd.f32 0.0, %v3847
        %v3849 = vpop.f32.mrb[0].mxu0
        %3850 = vmatprep.mubr.bf16.mxu0 0
        %3851 = vmatmul.mubr.bf16.gmra.mrb[0].mxu0 %v2777
        %v3852 = vpop.f32.mrb[0].mxu0
        %v3853 = vpop.f32.mrb[0].mxu0
        %v3854 = vpop.f32.mrb[0].mxu0
        %v3855 = vpop.f32.mrb[0].mxu0
        %3856 = vmatprep.mubr.bf16.mxu0 0
        %3857 = vmatmul.mubr.bf16.gmra.mrb[0].mxu0 %v2780
        %v3858 = vpop.f32.mrb[0].mxu0
        %v3859 = vadd.f32 0.0, %v3858
        %v3860 = vpop.f32.mrb[0].mxu0
        %v3861 = vpop.f32.mrb[0].mxu0
        %v3862 = vadd.f32 0.0, %v3861
        %v3863 = vpop.f32.mrb[0].mxu0
        %3864 = vmatprep.mubr.bf16.mxu0 0
        %3865 = vmatmul.mubr.bf16.gmra.mrb[0].mxu0 %v2783
        %v3866 = vpop.f32.mrb[0].mxu0
        %v3867 = vpop.f32.mrb[0].mxu0
        %v3868 = vpop.f32.mrb[0].mxu0
        %v3869 = vpop.f32.mrb[0].mxu0
        %3870 = vmatprep.mubr.bf16.mxu0 0
        %3871 = vmatmul.mubr.bf16.gmra.mrb[0].mxu0 %v3213
        %v3872 = vpop.f32.mrb[0].mxu0
        %v3873 = vadd.f32 0.0, %v3872
        %v3874 = vpop.f32.mrb[0].mxu0
        %v3875 = vpop.f32.mrb[0].mxu0
        %v3876 = vadd.f32 0.0, %v3875
        %v3877 = vpop.f32.mrb[0].mxu0
        %3878 = vmatprep.mubr.bf16.mxu0 0
        %3879 = vmatmul.mubr.bf16.gmra.mrb[0].mxu0 %v3216
        %v3880 = vpop.f32.mrb[0].mxu0
        %v3881 = vpop.f32.mrb[0].mxu0
        %v3882 = vpop.f32.mrb[0].mxu0
        %v3883 = vpop.f32.mrb[0].mxu0
        %3884 = vmatprep.mubr.bf16.mxu0 0
        %3885 = vmatmul.mubr.bf16.gmra.mrb[0].mxu0 %v3746
        %v3886 = vpop.f32.mrb[0].mxu0
        %v3887 = vadd.f32 0.0, %v3886
        %v3888 = vpop.f32.mrb[0].mxu0
        %v3889 = vpop.f32.mrb[0].mxu0
        %v3890 = vadd.f32 0.0, %v3889
        %v3891 = vpop.f32.mrb[0].mxu0
        %3892 = vmatprep.mubr.bf16.mxu0 0
        %3893 = vmatmul.mubr.bf16.gmra.mrb[0].mxu0 %v3749
        %v3894 = vpop.f32.mrb[0].mxu0
        %v3895 = vpop.f32.mrb[0].mxu0
        %v3896 = vpop.f32.mrb[0].mxu0
        %v3897 = vpop.f32.mrb[0].mxu0
        %3898 = vdwg.mxu0
        %v3899 = vadd.f32 %v3715, %v3789
        %v3900 = vadd.f32 %v3716, %v3792
        %v3901 = vadd.f32 %v3717, %v3803
        %v3902 = vadd.f32 %v3718, %v3806
        %v3903 = vadd.f32 %v3719, %v3817
        %v3904 = vadd.f32 %v3720, %v3820
        %v3905 = vadd.f32 %v3721, %v3831
        %v3906 = vadd.f32 %v3722, %v3834
        %v3907 = vadd.f32 %v3723, %v3845
        %v3908 = vadd.f32 %v3724, %v3848
        %v3909 = vadd.f32 %v3725, %v3859
        %v3910 = vadd.f32 %v3726, %v3862
        %v3911 = vadd.f32 %v3727, %v3873
        %v3912 = vadd.f32 %v3728, %v3876
        %v3913 = vadd.f32 %v3729, %v3887
        %v3914 = vadd.f32 %v3730, %v3890
        %v3915 = vld [vmem:[%s1973] sm:$0xf]
        %v3916 = vsel %vm278, %v2420, 0
        %v3918 = vsel %vm278, %v2421, 0
        %v3921 = vsel %vm523, %v3915, 0
        %3923 = vmatprep.subr.bf16.mxu0 0
        %3924 = vmatpush1.bf16.msra.mxu0 %v3921
        %3925 = vmatprep.subr.bf16.mxu0 0
        %3926 = vmatpush1.bf16.msra.mxu0 0
        %3927 = vmatprep.subr.bf16.mxu0 0
        %3928 = vmatpush1.bf16.msra.mxu0 0
        %3929 = vmatprep.subr.bf16.mxu0 0
        %3930 = vmatpush1.bf16.msra.mxu0 0
        %3931 = vmatprep.subr.bf16.mxu0 0
        %3932 = vmatpush1.bf16.msra.mxu0 0
        %3933 = vmatprep.subr.bf16.mxu0 0
        %3934 = vmatpush1.bf16.msra.mxu0 0
        %3935 = vmatprep.subr.bf16.mxu0 0
        %3936 = vmatpush1.bf16.msra.mxu0 0
        %3937 = vmatprep.subr.bf16.mxu0 0
        %3938 = vmatpush1.bf16.msra.mxu0 0
        %3939 = vmatprep.subr.bf16.mxu0 0
        %3940 = vmatpush1.bf16.msra.mxu0 0
        %3941 = vmatprep.subr.bf16.mxu0 0
        %3942 = vmatpush1.bf16.msra.mxu0 0
        %3943 = vmatprep.subr.bf16.mxu0 0
        %3944 = vmatpush1.bf16.msra.mxu0 0
        %3945 = vmatprep.subr.bf16.mxu0 0
        %3946 = vmatpush1.bf16.msra.mxu0 0
        %3947 = vmatprep.subr.bf16.mxu0 0
        %3948 = vmatpush1.bf16.msra.mxu0 0
        %3949 = vmatprep.subr.bf16.mxu0 0
        %3950 = vmatpush1.bf16.msra.mxu0 0
        %3951 = vmatprep.subr.bf16.mxu0 0
        %3952 = vmatpush1.bf16.msra.mxu0 0
        %3953 = vmatprep.subr.bf16.mxu0 0
        %3954 = vmatpush1.bf16.msra.mxu0 0
        %3955 = vmatprep.mubr.bf16.mxu0 0
        %3956 = vmatmul.mubr.bf16.gmra.mrb[0].mxu0 %v2438
        %v3957 = vpop.f32.mrb[0].mxu0
        %v3958 = vadd.f32 0.0, %v3957
        %v3959 = vpop.f32.mrb[0].mxu0
        %v3960 = vpop.f32.mrb[0].mxu0
        %v3961 = vadd.f32 0.0, %v3960
        %v3962 = vpop.f32.mrb[0].mxu0
        %3963 = vmatprep.mubr.bf16.mxu0 0
        %3964 = vmatmul.mubr.bf16.gmra.mrb[0].mxu0 %v2441
        %v3965 = vpop.f32.mrb[0].mxu0
        %v3966 = vpop.f32.mrb[0].mxu0
        %v3967 = vpop.f32.mrb[0].mxu0
        %v3968 = vpop.f32.mrb[0].mxu0
        %3969 = vmatprep.mubr.bf16.mxu0 0
        %3970 = vmatmul.mubr.bf16.gmra.mrb[0].mxu0 %v2444
        %v3971 = vpop.f32.mrb[0].mxu0
        %v3972 = vadd.f32 0.0, %v3971
        %v3973 = vpop.f32.mrb[0].mxu0
        %v3974 = vpop.f32.mrb[0].mxu0
        %v3975 = vadd.f32 0.0, %v3974
        %v3976 = vpop.f32.mrb[0].mxu0
        %3977 = vmatprep.mubr.bf16.mxu0 0
        %3978 = vmatmul.mubr.bf16.gmra.mrb[0].mxu0 %v2447
        %v3979 = vpop.f32.mrb[0].mxu0
        %v3980 = vpop.f32.mrb[0].mxu0
        %v3981 = vpop.f32.mrb[0].mxu0
        %v3982 = vpop.f32.mrb[0].mxu0
        %3983 = vmatprep.mubr.bf16.mxu0 0
        %3984 = vmatmul.mubr.bf16.gmra.mrb[0].mxu0 %v2450
        %v3985 = vpop.f32.mrb[0].mxu0
        %v3986 = vadd.f32 0.0, %v3985
        %v3987 = vpop.f32.mrb[0].mxu0
        %v3988 = vpop.f32.mrb[0].mxu0
        %v3989 = vadd.f32 0.0, %v3988
        %v3990 = vpop.f32.mrb[0].mxu0
        %3991 = vmatprep.mubr.bf16.mxu0 0
        %3992 = vmatmul.mubr.bf16.gmra.mrb[0].mxu0 %v2453
        %v3993 = vpop.f32.mrb[0].mxu0
        %v3994 = vpop.f32.mrb[0].mxu0
        %v3995 = vpop.f32.mrb[0].mxu0
        %v3996 = vpop.f32.mrb[0].mxu0
        %3997 = vmatprep.mubr.bf16.mxu0 0
        %3998 = vmatmul.mubr.bf16.gmra.mrb[0].mxu0 %v2456
        %v3999 = vpop.f32.mrb[0].mxu0
        %v4000 = vadd.f32 0.0, %v3999
        %v4001 = vpop.f32.mrb[0].mxu0
        %v4002 = vpop.f32.mrb[0].mxu0
        %v4003 = vadd.f32 0.0, %v4002
        %v4004 = vpop.f32.mrb[0].mxu0
        %4005 = vmatprep.mubr.bf16.mxu0 0
        %4006 = vmatmul.mubr.bf16.gmra.mrb[0].mxu0 %v2459
        %v4007 = vpop.f32.mrb[0].mxu0
        %v4008 = vpop.f32.mrb[0].mxu0
        %v4009 = vpop.f32.mrb[0].mxu0
        %v4010 = vpop.f32.mrb[0].mxu0
        %4011 = vmatprep.mubr.bf16.mxu0 0
        %4012 = vmatmul.mubr.bf16.gmra.mrb[0].mxu0 %v2462
        %v4013 = vpop.f32.mrb[0].mxu0
        %v4014 = vadd.f32 0.0, %v4013
        %v4015 = vpop.f32.mrb[0].mxu0
        %v4016 = vpop.f32.mrb[0].mxu0
        %v4017 = vadd.f32 0.0, %v4016
        %v4018 = vpop.f32.mrb[0].mxu0
        %4019 = vmatprep.mubr.bf16.mxu0 0
        %4020 = vmatmul.mubr.bf16.gmra.mrb[0].mxu0 %v2465
        %v4021 = vpop.f32.mrb[0].mxu0
        %v4022 = vpop.f32.mrb[0].mxu0
        %v4023 = vpop.f32.mrb[0].mxu0
        %v4024 = vpop.f32.mrb[0].mxu0
        %4025 = vmatprep.mubr.bf16.mxu0 0
        %4026 = vmatmul.mubr.bf16.gmra.mrb[0].mxu0 %v2468
        %v4027 = vpop.f32.mrb[0].mxu0
        %v4028 = vadd.f32 0.0, %v4027
        %v4029 = vpop.f32.mrb[0].mxu0
        %v4030 = vpop.f32.mrb[0].mxu0
        %v4031 = vadd.f32 0.0, %v4030
        %v4032 = vpop.f32.mrb[0].mxu0
        %4033 = vmatprep.mubr.bf16.mxu0 0
        %4034 = vmatmul.mubr.bf16.gmra.mrb[0].mxu0 %v2471
        %v4035 = vpop.f32.mrb[0].mxu0
        %v4036 = vpop.f32.mrb[0].mxu0
        %v4037 = vpop.f32.mrb[0].mxu0
        %v4038 = vpop.f32.mrb[0].mxu0
        %4039 = vmatprep.mubr.bf16.mxu0 0
        %4040 = vmatmul.mubr.bf16.gmra.mrb[0].mxu0 %v3383
        %v4041 = vpop.f32.mrb[0].mxu0
        %v4042 = vadd.f32 0.0, %v4041
        %v4043 = vpop.f32.mrb[0].mxu0
        %v4044 = vpop.f32.mrb[0].mxu0
        %v4045 = vadd.f32 0.0, %v4044
        %v4046 = vpop.f32.mrb[0].mxu0
        %4047 = vmatprep.mubr.bf16.mxu0 0
        %4048 = vmatmul.mubr.bf16.gmra.mrb[0].mxu0 %v3385
        %v4049 = vpop.f32.mrb[0].mxu0
        %v4050 = vpop.f32.mrb[0].mxu0
        %v4051 = vpop.f32.mrb[0].mxu0
        %v4052 = vpop.f32.mrb[0].mxu0
        %4053 = vmatprep.mubr.bf16.mxu0 0
        %4054 = vmatmul.mubr.bf16.gmra.mrb[0].mxu0 %v3916
        %v4055 = vpop.f32.mrb[0].mxu0
        %v4056 = vadd.f32 0.0, %v4055
        %v4057 = vpop.f32.mrb[0].mxu0
        %v4058 = vpop.f32.mrb[0].mxu0
        %v4059 = vadd.f32 0.0, %v4058
        %v4060 = vpop.f32.mrb[0].mxu0
        %4061 = vmatprep.mubr.bf16.mxu0 0
        %4062 = vmatmul.mubr.bf16.gmra.mrb[0].mxu0 %v3918
        %v4063 = vpop.f32.mrb[0].mxu0
        %v4064 = vpop.f32.mrb[0].mxu0
        %v4065 = vpop.f32.mrb[0].mxu0
        %v4066 = vpop.f32.mrb[0].mxu0
        %4067 = vdwg.mxu0
        %v4068 = vadd.f32 %v3899, %v3958
        %v4069 = vadd.f32 %v3900, %v3961
        %v4070 = vadd.f32 %v3901, %v3972
        %v4071 = vadd.f32 %v3902, %v3975
        %v4072 = vadd.f32 %v3903, %v3986
        %v4073 = vadd.f32 %v3904, %v3989
        %v4074 = vadd.f32 %v3905, %v4000
        %v4075 = vadd.f32 %v3906, %v4003
        %v4076 = vadd.f32 %v3907, %v4014
        %v4077 = vadd.f32 %v3908, %v4017
        %v4078 = vadd.f32 %v3909, %v4028
        %v4079 = vadd.f32 %v3910, %v4031
        %v4080 = vadd.f32 %v3911, %v4042
        %v4081 = vadd.f32 %v3912, %v4045
        %v4082 = vadd.f32 %v3913, %v4056
        %v4083 = vadd.f32 %v3914, %v4059
        %v4084 = vld [vmem:[%s2143] sm:$0xf]
        %v4085 = vor.u32 %v3732, %v3559
        %v4086 = vrot.slane %v3741, 1
        %v4087 = vsel %vm987, %v4085, %v4086
        %v4088 = vor.u32 %v3738, %v4086
        %v4090 = vshll.u32 %v2422, 16
        %v4092 = vrot.slane %v4090, 1
        %v4093 = vsel %vm987, %v4088, %v4092
        %v4095 = vsel %vm278, %v4087, 0
        %v4098 = vsel %vm278, %v4093, 0
        %v4101 = vsel %vm523, %v4084, 0
        %4103 = vmatprep.subr.bf16.mxu0 0
        %4104 = vmatpush1.bf16.msra.mxu0 %v4101
        %4105 = vmatprep.subr.bf16.mxu0 0
        %4106 = vmatpush1.bf16.msra.mxu0 0
        %4107 = vmatprep.subr.bf16.mxu0 0
        %4108 = vmatpush1.bf16.msra.mxu0 0
        %4109 = vmatprep.subr.bf16.mxu0 0
        %4110 = vmatpush1.bf16.msra.mxu0 0
        %4111 = vmatprep.subr.bf16.mxu0 0
        %4112 = vmatpush1.bf16.msra.mxu0 0
        %4113 = vmatprep.subr.bf16.mxu0 0
        %4114 = vmatpush1.bf16.msra.mxu0 0
        %4115 = vmatprep.subr.bf16.mxu0 0
        %4116 = vmatpush1.bf16.msra.mxu0 0
        %4117 = vmatprep.subr.bf16.mxu0 0
        %4118 = vmatpush1.bf16.msra.mxu0 0
        %4119 = vmatprep.subr.bf16.mxu0 0
        %4120 = vmatpush1.bf16.msra.mxu0 0
        %4121 = vmatprep.subr.bf16.mxu0 0
        %4122 = vmatpush1.bf16.msra.mxu0 0
        %4123 = vmatprep.subr.bf16.mxu0 0
        %4124 = vmatpush1.bf16.msra.mxu0 0
        %4125 = vmatprep.subr.bf16.mxu0 0
        %4126 = vmatpush1.bf16.msra.mxu0 0
        %4127 = vmatprep.subr.bf16.mxu0 0
        %4128 = vmatpush1.bf16.msra.mxu0 0
        %4129 = vmatprep.subr.bf16.mxu0 0
        %4130 = vmatpush1.bf16.msra.mxu0 0
        %4131 = vmatprep.subr.bf16.mxu0 0
        %4132 = vmatpush1.bf16.msra.mxu0 0
        %4133 = vmatprep.subr.bf16.mxu0 0
        %4134 = vmatpush1.bf16.msra.mxu0 0
        %4135 = vmatprep.mubr.bf16.mxu0 0
        %4136 = vmatmul.mubr.bf16.gmra.mrb[0].mxu0 %v2999
        %v4137 = vpop.f32.mrb[0].mxu0
        %v4138 = vadd.f32 0.0, %v4137
        %v4139 = vpop.f32.mrb[0].mxu0
        %v4140 = vpop.f32.mrb[0].mxu0
        %v4141 = vadd.f32 0.0, %v4140
        %v4142 = vpop.f32.mrb[0].mxu0
        %4143 = vmatprep.mubr.bf16.mxu0 0
        %4144 = vmatmul.mubr.bf16.gmra.mrb[0].mxu0 %v3002
        %v4145 = vpop.f32.mrb[0].mxu0
        %v4146 = vpop.f32.mrb[0].mxu0
        %v4147 = vpop.f32.mrb[0].mxu0
        %v4148 = vpop.f32.mrb[0].mxu0
        %4149 = vmatprep.mubr.bf16.mxu0 0
        %4150 = vmatmul.mubr.bf16.gmra.mrb[0].mxu0 %v3005
        %v4151 = vpop.f32.mrb[0].mxu0
        %v4152 = vadd.f32 0.0, %v4151
        %v4153 = vpop.f32.mrb[0].mxu0
        %v4154 = vpop.f32.mrb[0].mxu0
        %v4155 = vadd.f32 0.0, %v4154
        %v4156 = vpop.f32.mrb[0].mxu0
        %4157 = vmatprep.mubr.bf16.mxu0 0
        %4158 = vmatmul.mubr.bf16.gmra.mrb[0].mxu0 %v3008
        %v4159 = vpop.f32.mrb[0].mxu0
        %v4160 = vpop.f32.mrb[0].mxu0
        %v4161 = vpop.f32.mrb[0].mxu0
        %v4162 = vpop.f32.mrb[0].mxu0
        %4163 = vmatprep.mubr.bf16.mxu0 0
        %4164 = vmatmul.mubr.bf16.gmra.mrb[0].mxu0 %v3011
        %v4165 = vpop.f32.mrb[0].mxu0
        %v4166 = vadd.f32 0.0, %v4165
        %v4167 = vpop.f32.mrb[0].mxu0
        %v4168 = vpop.f32.mrb[0].mxu0
        %v4169 = vadd.f32 0.0, %v4168
        %v4170 = vpop.f32.mrb[0].mxu0
        %4171 = vmatprep.mubr.bf16.mxu0 0
        %4172 = vmatmul.mubr.bf16.gmra.mrb[0].mxu0 %v3014
        %v4173 = vpop.f32.mrb[0].mxu0
        %v4174 = vpop.f32.mrb[0].mxu0
        %v4175 = vpop.f32.mrb[0].mxu0
        %v4176 = vpop.f32.mrb[0].mxu0
        %4177 = vmatprep.mubr.bf16.mxu0 0
        %4178 = vmatmul.mubr.bf16.gmra.mrb[0].mxu0 %v3017
        %v4179 = vpop.f32.mrb[0].mxu0
        %v4180 = vadd.f32 0.0, %v4179
        %v4181 = vpop.f32.mrb[0].mxu0
        %v4182 = vpop.f32.mrb[0].mxu0
        %v4183 = vadd.f32 0.0, %v4182
        %v4184 = vpop.f32.mrb[0].mxu0
        %4185 = vmatprep.mubr.bf16.mxu0 0
        %4186 = vmatmul.mubr.bf16.gmra.mrb[0].mxu0 %v3020
        %v4187 = vpop.f32.mrb[0].mxu0
        %v4188 = vpop.f32.mrb[0].mxu0
        %v4189 = vpop.f32.mrb[0].mxu0
        %v4190 = vpop.f32.mrb[0].mxu0
        %4191 = vmatprep.mubr.bf16.mxu0 0
        %4192 = vmatmul.mubr.bf16.gmra.mrb[0].mxu0 %v3023
        %v4193 = vpop.f32.mrb[0].mxu0
        %v4194 = vadd.f32 0.0, %v4193
        %v4195 = vpop.f32.mrb[0].mxu0
        %v4196 = vpop.f32.mrb[0].mxu0
        %v4197 = vadd.f32 0.0, %v4196
        %v4198 = vpop.f32.mrb[0].mxu0
        %4199 = vmatprep.mubr.bf16.mxu0 0
        %4200 = vmatmul.mubr.bf16.gmra.mrb[0].mxu0 %v3026
        %v4201 = vpop.f32.mrb[0].mxu0
        %v4202 = vpop.f32.mrb[0].mxu0
        %v4203 = vpop.f32.mrb[0].mxu0
        %v4204 = vpop.f32.mrb[0].mxu0
        %4205 = vmatprep.mubr.bf16.mxu0 0
        %4206 = vmatmul.mubr.bf16.gmra.mrb[0].mxu0 %v3029
        %v4207 = vpop.f32.mrb[0].mxu0
        %v4208 = vadd.f32 0.0, %v4207
        %v4209 = vpop.f32.mrb[0].mxu0
        %v4210 = vpop.f32.mrb[0].mxu0
        %v4211 = vadd.f32 0.0, %v4210
        %v4212 = vpop.f32.mrb[0].mxu0
        %4213 = vmatprep.mubr.bf16.mxu0 0
        %4214 = vmatmul.mubr.bf16.gmra.mrb[0].mxu0 %v3032
        %v4215 = vpop.f32.mrb[0].mxu0
        %v4216 = vpop.f32.mrb[0].mxu0
        %v4217 = vpop.f32.mrb[0].mxu0
        %v4218 = vpop.f32.mrb[0].mxu0
        %4219 = vmatprep.mubr.bf16.mxu0 0
        %4220 = vmatmul.mubr.bf16.gmra.mrb[0].mxu0 %v3562
        %v4221 = vpop.f32.mrb[0].mxu0
        %v4222 = vadd.f32 0.0, %v4221
        %v4223 = vpop.f32.mrb[0].mxu0
        %v4224 = vpop.f32.mrb[0].mxu0
        %v4225 = vadd.f32 0.0, %v4224
        %v4226 = vpop.f32.mrb[0].mxu0
        %4227 = vmatprep.mubr.bf16.mxu0 0
        %4228 = vmatmul.mubr.bf16.gmra.mrb[0].mxu0 %v3565
        %v4229 = vpop.f32.mrb[0].mxu0
        %v4230 = vpop.f32.mrb[0].mxu0
        %v4231 = vpop.f32.mrb[0].mxu0
        %v4232 = vpop.f32.mrb[0].mxu0
        %4233 = vmatprep.mubr.bf16.mxu0 0
        %4234 = vmatmul.mubr.bf16.gmra.mrb[0].mxu0 %v4095
        %v4235 = vpop.f32.mrb[0].mxu0
        %v4236 = vadd.f32 0.0, %v4235
        %v4237 = vpop.f32.mrb[0].mxu0
        %v4238 = vpop.f32.mrb[0].mxu0
        %v4239 = vadd.f32 0.0, %v4238
        %v4240 = vpop.f32.mrb[0].mxu0
        %4241 = vmatprep.mubr.bf16.mxu0 0
        %4242 = vmatmul.mubr.bf16.gmra.mrb[0].mxu0 %v4098
        %v4243 = vpop.f32.mrb[0].mxu0
        %v4244 = vpop.f32.mrb[0].mxu0
        %v4245 = vpop.f32.mrb[0].mxu0
        %v4246 = vpop.f32.mrb[0].mxu0
        %4247 = vdwg.mxu0
        %v4248 = vadd.f32 %v4068, %v4138
        %v4249 = vadd.f32 %v4069, %v4141
        %v4250 = vadd.f32 %v4070, %v4152
        %v4251 = vadd.f32 %v4071, %v4155
        %v4252 = vadd.f32 %v4072, %v4166
        %v4253 = vadd.f32 %v4073, %v4169
        %v4254 = vadd.f32 %v4074, %v4180
        %v4255 = vadd.f32 %v4075, %v4183
        %v4256 = vadd.f32 %v4076, %v4194
        %v4257 = vadd.f32 %v4077, %v4197
        %v4258 = vadd.f32 %v4078, %v4208
        %v4259 = vadd.f32 %v4079, %v4211
        %v4260 = vadd.f32 %v4080, %v4222
        %v4261 = vadd.f32 %v4081, %v4225
        %v4262 = vadd.f32 %v4082, %v4236
        %v4263 = vadd.f32 %v4083, %v4239
        %v4264 = vadd.f32 %v4248, %v2328
        %v4265 = vadd.f32 %v4249, %v2328
        %v4266 = vadd.f32 %v4250, %v2328
        %v4267 = vadd.f32 %v4251, %v2328
        %v4268 = vadd.f32 %v4252, %v2328
        %v4269 = vadd.f32 %v4253, %v2328
        %v4270 = vadd.f32 %v4254, %v2328
        %v4271 = vadd.f32 %v4255, %v2328
        %v4272 = vadd.f32 %v4256, %v2328
        %v4273 = vadd.f32 %v4257, %v2328
        %v4274 = vadd.f32 %v4258, %v2328
        %v4275 = vadd.f32 %v4259, %v2328
        %v4276 = vadd.f32 %v4260, %v2328
        %v4277 = vadd.f32 %v4261, %v2328
        %v4278 = vadd.f32 %v4262, %v2328
        %v4279 = vadd.f32 %v4263, %v2328
        %v4280 = vmax.f32 %v4264, 0.0
        %v4281 = vmax.f32 %v4265, 0.0
        %v4282 = vmax.f32 %v4266, 0.0
        %v4283 = vmax.f32 %v4267, 0.0
        %v4284 = vmax.f32 %v4268, 0.0
        %v4285 = vmax.f32 %v4269, 0.0
        %v4286 = vmax.f32 %v4270, 0.0
        %v4287 = vmax.f32 %v4271, 0.0
        %v4288 = vmax.f32 %v4272, 0.0
        %v4289 = vmax.f32 %v4273, 0.0
        %v4290 = vmax.f32 %v4274, 0.0
        %v4291 = vmax.f32 %v4275, 0.0
        %v4292 = vmax.f32 %v4276, 0.0
        %v4293 = vmax.f32 %v4277, 0.0
        %v4294 = vmax.f32 %v4278, 0.0
        %v4295 = vmax.f32 %v4279, 0.0
        %v4296 = vadd.f32 %v4280, %v4282
        %v4297 = vadd.f32 %v4296, %v4284
        %v4298 = vadd.f32 %v4297, %v4286
        %v4299 = vadd.f32 %v4298, %v4288
        %v4300 = vadd.f32 %v4299, %v4290
        %v4301 = vadd.f32 %v4300, %v4292
        %v4302 = vadd.f32 %v4301, %v4294
        %v4303 = vadd.f32 %v4281, %v4283
        %v4304 = vadd.f32 %v4303, %v4285
        %v4305 = vadd.f32 %v4304, %v4287
        %v4306 = vadd.f32 %v4305, %v4289
        %v4307 = vadd.f32 %v4306, %v4291
        %v4308 = vadd.f32 %v4307, %v4293
        %v4309 = vadd.f32 %v4308, %v4295
        %v4310 = vadd.f32 %v4302, %v4309
        %v4311 = vrot.slane %v4310, 4
        %v4312 = vadd.f32 %v4310, %v4311
        %v4313 = vrot.slane %v4312, 2
        %v4314 = vadd.f32 %v4312, %v4313
        %v4315 = vrot.slane %v4314, 1
        %v4316 = vadd.f32 %v4314, %v4315
        %v4317 = vadd.f32 %v2383, %v4316
        %s4318 = scalar_lea.vmem %s271, 128 [#allocation3]
        %4319 = vst [vmem:[%s4318] sm:$0xff] %v4280
        %4320 = vst [vmem:[%s4318 + $0x8] sm:$0xff] %v4281
        %4321 = vst [vmem:[%s4318 + $0x10] sm:$0xff] %v4282
        %4322 = vst [vmem:[%s4318 + $0x18] sm:$0xff] %v4283
        %4323 = vst [vmem:[%s4318 + $0x20] sm:$0xff] %v4284
        %4324 = vst [vmem:[%s4318 + $0x28] sm:$0xff] %v4285
        %4325 = vst [vmem:[%s4318 + $0x30] sm:$0xff] %v4286
        %4326 = vst [vmem:[%s4318 + $0x38] sm:$0xff] %v4287
        %4327 = vst [vmem:[%s4318 + $0x40] sm:$0xff] %v4288
        %4328 = vst [vmem:[%s4318 + $0x48] sm:$0xff] %v4289
        %4329 = vst [vmem:[%s4318 + $0x50] sm:$0xff] %v4290
        %4330 = vst [vmem:[%s4318 + $0x58] sm:$0xff] %v4291
        %4331 = vst [vmem:[%s4318 + $0x60] sm:$0xff] %v4292
        %4332 = vst [vmem:[%s4318 + $0x68] sm:$0xff] %v4293
        %4333 = vst [vmem:[%s4318 + $0x70] sm:$0xff] %v4294
        %4334 = vst [vmem:[%s4318 + $0x78] sm:$0xff] %v4295
        %v4335 = vmul.f32 %v4317, 0.00390625
        %v4336 = vld [vmem:[%s3] sm:$0xff]
        %v4337 = vld [vmem:[%s3 + $0x8] sm:$0xff]
        %v4338 = vld [vmem:[%s3 + $0x10] sm:$0xff]
        %v4339 = vld [vmem:[%s3 + $0x18] sm:$0xff]
        %v4340 = vld [vmem:[%s3 + $0x20] sm:$0xff]
        %v4341 = vld [vmem:[%s3 + $0x28] sm:$0xff]
        %v4342 = vld [vmem:[%s3 + $0x30] sm:$0xff]
        %v4343 = vld [vmem:[%s3 + $0x38] sm:$0xff]
        %v4344 = vld [vmem:[%s3 + $0x40] sm:$0xff]
        %v4345 = vld [vmem:[%s3 + $0x48] sm:$0xff]
        %v4346 = vld [vmem:[%s3 + $0x50] sm:$0xff]
        %v4347 = vld [vmem:[%s3 + $0x58] sm:$0xff]
        %v4348 = vld [vmem:[%s3 + $0x60] sm:$0xff]
        %v4349 = vld [vmem:[%s3 + $0x68] sm:$0xff]
        %v4350 = vld [vmem:[%s3 + $0x70] sm:$0xff]
        %v4351 = vld [vmem:[%s3 + $0x78] sm:$0xff]
        %v4352 = vld [vmem:[%s4] sm:$0x1]
        %4353 = vmatprep.subr.mxu0 0.0
        %4354 = vmatpush1.msra.mxu0 %v4336
        %4355 = vmatprep.subr.mxu0 0.0
        %4356 = vmatpush1.msra.mxu0 %v4337
        %4357 = vmatprep.subr.mxu0 0.0
        %4358 = vmatpush1.msra.mxu0 %v4338
        %4359 = vmatprep.subr.mxu0 0.0
        %4360 = vmatpush1.msra.mxu0 %v4339
        %4361 = vmatprep.subr.mxu0 0.0
        %4362 = vmatpush1.msra.mxu0 %v4340
        %4363 = vmatprep.subr.mxu0 0.0
        %4364 = vmatpush1.msra.mxu0 %v4341
        %4365 = vmatprep.subr.mxu0 0.0
        %4366 = vmatpush1.msra.mxu0 %v4342
        %4367 = vmatprep.subr.mxu0 0.0
        %4368 = vmatpush1.msra.mxu0 %v4343
        %4369 = vmatprep.subr.mxu0 0.0
        %4370 = vmatpush1.msra.mxu0 %v4344
        %4371 = vmatprep.subr.mxu0 0.0
        %4372 = vmatpush1.msra.mxu0 %v4345
        %4373 = vmatprep.subr.mxu0 0.0
        %4374 = vmatpush1.msra.mxu0 %v4346
        %4375 = vmatprep.subr.mxu0 0.0
        %4376 = vmatpush1.msra.mxu0 %v4347
        %4377 = vmatprep.subr.mxu0 0.0
        %4378 = vmatpush1.msra.mxu0 %v4348
        %4379 = vmatprep.subr.mxu0 0.0
        %4380 = vmatpush1.msra.mxu0 %v4349
        %4381 = vmatprep.subr.mxu0 0.0
        %4382 = vmatpush1.msra.mxu0 %v4350
        %4383 = vmatprep.subr.mxu0 0.0
        %4384 = vmatpush1.msra.mxu0 %v4351
        %4385 = vmatprep.subr.mxu0 0.0
        %4386 = vmatpush1.msra.mxu0 0.0
        %4387 = vmatprep.subr.mxu0 0.0
        %4388 = vmatpush1.msra.mxu0 0.0
        %4389 = vmatprep.subr.mxu0 0.0
        %4390 = vmatpush1.msra.mxu0 0.0
        %4391 = vmatprep.subr.mxu0 0.0
        %4392 = vmatpush1.msra.mxu0 0.0
        %4393 = vmatprep.subr.mxu0 0.0
        %4394 = vmatpush1.msra.mxu0 0.0
        %4395 = vmatprep.subr.mxu0 0.0
        %4396 = vmatpush1.msra.mxu0 0.0
        %4397 = vmatprep.subr.mxu0 0.0
        %4398 = vmatpush1.msra.mxu0 0.0
        %4399 = vmatprep.subr.mxu0 0.0
        %4400 = vmatpush1.msra.mxu0 0.0
        %4401 = vmatprep.subr.mxu0 0.0
        %4402 = vmatpush1.msra.mxu0 0.0
        %4403 = vmatprep.subr.mxu0 0.0
        %4404 = vmatpush1.msra.mxu0 0.0
        %4405 = vmatprep.subr.mxu0 0.0
        %4406 = vmatpush1.msra.mxu0 0.0
        %4407 = vmatprep.subr.mxu0 0.0
        %4408 = vmatpush1.msra.mxu0 0.0
        %4409 = vmatprep.subr.mxu0 0.0
        %4410 = vmatpush1.msra.mxu0 0.0
        %4411 = vmatprep.subr.mxu0 0.0
        %4412 = vmatpush1.msra.mxu0 0.0
        %4413 = vmatprep.subr.mxu0 0.0
        %4414 = vmatpush1.msra.mxu0 0.0
        %4415 = vmatprep.subr.mxu0 0.0
        %4416 = vmatpush1.msra.mxu0 0.0
        %4417 = vmatprep.mubr.f32.mxu0 0.0
        %4418 = vmatmul.mubr.f32.gmra.mrb[0].mxu0 %v4335
        %v4419 = vpop.f32.mrb[0].mxu0
        %v4420 = vadd.f32 %v4352, %v4419
        %v4421 = vpop.f32.mrb[0].mxu0
        %4422 = vdwg.mxu0
        %v4423 = vmax.f32 %v4420, 0.0
        %v4424 = vld [vmem:[%s5] sm:$0xff]
        %v4425 = vld [vmem:[%s5 + $0x8] sm:$0xff]
        %v4426 = vld [vmem:[%s5 + $0x10] sm:$0xff]
        %v4427 = vld [vmem:[%s5 + $0x18] sm:$0xff]
        %v4428 = vld [vmem:[%s5 + $0x20] sm:$0xff]
        %v4429 = vld [vmem:[%s5 + $0x28] sm:$0xff]
        %v4430 = vld [vmem:[%s5 + $0x30] sm:$0xff]
        %v4431 = vld [vmem:[%s5 + $0x38] sm:$0xff]
        %v4432 = vld [vmem:[%s5 + $0x40] sm:$0xff]
        %v4433 = vld [vmem:[%s5 + $0x48] sm:$0xff]
        %v4434 = vld [vmem:[%s5 + $0x50] sm:$0xff]
        %v4435 = vld [vmem:[%s5 + $0x58] sm:$0xff]
        %v4436 = vld [vmem:[%s5 + $0x60] sm:$0xff]
        %v4437 = vld [vmem:[%s5 + $0x68] sm:$0xff]
        %v4438 = vld [vmem:[%s5 + $0x70] sm:$0xff]
        %v4439 = vld [vmem:[%s5 + $0x78] sm:$0xff]
        %v4440 = vld [vmem:[%s6] sm:$0x1]
        %4441 = vmatprep.subr.mxu0 0.0
        %4442 = vmatpush1.msra.mxu0 %v4424
        %4443 = vmatprep.subr.mxu0 0.0
        %4444 = vmatpush1.msra.mxu0 %v4425
        %4445 = vmatprep.subr.mxu0 0.0
        %4446 = vmatpush1.msra.mxu0 %v4426
        %4447 = vmatprep.subr.mxu0 0.0
        %4448 = vmatpush1.msra.mxu0 %v4427
        %4449 = vmatprep.subr.mxu0 0.0
        %4450 = vmatpush1.msra.mxu0 %v4428
        %4451 = vmatprep.subr.mxu0 0.0
        %4452 = vmatpush1.msra.mxu0 %v4429
        %4453 = vmatprep.subr.mxu0 0.0
        %4454 = vmatpush1.msra.mxu0 %v4430
        %4455 = vmatprep.subr.mxu0 0.0
        %4456 = vmatpush1.msra.mxu0 %v4431
        %4457 = vmatprep.subr.mxu0 0.0
        %4458 = vmatpush1.msra.mxu0 %v4432
        %4459 = vmatprep.subr.mxu0 0.0
        %4460 = vmatpush1.msra.mxu0 %v4433
        %4461 = vmatprep.subr.mxu0 0.0
        %4462 = vmatpush1.msra.mxu0 %v4434
        %4463 = vmatprep.subr.mxu0 0.0
        %4464 = vmatpush1.msra.mxu0 %v4435
        %4465 = vmatprep.subr.mxu0 0.0
        %4466 = vmatpush1.msra.mxu0 %v4436
        %4467 = vmatprep.subr.mxu0 0.0
        %4468 = vmatpush1.msra.mxu0 %v4437
        %4469 = vmatprep.subr.mxu0 0.0
        %4470 = vmatpush1.msra.mxu0 %v4438
        %4471 = vmatprep.subr.mxu0 0.0
        %4472 = vmatpush1.msra.mxu0 %v4439
        %4473 = vmatprep.subr.mxu0 0.0
        %4474 = vmatpush1.msra.mxu0 0.0
        %4475 = vmatprep.subr.mxu0 0.0
        %4476 = vmatpush1.msra.mxu0 0.0
        %4477 = vmatprep.subr.mxu0 0.0
        %4478 = vmatpush1.msra.mxu0 0.0
        %4479 = vmatprep.subr.mxu0 0.0
        %4480 = vmatpush1.msra.mxu0 0.0
        %4481 = vmatprep.subr.mxu0 0.0
        %4482 = vmatpush1.msra.mxu0 0.0
        %4483 = vmatprep.subr.mxu0 0.0
        %4484 = vmatpush1.msra.mxu0 0.0
        %4485 = vmatprep.subr.mxu0 0.0
        %4486 = vmatpush1.msra.mxu0 0.0
        %4487 = vmatprep.subr.mxu0 0.0
        %4488 = vmatpush1.msra.mxu0 0.0
        %4489 = vmatprep.subr.mxu0 0.0
        %4490 = vmatpush1.msra.mxu0 0.0
        %4491 = vmatprep.subr.mxu0 0.0
        %4492 = vmatpush1.msra.mxu0 0.0
        %4493 = vmatprep.subr.mxu0 0.0
        %4494 = vmatpush1.msra.mxu0 0.0
        %4495 = vmatprep.subr.mxu0 0.0
        %4496 = vmatpush1.msra.mxu0 0.0
        %4497 = vmatprep.subr.mxu0 0.0
        %4498 = vmatpush1.msra.mxu0 0.0
        %4499 = vmatprep.subr.mxu0 0.0
        %4500 = vmatpush1.msra.mxu0 0.0
        %4501 = vmatprep.subr.mxu0 0.0
        %4502 = vmatpush1.msra.mxu0 0.0
        %4503 = vmatprep.subr.mxu0 0.0
        %4504 = vmatpush1.msra.mxu0 0.0
        %4505 = vmatprep.mubr.f32.mxu0 0.0
        %4506 = vmatmul.mubr.f32.gmra.mrb[0].mxu0 %v4423
        %v4507 = vpop.f32.mrb[0].mxu0
        %v4508 = vadd.f32 %v4440, %v4507
        %v4509 = vpop.f32.mrb[0].mxu0
        %4510 = vdwg.mxu0
        %v4511 = vxor.u32 %v4508, 2147483648
        %v4512 = vmul.f32 %v4511, 1.442695
        %v4513 = vpow.pop %v4512
        %v4514 = vadd.f32 %v4513, 1.0
        %v4515 = vrcp.pop %v4514
        %v4516 = vmul.f32 1.0, %v4515
        %v4517 = vadd.f32 %v4516, 1.0
        %v4518 = vld [vmem:[%s271] sm:$0xff]
        %v4519 = vld [vmem:[%s271 + $0x8] sm:$0xff]
        %v4520 = vld [vmem:[%s271 + $0x10] sm:$0xff]
        %v4521 = vld [vmem:[%s271 + $0x18] sm:$0xff]
        %v4522 = vld [vmem:[%s271 + $0x20] sm:$0xff]
        %v4523 = vld [vmem:[%s271 + $0x28] sm:$0xff]
        %v4524 = vld [vmem:[%s271 + $0x30] sm:$0xff]
        %v4525 = vld [vmem:[%s271 + $0x38] sm:$0xff]
        %v4526 = vld [vmem:[%s271 + $0x40] sm:$0xff]
        %v4527 = vld [vmem:[%s271 + $0x48] sm:$0xff]
        %v4528 = vld [vmem:[%s271 + $0x50] sm:$0xff]
        %v4529 = vld [vmem:[%s271 + $0x58] sm:$0xff]
        %v4530 = vld [vmem:[%s271 + $0x60] sm:$0xff]
        %v4531 = vld [vmem:[%s271 + $0x68] sm:$0xff]
        %v4532 = vld [vmem:[%s271 + $0x70] sm:$0xff]
        %v4533 = vld [vmem:[%s271 + $0x78] sm:$0xff]
        %v4534 = vlaneseq
        %v4535 = vshrl.u32 %v4534, 7
        %v4536 = vsub.s32 0, %v4535
        %v4537 = vrot.slane %v4517, %v4536
        %v4538 = vmul.f32 %v4518, %v4537
        %v4539 = vmul.f32 %v4519, %v4537
        %v4540 = vmul.f32 %v4520, %v4537
        %v4541 = vmul.f32 %v4521, %v4537
        %v4542 = vmul.f32 %v4522, %v4537
        %v4543 = vmul.f32 %v4523, %v4537
        %v4544 = vmul.f32 %v4524, %v4537
        %v4545 = vmul.f32 %v4525, %v4537
        %v4546 = vmul.f32 %v4526, %v4537
        %v4547 = vmul.f32 %v4527, %v4537
        %v4548 = vmul.f32 %v4528, %v4537
        %v4549 = vmul.f32 %v4529, %v4537
        %v4550 = vmul.f32 %v4530, %v4537
        %v4551 = vmul.f32 %v4531, %v4537
        %v4552 = vmul.f32 %v4532, %v4537
        %v4553 = vmul.f32 %v4533, %v4537
        %4554 = vst [vmem:[%s271] sm:$0xff] %v4538
        %4555 = vst [vmem:[%s271 + $0x8] sm:$0xff] %v4539
        %4556 = vst [vmem:[%s271 + $0x10] sm:$0xff] %v4540
        %4557 = vst [vmem:[%s271 + $0x18] sm:$0xff] %v4541
        %4558 = vst [vmem:[%s271 + $0x20] sm:$0xff] %v4542
        %4559 = vst [vmem:[%s271 + $0x28] sm:$0xff] %v4543
        %4560 = vst [vmem:[%s271 + $0x30] sm:$0xff] %v4544
        %4561 = vst [vmem:[%s271 + $0x38] sm:$0xff] %v4545
        %4562 = vst [vmem:[%s271 + $0x40] sm:$0xff] %v4546
        %4563 = vst [vmem:[%s271 + $0x48] sm:$0xff] %v4547
        %4564 = vst [vmem:[%s271 + $0x50] sm:$0xff] %v4548
        %4565 = vst [vmem:[%s271 + $0x58] sm:$0xff] %v4549
        %4566 = vst [vmem:[%s271 + $0x60] sm:$0xff] %v4550
        %4567 = vst [vmem:[%s271 + $0x68] sm:$0xff] %v4551
        %4568 = vst [vmem:[%s271 + $0x70] sm:$0xff] %v4552
        %4569 = vst [vmem:[%s271 + $0x78] sm:$0xff] %v4553
        %v4570 = vld [vmem:[%s4318] sm:$0xff]
        %v4571 = vld [vmem:[%s4318 + $0x8] sm:$0xff]
        %v4572 = vld [vmem:[%s4318 + $0x10] sm:$0xff]
        %v4573 = vld [vmem:[%s4318 + $0x18] sm:$0xff]
        %v4574 = vld [vmem:[%s4318 + $0x20] sm:$0xff]
        %v4575 = vld [vmem:[%s4318 + $0x28] sm:$0xff]
        %v4576 = vld [vmem:[%s4318 + $0x30] sm:$0xff]
        %v4577 = vld [vmem:[%s4318 + $0x38] sm:$0xff]
        %v4578 = vld [vmem:[%s4318 + $0x40] sm:$0xff]
        %v4579 = vld [vmem:[%s4318 + $0x48] sm:$0xff]
        %v4580 = vld [vmem:[%s4318 + $0x50] sm:$0xff]
        %v4581 = vld [vmem:[%s4318 + $0x58] sm:$0xff]
        %v4582 = vld [vmem:[%s4318 + $0x60] sm:$0xff]
        %v4583 = vld [vmem:[%s4318 + $0x68] sm:$0xff]
        %v4584 = vld [vmem:[%s4318 + $0x70] sm:$0xff]
        %v4585 = vld [vmem:[%s4318 + $0x78] sm:$0xff]
        %v4586 = vmul.f32 %v4570, %v4537
        %v4587 = vmul.f32 %v4571, %v4537
        %v4588 = vmul.f32 %v4572, %v4537
        %v4589 = vmul.f32 %v4573, %v4537
        %v4590 = vmul.f32 %v4574, %v4537
        %v4591 = vmul.f32 %v4575, %v4537
        %v4592 = vmul.f32 %v4576, %v4537
        %v4593 = vmul.f32 %v4577, %v4537
        %v4594 = vmul.f32 %v4578, %v4537
        %v4595 = vmul.f32 %v4579, %v4537
        %v4596 = vmul.f32 %v4580, %v4537
        %v4597 = vmul.f32 %v4581, %v4537
        %v4598 = vmul.f32 %v4582, %v4537
        %v4599 = vmul.f32 %v4583, %v4537
        %v4600 = vmul.f32 %v4584, %v4537
        %v4601 = vmul.f32 %v4585, %v4537
        %4602 = vst [vmem:[%s4318] sm:$0xff] %v4586
        %4603 = vst [vmem:[%s4318 + $0x8] sm:$0xff] %v4587
        %4604 = vst [vmem:[%s4318 + $0x10] sm:$0xff] %v4588
        %4605 = vst [vmem:[%s4318 + $0x18] sm:$0xff] %v4589
        %4606 = vst [vmem:[%s4318 + $0x20] sm:$0xff] %v4590
        %4607 = vst [vmem:[%s4318 + $0x28] sm:$0xff] %v4591
        %4608 = vst [vmem:[%s4318 + $0x30] sm:$0xff] %v4592
        %4609 = vst [vmem:[%s4318 + $0x38] sm:$0xff] %v4593
        %4610 = vst [vmem:[%s4318 + $0x40] sm:$0xff] %v4594
        %4611 = vst [vmem:[%s4318 + $0x48] sm:$0xff] %v4595
        %4612 = vst [vmem:[%s4318 + $0x50] sm:$0xff] %v4596
        %4613 = vst [vmem:[%s4318 + $0x58] sm:$0xff] %v4597
        %4614 = vst [vmem:[%s4318 + $0x60] sm:$0xff] %v4598
        %4615 = vst [vmem:[%s4318 + $0x68] sm:$0xff] %v4599
        %4616 = vst [vmem:[%s4318 + $0x70] sm:$0xff] %v4600
        %4617 = vst [vmem:[%s4318 + $0x78] sm:$0xff] %v4601
        %s4618 = sand.u32 %s181, 1
        %s4619 = scalar_lea.sflag [#allocation4], %s4618
        %s4620 = sand.u32 %s181, 1
        %s4621 = smul.addr %s4620, 256
        %s4622 = scalar_lea.vmem [#allocation3], %s4621
        // Predicated region
        $region49: #{tpu_custom_call.1} parent=47 // pred_check
          %p4623 = pneg %p191
        $region50: #{tpu_custom_call.1} parent=47 // pred_check_branch
          %4625 = sbr.rel (%p4623) target = $region52
        $region51: #{tpu_custom_call.1} parent=47 // pred_region
          %s4627 = ssub.s32 4096, 4096
          %4628 = vsyncadd %s4619, %s4627
          %s4629 = smul.addr %s21, 32
          %s4630 = smul.addr %s4629, 128
          %s4631 = scalar_lea.hbm %s7, %s4630
          %s4632 = sshll.u32 %s4622, 4
          %s4633 = int_to_ptr.vmem [resolvable:$true] %s4632
          %4638 = dma.vmem_to_hbm [thread:$0]  %s4633, 4096, %s4631, %s4619, 128, 128, 8
        $region52: #{tpu_custom_call.1} parent=47 // pred_fallthru
          _
      $region48: #{tpu_custom_call.1} parent=5 // pred_fallthru
        _
      %p4639 = scmp.le.s32.totalorder 2, %s16
      // Predicated region
      $region53: #{tpu_custom_call.1} parent=5 // pred_check
        %p4640 = pneg %p4639
      $region54: #{tpu_custom_call.1} parent=5 // pred_check_branch
        %4642 = sbr.rel (%p4640) target = $region56
      $region55: #{tpu_custom_call.1} parent=5 // pred_region
        %s4643 = ssub.s32 %s16, 2
        // Predicated region
        $region57: #{tpu_custom_call.1} parent=55 // pred_check
          %p4644 = pneg %p197
        $region58: #{tpu_custom_call.1} parent=55 // pred_check_branch
          %4646 = sbr.rel (%p4644) target = $region60
        $region59: #{tpu_custom_call.1} parent=55 // pred_region
          %s4647 = sand.u32 %s182, 1
          %s4648 = scalar_lea.sflag [#allocation4], %s4647
          %s4649 = sand.u32 %s182, 1
          %s4650 = smul.addr %s4649, 256
          %s4651 = scalar_lea.vmem [#allocation3], %s4650
          %4652 = dma.done %s4648, 4096
        $region60: #{tpu_custom_call.1} parent=55 // pred_fallthru
          _
      $region56: #{tpu_custom_call.1} parent=5 // pred_fallthru
        _
    $region6: #{tpu_custom_call.1} parent=1 // loop_footer
      %s20 = sadd.s32 1, %s16
    $region7: #{tpu_custom_call.1} parent=1 // loop_footer_branch
      %15 = sbr.rel target = $region3
    $region8: #{tpu_custom_call.1} parent=1 // loop_exit
      _
    %4653 = vsyncpa [#allocation4], 1
    %s4654 = scalar_lea.sflag [#allocation4], 1
    %4655 = vsyncpa %s4654, 1

</llo_original>
